<compile_context>
chip_gen: v6e
topology: v6e:2x2x1
jax: 0.10.0
libtpu: 0.0.40
codegen_flags: <defaults>
</compile_context>

<pallas_src>
import jax
import jax.numpy as jnp
from jax.experimental import pallas as pl
from jax.experimental.pallas import tpu as pltpu

EMBED_DIM = 32
NUM_HEADS = 4
NUM_LAYERS = 2
HEAD_DIM = EMBED_DIM // NUM_HEADS
LN_EPS = 1e-5

# Parameter-slab layout (per layer, rows are relative to layer*ROWS_PER_LAYER):
#   rows [0, E)    cols [0, 3E) : W_qkv = in_proj_weight.T        (32, 96)
#   rows [E, 2E)   cols [0, E)  : W_o   = out_proj.weight.T       (32, 32)
#   row  2E        cols [0, 3E) : b_qkv = in_proj_bias            (1, 96)
#   row  2E+1      cols [0, E)  : b_o   = out_proj.bias           (1, 32)
#   row  2E+2      cols [0, E)  : ln_w                            (1, 32)
#   row  2E+3      cols [0, E)  : ln_b                            (1, 32)
ROWS_PER_LAYER = 72          # 2E + 8 -> every layer block starts sublane-aligned
LANES = 128                  # lane-dense slab width


def _dot(a, b):
    return jnp.dot(a, b, preferred_element_type=jnp.float32)


def _dot_nt(a, b):
    """a (m,k) contracted with b (n,k) -> (m,n) == a @ b.T (no explicit transpose)."""
    return jax.lax.dot_general(a, b, (((1,), (1,)), ((), ())),
                               preferred_element_type=jnp.float32)


def _make_kernel(batch, seq_len):
    E, H, Dh = EMBED_DIM, NUM_HEADS, HEAD_DIM
    scale = 1.0 / (Dh ** 0.5)

    def kernel(x_ref, p_ref, out_ref):
        # Activation stays resident in vregs/VMEM across BOTH layers.
        x = x_ref[...]                                        # (B*S, E)

        for layer in range(NUM_LAYERS):
            off = layer * ROWS_PER_LAYER
            w_qkv = p_ref[off:off + E, 0:3 * E]               # (32, 96)
            w_o = p_ref[off + E:off + 2 * E, 0:E]             # (32, 32)
            bias = p_ref[off + 2 * E:off + 2 * E + 8, :]      # (8, 128) aligned tile
            b_qkv = bias[0:1, 0:3 * E]                        # (1, 96)
            b_o = bias[1:2, 0:E]                              # (1, 32)
            ln_w = bias[2:3, 0:E]                             # (1, 32)
            ln_b = bias[3:4, 0:E]                             # (1, 32)

            # Fused QKV projection for all batch rows at once (one MXU push,
            # 96 active output lanes) + single fused bias row.
            # TODO(synk): at larger S/E cast operands to bf16 (f32 accumulate)
            # and tile the KV axis flash-style; pointless at S=8, E=32.
            qkv = _dot(x, w_qkv) + b_qkv                      # (B*S, 96)

            ctx_rows = []
            for b in range(batch):
                r0 = b * seq_len
                q_b = qkv[r0:r0 + seq_len, 0:E]               # (S, E)
                k_b = qkv[r0:r0 + seq_len, E:2 * E]           # (S, E)
                v_b = qkv[r0:r0 + seq_len, 2 * E:3 * E]       # (S, E)

                head_ctx = []
                for h in range(H):
                    c0 = h * Dh                               # static 8-lane-aligned
                    qh = q_b[:, c0:c0 + Dh]                   # (S, Dh)
                    kh = k_b[:, c0:c0 + Dh]
                    vh = v_b[:, c0:c0 + Dh]

                    s = _dot_nt(qh, kh) * scale               # (S, S)
                    s = s - jnp.max(s, axis=-1, keepdims=True)
                    p = jnp.exp(s)
                    # EUP approximate reciprocal: uniform ~2^-12 relative error
                    # on the whole softmax row (rows sum to 1 +/- eps). Well
                    # inside the test tolerance; use approx=False if tighter
                    # normalization is ever required.
                    p = p * pl.reciprocal(jnp.sum(p, axis=-1, keepdims=True),
                                          approx=True)
                    head_ctx.append(_dot(p, vh))              # (S, Dh)

                # Concatenated heads == PyTorch's per-head column order.
                ctx_rows.append(jnp.concatenate(head_ctx, axis=-1))   # (S, E)

            ctx = jnp.concatenate(ctx_rows, axis=0)           # (B*S, E)

            # Single output projection on concatenated heads, then residual +
            # LayerNorm (biased variance, eps = 1e-5).
            attn = _dot(ctx, w_o) + b_o                       # (B*S, E)
            y = attn + x
            mean = jnp.mean(y, axis=-1, keepdims=True)
            var = jnp.mean((y - mean) ** 2, axis=-1, keepdims=True)
            x = (y - mean) * jax.lax.rsqrt(var + LN_EPS) * ln_w + ln_b

        out_ref[...] = x

    return kernel


def stacked_self_attention(x, param_slab):
    """x: (B, S, E) f32; param_slab: (NUM_LAYERS*ROWS_PER_LAYER, 128) f32 slab."""
    B, S, E = x.shape
    assert E == EMBED_DIM

    # Whole problem in one grid step: at B=2, S=8, E=32 a megacore batch split
    # only duplicates parameter traffic and launch overhead.
    x2 = x.reshape(B * S, E)          # wrapper-side reshape; kernel sees a 2D slab

    out2 = pl.pallas_call(
        _make_kernel(B, S),
        out_shape=jax.ShapeDtypeStruct((B * S, E), jnp.float32),
        grid=(1,),
        in_specs=[pl.BlockSpec((B * S, E), lambda i: (0, 0)),
                  pl.BlockSpec(param_slab.shape, lambda i: (0, 0))],
        out_specs=pl.BlockSpec((B * S, E), lambda i: (0, 0)),
        compiler_params=pltpu.CompilerParams(
            dimension_semantics=("arbitrary",),
            # Footprint is ~100 KiB; don't starve surrounding XLA fusions.
            vmem_limit_bytes=4 * 1024 * 1024,
        ),
    )(x2, param_slab)
    return out2.reshape(B, S, E)


def init_raw_params(key, embed_dim, num_layers):
    """Synthetic params with nn.MultiheadAttention / nn.LayerNorm shapes."""
    raw = []
    for layer in range(num_layers):
        k0, k1, k2, k3 = jax.random.split(jax.random.fold_in(key, layer), 4)
        in_w = jax.random.normal(k0, (3 * embed_dim, embed_dim),
                                 jnp.float32) / jnp.sqrt(embed_dim)
        in_b = jax.random.normal(k1, (3 * embed_dim,), jnp.float32) * 0.02
        out_w = jax.random.normal(k2, (embed_dim, embed_dim),
                                  jnp.float32) / jnp.sqrt(embed_dim)
        out_b = jax.random.normal(k3, (embed_dim,), jnp.float32) * 0.02
        ln_w = jnp.ones((embed_dim,), jnp.float32)
        ln_b = jnp.zeros((embed_dim,), jnp.float32)
        raw.append((in_w, in_b, out_w, out_b, ln_w, ln_b))
    return raw


def pack_params(raw_params):
    """Pack PyTorch-shaped weights into one lane-dense f32 slab (single DMA)."""
    E = EMBED_DIM
    slab = jnp.zeros((NUM_LAYERS * ROWS_PER_LAYER, LANES), jnp.float32)
    for layer, (in_w, in_b, out_w, out_b, ln_w, ln_b) in enumerate(raw_params):
        off = layer * ROWS_PER_LAYER
        slab = slab.at[off:off + E, 0:3 * E].set(in_w.T)          # W_qkv (32, 96)
        slab = slab.at[off + E:off + 2 * E, 0:E].set(out_w.T)     # W_o   (32, 32)
        slab = slab.at[off + 2 * E, 0:3 * E].set(in_b)            # b_qkv
        slab = slab.at[off + 2 * E + 1, 0:E].set(out_b)           # b_o
        slab = slab.at[off + 2 * E + 2, 0:E].set(ln_w)            # ln_w
        slab = slab.at[off + 2 * E + 3, 0:E].set(ln_b)            # ln_b
    return slab


def reference_forward(x, raw_params):
    """Pure-JAX reference matching PyTorch MultiheadAttention + LayerNorm."""
    B, S, E = x.shape
    H, Dh = NUM_HEADS, HEAD_DIM
    for (in_w, in_b, out_w, out_b, ln_w, ln_b) in raw_params:
        q = x @ in_w[:E].T + in_b[:E]
        k = x @ in_w[E:2 * E].T + in_b[E:2 * E]
        v = x @ in_w[2 * E:].T + in_b[2 * E:]

        def split(t):
            return t.reshape(B, S, H, Dh).transpose(0, 2, 1, 3)

        qh, kh, vh = split(q), split(k), split(v)
        s = jnp.einsum('bhsd,bhtd->bhst', qh, kh) / (Dh ** 0.5)
        p = jax.nn.softmax(s, axis=-1)
        ctx = jnp.einsum('bhst,bhtd->bhsd', p, vh)
        ctx = ctx.transpose(0, 2, 1, 3).reshape(B, S, E)
        attn = ctx @ out_w.T + out_b
        y = attn + x
        mean = y.mean(-1, keepdims=True)
        var = ((y - mean) ** 2).mean(-1, keepdims=True)
        x = (y - mean) / jnp.sqrt(var + LN_EPS) * ln_w + ln_b
    return x


if __name__ == "__main__":
    key = jax.random.PRNGKey(0)
    kx, kp = jax.random.split(key)

    B, S, E = 2, 8, EMBED_DIM
    x = jax.random.normal(kx, (B, S, E), jnp.float32)

    raw_params = init_raw_params(kp, EMBED_DIM, NUM_LAYERS)
    slab = pack_params(raw_params)

    out = stacked_self_attention(x, slab)
    jax.block_until_ready(out)
    assert out.shape == (B, S, E)

    ref = reference_forward(x, raw_params)
    max_err = float(jnp.max(jnp.abs(out - ref)))
    assert max_err < 1e-2, f"max abs error vs reference: {max_err}"
    print("KERNEL_OK")
</pallas_src>

<mosaic_0001>
module attributes {stable_mosaic.version = 11 : i64} {
  func.func @kernel(%arg0: i32, %arg1: memref<16x32xf32, #tpu.memory_space<vmem>>, %arg2: memref<144x128xf32, #tpu.memory_space<vmem>>, %arg3: memref<16x32xf32, #tpu.memory_space<vmem>>) attributes {dimension_semantics = [#tpu.dimension_semantics<arbitrary>], iteration_bounds = array<i64: 1>, scalar_prefetch = 0 : i64, scratch_operands = 0 : i64, tpu.core_type = #tpu.core_type<tc>, window_params = [{pipeline_mode = #tpu.pipeline_mode<synchronous>, transform_indices = @transform_0, window_bounds = array<i64: 16, 32>}, {pipeline_mode = #tpu.pipeline_mode<synchronous>, transform_indices = @transform_1, window_bounds = array<i64: 144, 128>}, {pipeline_mode = #tpu.pipeline_mode<synchronous>, transform_indices = @transform_2, window_bounds = array<i64: 16, 32>}]} {
    %c0 = arith.constant 0 : index
    %c0_0 = arith.constant 0 : index
    %0 = vector.load %arg1[%c0, %c0_0] : memref<16x32xf32, #tpu.memory_space<vmem>>, vector<16x32xf32>
    %c0_1 = arith.constant 0 : index
    %c0_2 = arith.constant 0 : index
    %1 = vector.load %arg2[%c0_1, %c0_2] : memref<144x128xf32, #tpu.memory_space<vmem>>, vector<32x96xf32>
    %c32 = arith.constant 32 : index
    %c0_3 = arith.constant 0 : index
    %2 = vector.load %arg2[%c32, %c0_3] : memref<144x128xf32, #tpu.memory_space<vmem>>, vector<32x32xf32>
    %c64 = arith.constant 64 : index
    %c0_4 = arith.constant 0 : index
    %3 = vector.load %arg2[%c64, %c0_4] : memref<144x128xf32, #tpu.memory_space<vmem>>, vector<8x128xf32>
    %4 = vector.extract_strided_slice %3 {offsets = [0, 0], sizes = [1, 96], strides = [1, 1]} : vector<8x128xf32> to vector<1x96xf32>
    %5 = vector.extract_strided_slice %3 {offsets = [1, 0], sizes = [1, 32], strides = [1, 1]} : vector<8x128xf32> to vector<1x32xf32>
    %6 = vector.extract_strided_slice %3 {offsets = [2, 0], sizes = [1, 32], strides = [1, 1]} : vector<8x128xf32> to vector<1x32xf32>
    %7 = vector.extract_strided_slice %3 {offsets = [3, 0], sizes = [1, 32], strides = [1, 1]} : vector<8x128xf32> to vector<1x32xf32>
    %cst = arith.constant dense<0.000000e+00> : vector<16x96xf32>
    %8 = tpu.matmul %0, %1, %cst {dimension_numbers = #tpu.dot_dimension_numbers<[1], [0], [0], [1], [0, 0, 1, 1], [], []>} : vector<16x32xf32>, vector<32x96xf32>, vector<16x96xf32> -> vector<16x96xf32>
    %9 = vector.broadcast %4 : vector<1x96xf32> to vector<16x96xf32>
    %10 = arith.addf %8, %9 : vector<16x96xf32>
    %11 = vector.extract_strided_slice %10 {offsets = [0, 0], sizes = [8, 32], strides = [1, 1]} : vector<16x96xf32> to vector<8x32xf32>
    %12 = vector.extract_strided_slice %10 {offsets = [0, 32], sizes = [8, 32], strides = [1, 1]} : vector<16x96xf32> to vector<8x32xf32>
    %13 = vector.extract_strided_slice %10 {offsets = [0, 64], sizes = [8, 32], strides = [1, 1]} : vector<16x96xf32> to vector<8x32xf32>
    %14 = vector.extract_strided_slice %11 {offsets = [0, 0], sizes = [8, 8], strides = [1, 1]} : vector<8x32xf32> to vector<8x8xf32>
    %15 = vector.extract_strided_slice %12 {offsets = [0, 0], sizes = [8, 8], strides = [1, 1]} : vector<8x32xf32> to vector<8x8xf32>
    %16 = vector.extract_strided_slice %13 {offsets = [0, 0], sizes = [8, 8], strides = [1, 1]} : vector<8x32xf32> to vector<8x8xf32>
    %cst_5 = arith.constant dense<0.000000e+00> : vector<8x8xf32>
    %17 = tpu.matmul %14, %15, %cst_5 {dimension_numbers = #tpu.dot_dimension_numbers<[1], [1], [0], [0], [0, 0, 1, 0], [], []>} : vector<8x8xf32>, vector<8x8xf32>, vector<8x8xf32> -> vector<8x8xf32>
    %cst_6 = arith.constant 0.353553385 : f32
    %18 = vector.broadcast %cst_6 : f32 to vector<8x8xf32>
    %19 = arith.mulf %17, %18 : vector<8x8xf32>
    %cst_7 = arith.constant dense<0xFF800000> : vector<8xf32>
    %20 = vector.multi_reduction <maximumf>, %19, %cst_7 [1] : vector<8x8xf32> to vector<8xf32>
    %21 = vector.shape_cast %20 : vector<8xf32> to vector<8x1xf32>
    %22 = vector.broadcast %21 : vector<8x1xf32> to vector<8x8xf32>
    %23 = arith.subf %19, %22 : vector<8x8xf32>
    %24 = math.exp %23 : vector<8x8xf32>
    %cst_8 = arith.constant dense<0.000000e+00> : vector<8xf32>
    %25 = vector.multi_reduction <add>, %24, %cst_8 [1] : vector<8x8xf32> to vector<8xf32>
    %26 = vector.shape_cast %25 : vector<8xf32> to vector<8x1xf32>
    %27 = tpu.reciprocal %26 {approx = true} : vector<8x1xf32> -> vector<8x1xf32>
    %28 = vector.broadcast %27 : vector<8x1xf32> to vector<8x8xf32>
    %29 = arith.mulf %24, %28 : vector<8x8xf32>
    %cst_9 = arith.constant dense<0.000000e+00> : vector<8x8xf32>
    %30 = tpu.matmul %29, %16, %cst_9 {dimension_numbers = #tpu.dot_dimension_numbers<[1], [0], [0], [1], [0, 0, 1, 1], [], []>} : vector<8x8xf32>, vector<8x8xf32>, vector<8x8xf32> -> vector<8x8xf32>
    %31 = vector.extract_strided_slice %11 {offsets = [0, 8], sizes = [8, 8], strides = [1, 1]} : vector<8x32xf32> to vector<8x8xf32>
    %32 = vector.extract_strided_slice %12 {offsets = [0, 8], sizes = [8, 8], strides = [1, 1]} : vector<8x32xf32> to vector<8x8xf32>
    %33 = vector.extract_strided_slice %13 {offsets = [0, 8], sizes = [8, 8], strides = [1, 1]} : vector<8x32xf32> to vector<8x8xf32>
    %cst_10 = arith.constant dense<0.000000e+00> : vector<8x8xf32>
    %34 = tpu.matmul %31, %32, %cst_10 {dimension_numbers = #tpu.dot_dimension_numbers<[1], [1], [0], [0], [0, 0, 1, 0], [], []>} : vector<8x8xf32>, vector<8x8xf32>, vector<8x8xf32> -> vector<8x8xf32>
    %cst_11 = arith.constant 0.353553385 : f32
    %35 = vector.broadcast %cst_11 : f32 to vector<8x8xf32>
    %36 = arith.mulf %34, %35 : vector<8x8xf32>
    %cst_12 = arith.constant dense<0xFF800000> : vector<8xf32>
    %37 = vector.multi_reduction <maximumf>, %36, %cst_12 [1] : vector<8x8xf32> to vector<8xf32>
    %38 = vector.shape_cast %37 : vector<8xf32> to vector<8x1xf32>
    %39 = vector.broadcast %38 : vector<8x1xf32> to vector<8x8xf32>
    %40 = arith.subf %36, %39 : vector<8x8xf32>
    %41 = math.exp %40 : vector<8x8xf32>
    %cst_13 = arith.constant dense<0.000000e+00> : vector<8xf32>
    %42 = vector.multi_reduction <add>, %41, %cst_13 [1] : vector<8x8xf32> to vector<8xf32>
    %43 = vector.shape_cast %42 : vector<8xf32> to vector<8x1xf32>
    %44 = tpu.reciprocal %43 {approx = true} : vector<8x1xf32> -> vector<8x1xf32>
    %45 = vector.broadcast %44 : vector<8x1xf32> to vector<8x8xf32>
    %46 = arith.mulf %41, %45 : vector<8x8xf32>
    %cst_14 = arith.constant dense<0.000000e+00> : vector<8x8xf32>
    %47 = tpu.matmul %46, %33, %cst_14 {dimension_numbers = #tpu.dot_dimension_numbers<[1], [0], [0], [1], [0, 0, 1, 1], [], []>} : vector<8x8xf32>, vector<8x8xf32>, vector<8x8xf32> -> vector<8x8xf32>
    %48 = vector.extract_strided_slice %11 {offsets = [0, 16], sizes = [8, 8], strides = [1, 1]} : vector<8x32xf32> to vector<8x8xf32>
    %49 = vector.extract_strided_slice %12 {offsets = [0, 16], sizes = [8, 8], strides = [1, 1]} : vector<8x32xf32> to vector<8x8xf32>
    %50 = vector.extract_strided_slice %13 {offsets = [0, 16], sizes = [8, 8], strides = [1, 1]} : vector<8x32xf32> to vector<8x8xf32>
    %cst_15 = arith.constant dense<0.000000e+00> : vector<8x8xf32>
    %51 = tpu.matmul %48, %49, %cst_15 {dimension_numbers = #tpu.dot_dimension_numbers<[1], [1], [0], [0], [0, 0, 1, 0], [], []>} : vector<8x8xf32>, vector<8x8xf32>, vector<8x8xf32> -> vector<8x8xf32>
    %cst_16 = arith.constant 0.353553385 : f32
    %52 = vector.broadcast %cst_16 : f32 to vector<8x8xf32>
    %53 = arith.mulf %51, %52 : vector<8x8xf32>
    %cst_17 = arith.constant dense<0xFF800000> : vector<8xf32>
    %54 = vector.multi_reduction <maximumf>, %53, %cst_17 [1] : vector<8x8xf32> to vector<8xf32>
    %55 = vector.shape_cast %54 : vector<8xf32> to vector<8x1xf32>
    %56 = vector.broadcast %55 : vector<8x1xf32> to vector<8x8xf32>
    %57 = arith.subf %53, %56 : vector<8x8xf32>
    %58 = math.exp %57 : vector<8x8xf32>
    %cst_18 = arith.constant dense<0.000000e+00> : vector<8xf32>
    %59 = vector.multi_reduction <add>, %58, %cst_18 [1] : vector<8x8xf32> to vector<8xf32>
    %60 = vector.shape_cast %59 : vector<8xf32> to vector<8x1xf32>
    %61 = tpu.reciprocal %60 {approx = true} : vector<8x1xf32> -> vector<8x1xf32>
    %62 = vector.broadcast %61 : vector<8x1xf32> to vector<8x8xf32>
    %63 = arith.mulf %58, %62 : vector<8x8xf32>
    %cst_19 = arith.constant dense<0.000000e+00> : vector<8x8xf32>
    %64 = tpu.matmul %63, %50, %cst_19 {dimension_numbers = #tpu.dot_dimension_numbers<[1], [0], [0], [1], [0, 0, 1, 1], [], []>} : vector<8x8xf32>, vector<8x8xf32>, vector<8x8xf32> -> vector<8x8xf32>
    %65 = vector.extract_strided_slice %11 {offsets = [0, 24], sizes = [8, 8], strides = [1, 1]} : vector<8x32xf32> to vector<8x8xf32>
    %66 = vector.extract_strided_slice %12 {offsets = [0, 24], sizes = [8, 8], strides = [1, 1]} : vector<8x32xf32> to vector<8x8xf32>
    %67 = vector.extract_strided_slice %13 {offsets = [0, 24], sizes = [8, 8], strides = [1, 1]} : vector<8x32xf32> to vector<8x8xf32>
    %cst_20 = arith.constant dense<0.000000e+00> : vector<8x8xf32>
    %68 = tpu.matmul %65, %66, %cst_20 {dimension_numbers = #tpu.dot_dimension_numbers<[1], [1], [0], [0], [0, 0, 1, 0], [], []>} : vector<8x8xf32>, vector<8x8xf32>, vector<8x8xf32> -> vector<8x8xf32>
    %cst_21 = arith.constant 0.353553385 : f32
    %69 = vector.broadcast %cst_21 : f32 to vector<8x8xf32>
    %70 = arith.mulf %68, %69 : vector<8x8xf32>
    %cst_22 = arith.constant dense<0xFF800000> : vector<8xf32>
    %71 = vector.multi_reduction <maximumf>, %70, %cst_22 [1] : vector<8x8xf32> to vector<8xf32>
    %72 = vector.shape_cast %71 : vector<8xf32> to vector<8x1xf32>
    %73 = vector.broadcast %72 : vector<8x1xf32> to vector<8x8xf32>
    %74 = arith.subf %70, %73 : vector<8x8xf32>
    %75 = math.exp %74 : vector<8x8xf32>
    %cst_23 = arith.constant dense<0.000000e+00> : vector<8xf32>
    %76 = vector.multi_reduction <add>, %75, %cst_23 [1] : vector<8x8xf32> to vector<8xf32>
    %77 = vector.shape_cast %76 : vector<8xf32> to vector<8x1xf32>
    %78 = tpu.reciprocal %77 {approx = true} : vector<8x1xf32> -> vector<8x1xf32>
    %79 = vector.broadcast %78 : vector<8x1xf32> to vector<8x8xf32>
    %80 = arith.mulf %75, %79 : vector<8x8xf32>
    %cst_24 = arith.constant dense<0.000000e+00> : vector<8x8xf32>
    %81 = tpu.matmul %80, %67, %cst_24 {dimension_numbers = #tpu.dot_dimension_numbers<[1], [0], [0], [1], [0, 0, 1, 1], [], []>} : vector<8x8xf32>, vector<8x8xf32>, vector<8x8xf32> -> vector<8x8xf32>
    %82 = tpu.concatenate %30, %47, %64, %81 in 1 : vector<8x8xf32>, vector<8x8xf32>, vector<8x8xf32>, vector<8x8xf32> -> vector<8x32xf32>
    %83 = vector.extract_strided_slice %10 {offsets = [8, 0], sizes = [8, 32], strides = [1, 1]} : vector<16x96xf32> to vector<8x32xf32>
    %84 = vector.extract_strided_slice %10 {offsets = [8, 32], sizes = [8, 32], strides = [1, 1]} : vector<16x96xf32> to vector<8x32xf32>
    %85 = vector.extract_strided_slice %10 {offsets = [8, 64], sizes = [8, 32], strides = [1, 1]} : vector<16x96xf32> to vector<8x32xf32>
    %86 = vector.extract_strided_slice %83 {offsets = [0, 0], sizes = [8, 8], strides = [1, 1]} : vector<8x32xf32> to vector<8x8xf32>
    %87 = vector.extract_strided_slice %84 {offsets = [0, 0], sizes = [8, 8], strides = [1, 1]} : vector<8x32xf32> to vector<8x8xf32>
    %88 = vector.extract_strided_slice %85 {offsets = [0, 0], sizes = [8, 8], strides = [1, 1]} : vector<8x32xf32> to vector<8x8xf32>
    %cst_25 = arith.constant dense<0.000000e+00> : vector<8x8xf32>
    %89 = tpu.matmul %86, %87, %cst_25 {dimension_numbers = #tpu.dot_dimension_numbers<[1], [1], [0], [0], [0, 0, 1, 0], [], []>} : vector<8x8xf32>, vector<8x8xf32>, vector<8x8xf32> -> vector<8x8xf32>
    %cst_26 = arith.constant 0.353553385 : f32
    %90 = vector.broadcast %cst_26 : f32 to vector<8x8xf32>
    %91 = arith.mulf %89, %90 : vector<8x8xf32>
    %cst_27 = arith.constant dense<0xFF800000> : vector<8xf32>
    %92 = vector.multi_reduction <maximumf>, %91, %cst_27 [1] : vector<8x8xf32> to vector<8xf32>
    %93 = vector.shape_cast %92 : vector<8xf32> to vector<8x1xf32>
    %94 = vector.broadcast %93 : vector<8x1xf32> to vector<8x8xf32>
    %95 = arith.subf %91, %94 : vector<8x8xf32>
    %96 = math.exp %95 : vector<8x8xf32>
    %cst_28 = arith.constant dense<0.000000e+00> : vector<8xf32>
    %97 = vector.multi_reduction <add>, %96, %cst_28 [1] : vector<8x8xf32> to vector<8xf32>
    %98 = vector.shape_cast %97 : vector<8xf32> to vector<8x1xf32>
    %99 = tpu.reciprocal %98 {approx = true} : vector<8x1xf32> -> vector<8x1xf32>
    %100 = vector.broadcast %99 : vector<8x1xf32> to vector<8x8xf32>
    %101 = arith.mulf %96, %100 : vector<8x8xf32>
    %cst_29 = arith.constant dense<0.000000e+00> : vector<8x8xf32>
    %102 = tpu.matmul %101, %88, %cst_29 {dimension_numbers = #tpu.dot_dimension_numbers<[1], [0], [0], [1], [0, 0, 1, 1], [], []>} : vector<8x8xf32>, vector<8x8xf32>, vector<8x8xf32> -> vector<8x8xf32>
    %103 = vector.extract_strided_slice %83 {offsets = [0, 8], sizes = [8, 8], strides = [1, 1]} : vector<8x32xf32> to vector<8x8xf32>
    %104 = vector.extract_strided_slice %84 {offsets = [0, 8], sizes = [8, 8], strides = [1, 1]} : vector<8x32xf32> to vector<8x8xf32>
    %105 = vector.extract_strided_slice %85 {offsets = [0, 8], sizes = [8, 8], strides = [1, 1]} : vector<8x32xf32> to vector<8x8xf32>
    %cst_30 = arith.constant dense<0.000000e+00> : vector<8x8xf32>
    %106 = tpu.matmul %103, %104, %cst_30 {dimension_numbers = #tpu.dot_dimension_numbers<[1], [1], [0], [0], [0, 0, 1, 0], [], []>} : vector<8x8xf32>, vector<8x8xf32>, vector<8x8xf32> -> vector<8x8xf32>
    %cst_31 = arith.constant 0.353553385 : f32
    %107 = vector.broadcast %cst_31 : f32 to vector<8x8xf32>
    %108 = arith.mulf %106, %107 : vector<8x8xf32>
    %cst_32 = arith.constant dense<0xFF800000> : vector<8xf32>
    %109 = vector.multi_reduction <maximumf>, %108, %cst_32 [1] : vector<8x8xf32> to vector<8xf32>
    %110 = vector.shape_cast %109 : vector<8xf32> to vector<8x1xf32>
    %111 = vector.broadcast %110 : vector<8x1xf32> to vector<8x8xf32>
    %112 = arith.subf %108, %111 : vector<8x8xf32>
    %113 = math.exp %112 : vector<8x8xf32>
    %cst_33 = arith.constant dense<0.000000e+00> : vector<8xf32>
    %114 = vector.multi_reduction <add>, %113, %cst_33 [1] : vector<8x8xf32> to vector<8xf32>
    %115 = vector.shape_cast %114 : vector<8xf32> to vector<8x1xf32>
    %116 = tpu.reciprocal %115 {approx = true} : vector<8x1xf32> -> vector<8x1xf32>
    %117 = vector.broadcast %116 : vector<8x1xf32> to vector<8x8xf32>
    %118 = arith.mulf %113, %117 : vector<8x8xf32>
    %cst_34 = arith.constant dense<0.000000e+00> : vector<8x8xf32>
    %119 = tpu.matmul %118, %105, %cst_34 {dimension_numbers = #tpu.dot_dimension_numbers<[1], [0], [0], [1], [0, 0, 1, 1], [], []>} : vector<8x8xf32>, vector<8x8xf32>, vector<8x8xf32> -> vector<8x8xf32>
    %120 = vector.extract_strided_slice %83 {offsets = [0, 16], sizes = [8, 8], strides = [1, 1]} : vector<8x32xf32> to vector<8x8xf32>
    %121 = vector.extract_strided_slice %84 {offsets = [0, 16], sizes = [8, 8], strides = [1, 1]} : vector<8x32xf32> to vector<8x8xf32>
    %122 = vector.extract_strided_slice %85 {offsets = [0, 16], sizes = [8, 8], strides = [1, 1]} : vector<8x32xf32> to vector<8x8xf32>
    %cst_35 = arith.constant dense<0.000000e+00> : vector<8x8xf32>
    %123 = tpu.matmul %120, %121, %cst_35 {dimension_numbers = #tpu.dot_dimension_numbers<[1], [1], [0], [0], [0, 0, 1, 0], [], []>} : vector<8x8xf32>, vector<8x8xf32>, vector<8x8xf32> -> vector<8x8xf32>
    %cst_36 = arith.constant 0.353553385 : f32
    %124 = vector.broadcast %cst_36 : f32 to vector<8x8xf32>
    %125 = arith.mulf %123, %124 : vector<8x8xf32>
    %cst_37 = arith.constant dense<0xFF800000> : vector<8xf32>
    %126 = vector.multi_reduction <maximumf>, %125, %cst_37 [1] : vector<8x8xf32> to vector<8xf32>
    %127 = vector.shape_cast %126 : vector<8xf32> to vector<8x1xf32>
    %128 = vector.broadcast %127 : vector<8x1xf32> to vector<8x8xf32>
    %129 = arith.subf %125, %128 : vector<8x8xf32>
    %130 = math.exp %129 : vector<8x8xf32>
    %cst_38 = arith.constant dense<0.000000e+00> : vector<8xf32>
    %131 = vector.multi_reduction <add>, %130, %cst_38 [1] : vector<8x8xf32> to vector<8xf32>
    %132 = vector.shape_cast %131 : vector<8xf32> to vector<8x1xf32>
    %133 = tpu.reciprocal %132 {approx = true} : vector<8x1xf32> -> vector<8x1xf32>
    %134 = vector.broadcast %133 : vector<8x1xf32> to vector<8x8xf32>
    %135 = arith.mulf %130, %134 : vector<8x8xf32>
    %cst_39 = arith.constant dense<0.000000e+00> : vector<8x8xf32>
    %136 = tpu.matmul %135, %122, %cst_39 {dimension_numbers = #tpu.dot_dimension_numbers<[1], [0], [0], [1], [0, 0, 1, 1], [], []>} : vector<8x8xf32>, vector<8x8xf32>, vector<8x8xf32> -> vector<8x8xf32>
    %137 = vector.extract_strided_slice %83 {offsets = [0, 24], sizes = [8, 8], strides = [1, 1]} : vector<8x32xf32> to vector<8x8xf32>
    %138 = vector.extract_strided_slice %84 {offsets = [0, 24], sizes = [8, 8], strides = [1, 1]} : vector<8x32xf32> to vector<8x8xf32>
    %139 = vector.extract_strided_slice %85 {offsets = [0, 24], sizes = [8, 8], strides = [1, 1]} : vector<8x32xf32> to vector<8x8xf32>
    %cst_40 = arith.constant dense<0.000000e+00> : vector<8x8xf32>
    %140 = tpu.matmul %137, %138, %cst_40 {dimension_numbers = #tpu.dot_dimension_numbers<[1], [1], [0], [0], [0, 0, 1, 0], [], []>} : vector<8x8xf32>, vector<8x8xf32>, vector<8x8xf32> -> vector<8x8xf32>
    %cst_41 = arith.constant 0.353553385 : f32
    %141 = vector.broadcast %cst_41 : f32 to vector<8x8xf32>
    %142 = arith.mulf %140, %141 : vector<8x8xf32>
    %cst_42 = arith.constant dense<0xFF800000> : vector<8xf32>
    %143 = vector.multi_reduction <maximumf>, %142, %cst_42 [1] : vector<8x8xf32> to vector<8xf32>
    %144 = vector.shape_cast %143 : vector<8xf32> to vector<8x1xf32>
    %145 = vector.broadcast %144 : vector<8x1xf32> to vector<8x8xf32>
    %146 = arith.subf %142, %145 : vector<8x8xf32>
    %147 = math.exp %146 : vector<8x8xf32>
    %cst_43 = arith.constant dense<0.000000e+00> : vector<8xf32>
    %148 = vector.multi_reduction <add>, %147, %cst_43 [1] : vector<8x8xf32> to vector<8xf32>
    %149 = vector.shape_cast %148 : vector<8xf32> to vector<8x1xf32>
    %150 = tpu.reciprocal %149 {approx = true} : vector<8x1xf32> -> vector<8x1xf32>
    %151 = vector.broadcast %150 : vector<8x1xf32> to vector<8x8xf32>
    %152 = arith.mulf %147, %151 : vector<8x8xf32>
    %cst_44 = arith.constant dense<0.000000e+00> : vector<8x8xf32>
    %153 = tpu.matmul %152, %139, %cst_44 {dimension_numbers = #tpu.dot_dimension_numbers<[1], [0], [0], [1], [0, 0, 1, 1], [], []>} : vector<8x8xf32>, vector<8x8xf32>, vector<8x8xf32> -> vector<8x8xf32>
    %154 = tpu.concatenate %102, %119, %136, %153 in 1 : vector<8x8xf32>, vector<8x8xf32>, vector<8x8xf32>, vector<8x8xf32> -> vector<8x32xf32>
    %155 = tpu.concatenate %82, %154 in 0 : vector<8x32xf32>, vector<8x32xf32> -> vector<16x32xf32>
    %cst_45 = arith.constant dense<0.000000e+00> : vector<16x32xf32>
    %156 = tpu.matmul %155, %2, %cst_45 {dimension_numbers = #tpu.dot_dimension_numbers<[1], [0], [0], [1], [0, 0, 1, 1], [], []>} : vector<16x32xf32>, vector<32x32xf32>, vector<16x32xf32> -> vector<16x32xf32>
    %157 = vector.broadcast %5 : vector<1x32xf32> to vector<16x32xf32>
    %158 = arith.addf %156, %157 : vector<16x32xf32>
    %159 = arith.addf %158, %0 : vector<16x32xf32>
    %cst_46 = arith.constant dense<0.000000e+00> : vector<16xf32>
    %160 = vector.multi_reduction <add>, %159, %cst_46 [1] : vector<16x32xf32> to vector<16xf32>
    %161 = vector.shape_cast %160 : vector<16xf32> to vector<16x1xf32>
    %cst_47 = arith.constant 3.200000e+01 : f32
    %162 = vector.broadcast %cst_47 : f32 to vector<16x1xf32>
    %163 = arith.divf %161, %162 : vector<16x1xf32>
    %164 = vector.broadcast %163 : vector<16x1xf32> to vector<16x32xf32>
    %165 = arith.subf %159, %164 : vector<16x32xf32>
    %166 = arith.mulf %165, %165 : vector<16x32xf32>
    %cst_48 = arith.constant dense<0.000000e+00> : vector<16xf32>
    %167 = vector.multi_reduction <add>, %166, %cst_48 [1] : vector<16x32xf32> to vector<16xf32>
    %168 = vector.shape_cast %167 : vector<16xf32> to vector<16x1xf32>
    %cst_49 = arith.constant 3.200000e+01 : f32
    %169 = vector.broadcast %cst_49 : f32 to vector<16x1xf32>
    %170 = arith.divf %168, %169 : vector<16x1xf32>
    %171 = vector.broadcast %163 : vector<16x1xf32> to vector<16x32xf32>
    %172 = arith.subf %159, %171 : vector<16x32xf32>
    %cst_50 = arith.constant 9.99999974E-6 : f32
    %173 = vector.broadcast %cst_50 : f32 to vector<16x1xf32>
    %174 = arith.addf %170, %173 : vector<16x1xf32>
    %175 = math.rsqrt %174 : vector<16x1xf32>
    %176 = vector.broadcast %175 : vector<16x1xf32> to vector<16x32xf32>
    %177 = arith.mulf %172, %176 : vector<16x32xf32>
    %178 = vector.broadcast %6 : vector<1x32xf32> to vector<16x32xf32>
    %179 = arith.mulf %177, %178 : vector<16x32xf32>
    %180 = vector.broadcast %7 : vector<1x32xf32> to vector<16x32xf32>
    %181 = arith.addf %179, %180 : vector<16x32xf32>
    %c72 = arith.constant 72 : index
    %c0_51 = arith.constant 0 : index
    %182 = vector.load %arg2[%c72, %c0_51] : memref<144x128xf32, #tpu.memory_space<vmem>>, vector<32x96xf32>
    %c104 = arith.constant 104 : index
    %c0_52 = arith.constant 0 : index
    %183 = vector.load %arg2[%c104, %c0_52] : memref<144x128xf32, #tpu.memory_space<vmem>>, vector<32x32xf32>
    %c136 = arith.constant 136 : index
    %c0_53 = arith.constant 0 : index
    %184 = vector.load %arg2[%c136, %c0_53] : memref<144x128xf32, #tpu.memory_space<vmem>>, vector<8x128xf32>
    %185 = vector.extract_strided_slice %184 {offsets = [0, 0], sizes = [1, 96], strides = [1, 1]} : vector<8x128xf32> to vector<1x96xf32>
    %186 = vector.extract_strided_slice %184 {offsets = [1, 0], sizes = [1, 32], strides = [1, 1]} : vector<8x128xf32> to vector<1x32xf32>
    %187 = vector.extract_strided_slice %184 {offsets = [2, 0], sizes = [1, 32], strides = [1, 1]} : vector<8x128xf32> to vector<1x32xf32>
    %188 = vector.extract_strided_slice %184 {offsets = [3, 0], sizes = [1, 32], strides = [1, 1]} : vector<8x128xf32> to vector<1x32xf32>
    %cst_54 = arith.constant dense<0.000000e+00> : vector<16x96xf32>
    %189 = tpu.matmul %181, %182, %cst_54 {dimension_numbers = #tpu.dot_dimension_numbers<[1], [0], [0], [1], [0, 0, 1, 1], [], []>} : vector<16x32xf32>, vector<32x96xf32>, vector<16x96xf32> -> vector<16x96xf32>
    %190 = vector.broadcast %185 : vector<1x96xf32> to vector<16x96xf32>
    %191 = arith.addf %189, %190 : vector<16x96xf32>
    %192 = vector.extract_strided_slice %191 {offsets = [0, 0], sizes = [8, 32], strides = [1, 1]} : vector<16x96xf32> to vector<8x32xf32>
    %193 = vector.extract_strided_slice %191 {offsets = [0, 32], sizes = [8, 32], strides = [1, 1]} : vector<16x96xf32> to vector<8x32xf32>
    %194 = vector.extract_strided_slice %191 {offsets = [0, 64], sizes = [8, 32], strides = [1, 1]} : vector<16x96xf32> to vector<8x32xf32>
    %195 = vector.extract_strided_slice %192 {offsets = [0, 0], sizes = [8, 8], strides = [1, 1]} : vector<8x32xf32> to vector<8x8xf32>
    %196 = vector.extract_strided_slice %193 {offsets = [0, 0], sizes = [8, 8], strides = [1, 1]} : vector<8x32xf32> to vector<8x8xf32>
    %197 = vector.extract_strided_slice %194 {offsets = [0, 0], sizes = [8, 8], strides = [1, 1]} : vector<8x32xf32> to vector<8x8xf32>
    %cst_55 = arith.constant dense<0.000000e+00> : vector<8x8xf32>
    %198 = tpu.matmul %195, %196, %cst_55 {dimension_numbers = #tpu.dot_dimension_numbers<[1], [1], [0], [0], [0, 0, 1, 0], [], []>} : vector<8x8xf32>, vector<8x8xf32>, vector<8x8xf32> -> vector<8x8xf32>
    %cst_56 = arith.constant 0.353553385 : f32
    %199 = vector.broadcast %cst_56 : f32 to vector<8x8xf32>
    %200 = arith.mulf %198, %199 : vector<8x8xf32>
    %cst_57 = arith.constant dense<0xFF800000> : vector<8xf32>
    %201 = vector.multi_reduction <maximumf>, %200, %cst_57 [1] : vector<8x8xf32> to vector<8xf32>
    %202 = vector.shape_cast %201 : vector<8xf32> to vector<8x1xf32>
    %203 = vector.broadcast %202 : vector<8x1xf32> to vector<8x8xf32>
    %204 = arith.subf %200, %203 : vector<8x8xf32>
    %205 = math.exp %204 : vector<8x8xf32>
    %cst_58 = arith.constant dense<0.000000e+00> : vector<8xf32>
    %206 = vector.multi_reduction <add>, %205, %cst_58 [1] : vector<8x8xf32> to vector<8xf32>
    %207 = vector.shape_cast %206 : vector<8xf32> to vector<8x1xf32>
    %208 = tpu.reciprocal %207 {approx = true} : vector<8x1xf32> -> vector<8x1xf32>
    %209 = vector.broadcast %208 : vector<8x1xf32> to vector<8x8xf32>
    %210 = arith.mulf %205, %209 : vector<8x8xf32>
    %cst_59 = arith.constant dense<0.000000e+00> : vector<8x8xf32>
    %211 = tpu.matmul %210, %197, %cst_59 {dimension_numbers = #tpu.dot_dimension_numbers<[1], [0], [0], [1], [0, 0, 1, 1], [], []>} : vector<8x8xf32>, vector<8x8xf32>, vector<8x8xf32> -> vector<8x8xf32>
    %212 = vector.extract_strided_slice %192 {offsets = [0, 8], sizes = [8, 8], strides = [1, 1]} : vector<8x32xf32> to vector<8x8xf32>
    %213 = vector.extract_strided_slice %193 {offsets = [0, 8], sizes = [8, 8], strides = [1, 1]} : vector<8x32xf32> to vector<8x8xf32>
    %214 = vector.extract_strided_slice %194 {offsets = [0, 8], sizes = [8, 8], strides = [1, 1]} : vector<8x32xf32> to vector<8x8xf32>
    %cst_60 = arith.constant dense<0.000000e+00> : vector<8x8xf32>
    %215 = tpu.matmul %212, %213, %cst_60 {dimension_numbers = #tpu.dot_dimension_numbers<[1], [1], [0], [0], [0, 0, 1, 0], [], []>} : vector<8x8xf32>, vector<8x8xf32>, vector<8x8xf32> -> vector<8x8xf32>
    %cst_61 = arith.constant 0.353553385 : f32
    %216 = vector.broadcast %cst_61 : f32 to vector<8x8xf32>
    %217 = arith.mulf %215, %216 : vector<8x8xf32>
    %cst_62 = arith.constant dense<0xFF800000> : vector<8xf32>
    %218 = vector.multi_reduction <maximumf>, %217, %cst_62 [1] : vector<8x8xf32> to vector<8xf32>
    %219 = vector.shape_cast %218 : vector<8xf32> to vector<8x1xf32>
    %220 = vector.broadcast %219 : vector<8x1xf32> to vector<8x8xf32>
    %221 = arith.subf %217, %220 : vector<8x8xf32>
    %222 = math.exp %221 : vector<8x8xf32>
    %cst_63 = arith.constant dense<0.000000e+00> : vector<8xf32>
    %223 = vector.multi_reduction <add>, %222, %cst_63 [1] : vector<8x8xf32> to vector<8xf32>
    %224 = vector.shape_cast %223 : vector<8xf32> to vector<8x1xf32>
    %225 = tpu.reciprocal %224 {approx = true} : vector<8x1xf32> -> vector<8x1xf32>
    %226 = vector.broadcast %225 : vector<8x1xf32> to vector<8x8xf32>
    %227 = arith.mulf %222, %226 : vector<8x8xf32>
    %cst_64 = arith.constant dense<0.000000e+00> : vector<8x8xf32>
    %228 = tpu.matmul %227, %214, %cst_64 {dimension_numbers = #tpu.dot_dimension_numbers<[1], [0], [0], [1], [0, 0, 1, 1], [], []>} : vector<8x8xf32>, vector<8x8xf32>, vector<8x8xf32> -> vector<8x8xf32>
    %229 = vector.extract_strided_slice %192 {offsets = [0, 16], sizes = [8, 8], strides = [1, 1]} : vector<8x32xf32> to vector<8x8xf32>
    %230 = vector.extract_strided_slice %193 {offsets = [0, 16], sizes = [8, 8], strides = [1, 1]} : vector<8x32xf32> to vector<8x8xf32>
    %231 = vector.extract_strided_slice %194 {offsets = [0, 16], sizes = [8, 8], strides = [1, 1]} : vector<8x32xf32> to vector<8x8xf32>
    %cst_65 = arith.constant dense<0.000000e+00> : vector<8x8xf32>
    %232 = tpu.matmul %229, %230, %cst_65 {dimension_numbers = #tpu.dot_dimension_numbers<[1], [1], [0], [0], [0, 0, 1, 0], [], []>} : vector<8x8xf32>, vector<8x8xf32>, vector<8x8xf32> -> vector<8x8xf32>
    %cst_66 = arith.constant 0.353553385 : f32
    %233 = vector.broadcast %cst_66 : f32 to vector<8x8xf32>
    %234 = arith.mulf %232, %233 : vector<8x8xf32>
    %cst_67 = arith.constant dense<0xFF800000> : vector<8xf32>
    %235 = vector.multi_reduction <maximumf>, %234, %cst_67 [1] : vector<8x8xf32> to vector<8xf32>
    %236 = vector.shape_cast %235 : vector<8xf32> to vector<8x1xf32>
    %237 = vector.broadcast %236 : vector<8x1xf32> to vector<8x8xf32>
    %238 = arith.subf %234, %237 : vector<8x8xf32>
    %239 = math.exp %238 : vector<8x8xf32>
    %cst_68 = arith.constant dense<0.000000e+00> : vector<8xf32>
    %240 = vector.multi_reduction <add>, %239, %cst_68 [1] : vector<8x8xf32> to vector<8xf32>
    %241 = vector.shape_cast %240 : vector<8xf32> to vector<8x1xf32>
    %242 = tpu.reciprocal %241 {approx = true} : vector<8x1xf32> -> vector<8x1xf32>
    %243 = vector.broadcast %242 : vector<8x1xf32> to vector<8x8xf32>
    %244 = arith.mulf %239, %243 : vector<8x8xf32>
    %cst_69 = arith.constant dense<0.000000e+00> : vector<8x8xf32>
    %245 = tpu.matmul %244, %231, %cst_69 {dimension_numbers = #tpu.dot_dimension_numbers<[1], [0], [0], [1], [0, 0, 1, 1], [], []>} : vector<8x8xf32>, vector<8x8xf32>, vector<8x8xf32> -> vector<8x8xf32>
    %246 = vector.extract_strided_slice %192 {offsets = [0, 24], sizes = [8, 8], strides = [1, 1]} : vector<8x32xf32> to vector<8x8xf32>
    %247 = vector.extract_strided_slice %193 {offsets = [0, 24], sizes = [8, 8], strides = [1, 1]} : vector<8x32xf32> to vector<8x8xf32>
    %248 = vector.extract_strided_slice %194 {offsets = [0, 24], sizes = [8, 8], strides = [1, 1]} : vector<8x32xf32> to vector<8x8xf32>
    %cst_70 = arith.constant dense<0.000000e+00> : vector<8x8xf32>
    %249 = tpu.matmul %246, %247, %cst_70 {dimension_numbers = #tpu.dot_dimension_numbers<[1], [1], [0], [0], [0, 0, 1, 0], [], []>} : vector<8x8xf32>, vector<8x8xf32>, vector<8x8xf32> -> vector<8x8xf32>
    %cst_71 = arith.constant 0.353553385 : f32
    %250 = vector.broadcast %cst_71 : f32 to vector<8x8xf32>
    %251 = arith.mulf %249, %250 : vector<8x8xf32>
    %cst_72 = arith.constant dense<0xFF800000> : vector<8xf32>
    %252 = vector.multi_reduction <maximumf>, %251, %cst_72 [1] : vector<8x8xf32> to vector<8xf32>
    %253 = vector.shape_cast %252 : vector<8xf32> to vector<8x1xf32>
    %254 = vector.broadcast %253 : vector<8x1xf32> to vector<8x8xf32>
    %255 = arith.subf %251, %254 : vector<8x8xf32>
    %256 = math.exp %255 : vector<8x8xf32>
    %cst_73 = arith.constant dense<0.000000e+00> : vector<8xf32>
    %257 = vector.multi_reduction <add>, %256, %cst_73 [1] : vector<8x8xf32> to vector<8xf32>
    %258 = vector.shape_cast %257 : vector<8xf32> to vector<8x1xf32>
    %259 = tpu.reciprocal %258 {approx = true} : vector<8x1xf32> -> vector<8x1xf32>
    %260 = vector.broadcast %259 : vector<8x1xf32> to vector<8x8xf32>
    %261 = arith.mulf %256, %260 : vector<8x8xf32>
    %cst_74 = arith.constant dense<0.000000e+00> : vector<8x8xf32>
    %262 = tpu.matmul %261, %248, %cst_74 {dimension_numbers = #tpu.dot_dimension_numbers<[1], [0], [0], [1], [0, 0, 1, 1], [], []>} : vector<8x8xf32>, vector<8x8xf32>, vector<8x8xf32> -> vector<8x8xf32>
    %263 = tpu.concatenate %211, %228, %245, %262 in 1 : vector<8x8xf32>, vector<8x8xf32>, vector<8x8xf32>, vector<8x8xf32> -> vector<8x32xf32>
    %264 = vector.extract_strided_slice %191 {offsets = [8, 0], sizes = [8, 32], strides = [1, 1]} : vector<16x96xf32> to vector<8x32xf32>
    %265 = vector.extract_strided_slice %191 {offsets = [8, 32], sizes = [8, 32], strides = [1, 1]} : vector<16x96xf32> to vector<8x32xf32>
    %266 = vector.extract_strided_slice %191 {offsets = [8, 64], sizes = [8, 32], strides = [1, 1]} : vector<16x96xf32> to vector<8x32xf32>
    %267 = vector.extract_strided_slice %264 {offsets = [0, 0], sizes = [8, 8], strides = [1, 1]} : vector<8x32xf32> to vector<8x8xf32>
    %268 = vector.extract_strided_slice %265 {offsets = [0, 0], sizes = [8, 8], strides = [1, 1]} : vector<8x32xf32> to vector<8x8xf32>
    %269 = vector.extract_strided_slice %266 {offsets = [0, 0], sizes = [8, 8], strides = [1, 1]} : vector<8x32xf32> to vector<8x8xf32>
    %cst_75 = arith.constant dense<0.000000e+00> : vector<8x8xf32>
    %270 = tpu.matmul %267, %268, %cst_75 {dimension_numbers = #tpu.dot_dimension_numbers<[1], [1], [0], [0], [0, 0, 1, 0], [], []>} : vector<8x8xf32>, vector<8x8xf32>, vector<8x8xf32> -> vector<8x8xf32>
    %cst_76 = arith.constant 0.353553385 : f32
    %271 = vector.broadcast %cst_76 : f32 to vector<8x8xf32>
    %272 = arith.mulf %270, %271 : vector<8x8xf32>
    %cst_77 = arith.constant dense<0xFF800000> : vector<8xf32>
    %273 = vector.multi_reduction <maximumf>, %272, %cst_77 [1] : vector<8x8xf32> to vector<8xf32>
    %274 = vector.shape_cast %273 : vector<8xf32> to vector<8x1xf32>
    %275 = vector.broadcast %274 : vector<8x1xf32> to vector<8x8xf32>
    %276 = arith.subf %272, %275 : vector<8x8xf32>
    %277 = math.exp %276 : vector<8x8xf32>
    %cst_78 = arith.constant dense<0.000000e+00> : vector<8xf32>
    %278 = vector.multi_reduction <add>, %277, %cst_78 [1] : vector<8x8xf32> to vector<8xf32>
    %279 = vector.shape_cast %278 : vector<8xf32> to vector<8x1xf32>
    %280 = tpu.reciprocal %279 {approx = true} : vector<8x1xf32> -> vector<8x1xf32>
    %281 = vector.broadcast %280 : vector<8x1xf32> to vector<8x8xf32>
    %282 = arith.mulf %277, %281 : vector<8x8xf32>
    %cst_79 = arith.constant dense<0.000000e+00> : vector<8x8xf32>
    %283 = tpu.matmul %282, %269, %cst_79 {dimension_numbers = #tpu.dot_dimension_numbers<[1], [0], [0], [1], [0, 0, 1, 1], [], []>} : vector<8x8xf32>, vector<8x8xf32>, vector<8x8xf32> -> vector<8x8xf32>
    %284 = vector.extract_strided_slice %264 {offsets = [0, 8], sizes = [8, 8], strides = [1, 1]} : vector<8x32xf32> to vector<8x8xf32>
    %285 = vector.extract_strided_slice %265 {offsets = [0, 8], sizes = [8, 8], strides = [1, 1]} : vector<8x32xf32> to vector<8x8xf32>
    %286 = vector.extract_strided_slice %266 {offsets = [0, 8], sizes = [8, 8], strides = [1, 1]} : vector<8x32xf32> to vector<8x8xf32>
    %cst_80 = arith.constant dense<0.000000e+00> : vector<8x8xf32>
    %287 = tpu.matmul %284, %285, %cst_80 {dimension_numbers = #tpu.dot_dimension_numbers<[1], [1], [0], [0], [0, 0, 1, 0], [], []>} : vector<8x8xf32>, vector<8x8xf32>, vector<8x8xf32> -> vector<8x8xf32>
    %cst_81 = arith.constant 0.353553385 : f32
    %288 = vector.broadcast %cst_81 : f32 to vector<8x8xf32>
    %289 = arith.mulf %287, %288 : vector<8x8xf32>
    %cst_82 = arith.constant dense<0xFF800000> : vector<8xf32>
    %290 = vector.multi_reduction <maximumf>, %289, %cst_82 [1] : vector<8x8xf32> to vector<8xf32>
    %291 = vector.shape_cast %290 : vector<8xf32> to vector<8x1xf32>
    %292 = vector.broadcast %291 : vector<8x1xf32> to vector<8x8xf32>
    %293 = arith.subf %289, %292 : vector<8x8xf32>
    %294 = math.exp %293 : vector<8x8xf32>
    %cst_83 = arith.constant dense<0.000000e+00> : vector<8xf32>
    %295 = vector.multi_reduction <add>, %294, %cst_83 [1] : vector<8x8xf32> to vector<8xf32>
    %296 = vector.shape_cast %295 : vector<8xf32> to vector<8x1xf32>
    %297 = tpu.reciprocal %296 {approx = true} : vector<8x1xf32> -> vector<8x1xf32>
    %298 = vector.broadcast %297 : vector<8x1xf32> to vector<8x8xf32>
    %299 = arith.mulf %294, %298 : vector<8x8xf32>
    %cst_84 = arith.constant dense<0.000000e+00> : vector<8x8xf32>
    %300 = tpu.matmul %299, %286, %cst_84 {dimension_numbers = #tpu.dot_dimension_numbers<[1], [0], [0], [1], [0, 0, 1, 1], [], []>} : vector<8x8xf32>, vector<8x8xf32>, vector<8x8xf32> -> vector<8x8xf32>
    %301 = vector.extract_strided_slice %264 {offsets = [0, 16], sizes = [8, 8], strides = [1, 1]} : vector<8x32xf32> to vector<8x8xf32>
    %302 = vector.extract_strided_slice %265 {offsets = [0, 16], sizes = [8, 8], strides = [1, 1]} : vector<8x32xf32> to vector<8x8xf32>
    %303 = vector.extract_strided_slice %266 {offsets = [0, 16], sizes = [8, 8], strides = [1, 1]} : vector<8x32xf32> to vector<8x8xf32>
    %cst_85 = arith.constant dense<0.000000e+00> : vector<8x8xf32>
    %304 = tpu.matmul %301, %302, %cst_85 {dimension_numbers = #tpu.dot_dimension_numbers<[1], [1], [0], [0], [0, 0, 1, 0], [], []>} : vector<8x8xf32>, vector<8x8xf32>, vector<8x8xf32> -> vector<8x8xf32>
    %cst_86 = arith.constant 0.353553385 : f32
    %305 = vector.broadcast %cst_86 : f32 to vector<8x8xf32>
    %306 = arith.mulf %304, %305 : vector<8x8xf32>
    %cst_87 = arith.constant dense<0xFF800000> : vector<8xf32>
    %307 = vector.multi_reduction <maximumf>, %306, %cst_87 [1] : vector<8x8xf32> to vector<8xf32>
    %308 = vector.shape_cast %307 : vector<8xf32> to vector<8x1xf32>
    %309 = vector.broadcast %308 : vector<8x1xf32> to vector<8x8xf32>
    %310 = arith.subf %306, %309 : vector<8x8xf32>
    %311 = math.exp %310 : vector<8x8xf32>
    %cst_88 = arith.constant dense<0.000000e+00> : vector<8xf32>
    %312 = vector.multi_reduction <add>, %311, %cst_88 [1] : vector<8x8xf32> to vector<8xf32>
    %313 = vector.shape_cast %312 : vector<8xf32> to vector<8x1xf32>
    %314 = tpu.reciprocal %313 {approx = true} : vector<8x1xf32> -> vector<8x1xf32>
    %315 = vector.broadcast %314 : vector<8x1xf32> to vector<8x8xf32>
    %316 = arith.mulf %311, %315 : vector<8x8xf32>
    %cst_89 = arith.constant dense<0.000000e+00> : vector<8x8xf32>
    %317 = tpu.matmul %316, %303, %cst_89 {dimension_numbers = #tpu.dot_dimension_numbers<[1], [0], [0], [1], [0, 0, 1, 1], [], []>} : vector<8x8xf32>, vector<8x8xf32>, vector<8x8xf32> -> vector<8x8xf32>
    %318 = vector.extract_strided_slice %264 {offsets = [0, 24], sizes = [8, 8], strides = [1, 1]} : vector<8x32xf32> to vector<8x8xf32>
    %319 = vector.extract_strided_slice %265 {offsets = [0, 24], sizes = [8, 8], strides = [1, 1]} : vector<8x32xf32> to vector<8x8xf32>
    %320 = vector.extract_strided_slice %266 {offsets = [0, 24], sizes = [8, 8], strides = [1, 1]} : vector<8x32xf32> to vector<8x8xf32>
    %cst_90 = arith.constant dense<0.000000e+00> : vector<8x8xf32>
    %321 = tpu.matmul %318, %319, %cst_90 {dimension_numbers = #tpu.dot_dimension_numbers<[1], [1], [0], [0], [0, 0, 1, 0], [], []>} : vector<8x8xf32>, vector<8x8xf32>, vector<8x8xf32> -> vector<8x8xf32>
    %cst_91 = arith.constant 0.353553385 : f32
    %322 = vector.broadcast %cst_91 : f32 to vector<8x8xf32>
    %323 = arith.mulf %321, %322 : vector<8x8xf32>
    %cst_92 = arith.constant dense<0xFF800000> : vector<8xf32>
    %324 = vector.multi_reduction <maximumf>, %323, %cst_92 [1] : vector<8x8xf32> to vector<8xf32>
    %325 = vector.shape_cast %324 : vector<8xf32> to vector<8x1xf32>
    %326 = vector.broadcast %325 : vector<8x1xf32> to vector<8x8xf32>
    %327 = arith.subf %323, %326 : vector<8x8xf32>
    %328 = math.exp %327 : vector<8x8xf32>
    %cst_93 = arith.constant dense<0.000000e+00> : vector<8xf32>
    %329 = vector.multi_reduction <add>, %328, %cst_93 [1] : vector<8x8xf32> to vector<8xf32>
    %330 = vector.shape_cast %329 : vector<8xf32> to vector<8x1xf32>
    %331 = tpu.reciprocal %330 {approx = true} : vector<8x1xf32> -> vector<8x1xf32>
    %332 = vector.broadcast %331 : vector<8x1xf32> to vector<8x8xf32>
    %333 = arith.mulf %328, %332 : vector<8x8xf32>
    %cst_94 = arith.constant dense<0.000000e+00> : vector<8x8xf32>
    %334 = tpu.matmul %333, %320, %cst_94 {dimension_numbers = #tpu.dot_dimension_numbers<[1], [0], [0], [1], [0, 0, 1, 1], [], []>} : vector<8x8xf32>, vector<8x8xf32>, vector<8x8xf32> -> vector<8x8xf32>
    %335 = tpu.concatenate %283, %300, %317, %334 in 1 : vector<8x8xf32>, vector<8x8xf32>, vector<8x8xf32>, vector<8x8xf32> -> vector<8x32xf32>
    %336 = tpu.concatenate %263, %335 in 0 : vector<8x32xf32>, vector<8x32xf32> -> vector<16x32xf32>
    %cst_95 = arith.constant dense<0.000000e+00> : vector<16x32xf32>
    %337 = tpu.matmul %336, %183, %cst_95 {dimension_numbers = #tpu.dot_dimension_numbers<[1], [0], [0], [1], [0, 0, 1, 1], [], []>} : vector<16x32xf32>, vector<32x32xf32>, vector<16x32xf32> -> vector<16x32xf32>
    %338 = vector.broadcast %186 : vector<1x32xf32> to vector<16x32xf32>
    %339 = arith.addf %337, %338 : vector<16x32xf32>
    %340 = arith.addf %339, %181 : vector<16x32xf32>
    %cst_96 = arith.constant dense<0.000000e+00> : vector<16xf32>
    %341 = vector.multi_reduction <add>, %340, %cst_96 [1] : vector<16x32xf32> to vector<16xf32>
    %342 = vector.shape_cast %341 : vector<16xf32> to vector<16x1xf32>
    %cst_97 = arith.constant 3.200000e+01 : f32
    %343 = vector.broadcast %cst_97 : f32 to vector<16x1xf32>
    %344 = arith.divf %342, %343 : vector<16x1xf32>
    %345 = vector.broadcast %344 : vector<16x1xf32> to vector<16x32xf32>
    %346 = arith.subf %340, %345 : vector<16x32xf32>
    %347 = arith.mulf %346, %346 : vector<16x32xf32>
    %cst_98 = arith.constant dense<0.000000e+00> : vector<16xf32>
    %348 = vector.multi_reduction <add>, %347, %cst_98 [1] : vector<16x32xf32> to vector<16xf32>
    %349 = vector.shape_cast %348 : vector<16xf32> to vector<16x1xf32>
    %cst_99 = arith.constant 3.200000e+01 : f32
    %350 = vector.broadcast %cst_99 : f32 to vector<16x1xf32>
    %351 = arith.divf %349, %350 : vector<16x1xf32>
    %352 = vector.broadcast %344 : vector<16x1xf32> to vector<16x32xf32>
    %353 = arith.subf %340, %352 : vector<16x32xf32>
    %cst_100 = arith.constant 9.99999974E-6 : f32
    %354 = vector.broadcast %cst_100 : f32 to vector<16x1xf32>
    %355 = arith.addf %351, %354 : vector<16x1xf32>
    %356 = math.rsqrt %355 : vector<16x1xf32>
    %357 = vector.broadcast %356 : vector<16x1xf32> to vector<16x32xf32>
    %358 = arith.mulf %353, %357 : vector<16x32xf32>
    %359 = vector.broadcast %187 : vector<1x32xf32> to vector<16x32xf32>
    %360 = arith.mulf %358, %359 : vector<16x32xf32>
    %361 = vector.broadcast %188 : vector<1x32xf32> to vector<16x32xf32>
    %362 = arith.addf %360, %361 : vector<16x32xf32>
    %c0_101 = arith.constant 0 : index
    %c0_102 = arith.constant 0 : index
    %363 = vector.load %arg3[%c0_101, %c0_102] : memref<16x32xf32, #tpu.memory_space<vmem>>, vector<16x32xf32>
    tpu.vector_store %arg3[%c0_101, %c0_102], %362 {strides = array<i32>} : memref<16x32xf32, #tpu.memory_space<vmem>>, vector<16x32xf32>,
    return
  }
  func.func @transform_0(%arg0: i32) -> (i32, i32) {
    %c0_i32 = arith.constant 0 : i32
    %c0_i32_0 = arith.constant 0 : i32
    %c0_i32_1 = arith.constant 0 : i32
    return %c0_i32, %c0_i32_0 : i32, i32
  }
  func.func @transform_1(%arg0: i32) -> (i32, i32) {
    %c0_i32 = arith.constant 0 : i32
    %c0_i32_0 = arith.constant 0 : i32
    %c0_i32_1 = arith.constant 0 : i32
    return %c0_i32, %c0_i32_0 : i32, i32
  }
  func.func @transform_2(%arg0: i32) -> (i32, i32) {
    %c0_i32 = arith.constant 0 : i32
    %c0_i32_0 = arith.constant 0 : i32
    %c0_i32_1 = arith.constant 0 : i32
    return %c0_i32, %c0_i32_0 : i32, i32
  }
}

</mosaic_0001>

<llo_original>
// kernel: tpu_custom_call.1
$region0: #{tpu_custom_call.1}
  #allocation0 [shape = 'u32[]', space=smem, size = 0x4, offset = 0x4, fixed_abs, tag = 'smem constant byte address 0x4 - core index']
  #allocation1 [shape = 'u32[144,128]{1,0:T(1,128)}', space=vmem, size = 0x12000, scoped, tag = 'internal scratch']
  %s0 = inlined_call_operand.hbm [shape: f32[16,32], index: 0, kind: input, shape index: {}]
  %s1 = inlined_call_operand.hbm [shape: f32[144,128], index: 1, kind: input, shape index: {}]
  %s2 = inlined_call_operand.hbm [shape: f32[16,32], index: 2, kind: output, shape index: {}]
  %s3 = sld [smem:[#allocation0]]
  $region26: #{tpu_custom_call.1} parent=0
    _
  %s5 = ssub.s32 1, %s3
  %s6 = scalar_select 0, %s5, %s3
  $region1: #{tpu_custom_call.1} parent=0
    #allocation2 [shape = 'u8[8192]{0}', space=vmem, size = 0x2000, scoped, tag = 'input window, operand 0, single buffered']
    #allocation3 [shape = 's32[1]{0}', space=sflag, size = 0x4, scoped, tag = 'scoped memory for tpu_custom_call.1']
    #allocation4 [shape = 's32[1]{0}', space=sflag, size = 0x4, scoped, tag = 'scoped memory for tpu_custom_call.1']
    #allocation5 [shape = 'u8[73728]{0}', space=vmem, size = 0x12000, scoped, tag = 'input window, operand 1, single buffered']
    #allocation6 [shape = 's32[1]{0}', space=sflag, size = 0x4, scoped, tag = 'scoped memory for tpu_custom_call.1']
    #allocation7 [shape = 'u8[8192]{0}', space=vmem, size = 0x2000, scoped, tag = 'output window, operand 0, single buffered']
    %7 = vsyncpa [#allocation3], 0
    %8 = vsyncpa [#allocation6], 0
    %9 = vsyncpa [#allocation4], 0
    // Predicated region
    $region2: #{tpu_custom_call.1} parent=1 // pred_check
      _
    $region3: #{tpu_custom_call.1} parent=1 // pred_check_branch
      %11 = sbr.rel (0) target = $region5
    $region4: #{tpu_custom_call.1} parent=1 // pred_region
      %s13 = ssub.s32 256, 256
      %14 = vsyncadd [#allocation3], %s13
      %s15 = sshll.u32 [#allocation2], 4
      %s16 = int_to_ptr.vmem [resolvable:$true] %s15
      %21 = dma.hbm_to_vmem [thread:$0]  %s0, 256, %s16, [#allocation3], 128, 128, 8
    $region5: #{tpu_custom_call.1} parent=1 // pred_fallthru
      _
    // Predicated region
    $region6: #{tpu_custom_call.1} parent=1 // pred_check
      _
    $region7: #{tpu_custom_call.1} parent=1 // pred_check_branch
      %23 = sbr.rel (0) target = $region9
    $region8: #{tpu_custom_call.1} parent=1 // pred_region
      %s25 = ssub.s32 2304, 2304
      %26 = vsyncadd [#allocation6], %s25
      %s27 = sshll.u32 [#allocation5], 4
      %s28 = int_to_ptr.vmem [resolvable:$true] %s27
      %33 = dma.hbm_to_vmem [thread:$0]  %s1, 2304, %s28, [#allocation6], 128, 128, 8
    $region9: #{tpu_custom_call.1} parent=1 // pred_fallthru
      _
    // Predicated region
    $region10: #{tpu_custom_call.1} parent=1 // pred_check
      _
    $region11: #{tpu_custom_call.1} parent=1 // pred_check_branch
      %35 = sbr.rel (0) target = $region13
    $region12: #{tpu_custom_call.1} parent=1 // pred_region
      %36 = dma.done [#allocation3], 256
    $region13: #{tpu_custom_call.1} parent=1 // pred_fallthru
      _
    // Predicated region
    $region14: #{tpu_custom_call.1} parent=1 // pred_check
      _
    $region15: #{tpu_custom_call.1} parent=1 // pred_check_branch
      %38 = sbr.rel (0) target = $region17
    $region16: #{tpu_custom_call.1} parent=1 // pred_region
      %39 = dma.done [#allocation6], 2304
    $region17: #{tpu_custom_call.1} parent=1 // pred_fallthru
      _
    %v40 = vld [vmem:[#allocation2] sm:$0xff]
    %v41 = vld [vmem:[#allocation2 + $0x8] sm:$0xff]
    %v42 = vld [vmem:[#allocation5] sm:$0xff]
    %v43 = vld [vmem:[#allocation5 + $0x8] sm:$0xff]
    %v44 = vld [vmem:[#allocation5 + $0x10] sm:$0xff]
    %v45 = vld [vmem:[#allocation5 + $0x18] sm:$0xff]
    %v46 = vld [vmem:[#allocation5 + $0x20] sm:$0xff]
    %v47 = vld [vmem:[#allocation5 + $0x28] sm:$0xff]
    %v48 = vld [vmem:[#allocation5 + $0x30] sm:$0xff]
    %v49 = vld [vmem:[#allocation5 + $0x38] sm:$0xff]
    %v50 = vld [vmem:[#allocation5 + $0x40] sm:$0xff]
    %v51 = vlaneseq
    %v52 = vshrl.u32 %v51, 7
    %v53 = vsub.s32 0, %v52
    %v54 = vrot.slane %v50, %v53
    %vm55 = vcmask 261120
    %v57 = vsel %vm55, %v40, 0
    %v60 = vsel %vm55, %v41, 0
    %62 = vmatprep.subr.mxu0 0.0
    %63 = vmatpush1.msra.mxu0 0.0
    %64 = vmatprep.subr.mxu0 0.0
    %65 = vmatpush1.msra.mxu0 0.0
    %66 = vmatprep.subr.mxu0 0.0
    %67 = vmatpush1.msra.mxu0 0.0
    %68 = vmatprep.subr.mxu0 0.0
    %69 = vmatpush1.msra.mxu0 0.0
    %70 = vmatprep.subr.mxu0 0.0
    %71 = vmatpush1.msra.mxu0 0.0
    %72 = vmatprep.subr.mxu0 0.0
    %73 = vmatpush1.msra.mxu0 0.0
    %74 = vmatprep.subr.mxu0 0.0
    %75 = vmatpush1.msra.mxu0 0.0
    %76 = vmatprep.subr.mxu0 0.0
    %77 = vmatpush1.msra.mxu0 0.0
    %78 = vmatprep.subr.mxu0 0.0
    %79 = vmatpush1.msra.mxu0 0.0
    %80 = vmatprep.subr.mxu0 0.0
    %81 = vmatpush1.msra.mxu0 0.0
    %82 = vmatprep.subr.mxu0 0.0
    %83 = vmatpush1.msra.mxu0 0.0
    %84 = vmatprep.subr.mxu0 0.0
    %85 = vmatpush1.msra.mxu0 0.0
    %86 = vmatprep.subr.mxu0 0.0
    %87 = vmatpush1.msra.mxu0 %v45
    %88 = vmatprep.subr.mxu0 0.0
    %89 = vmatpush1.msra.mxu0 %v44
    %90 = vmatprep.subr.mxu0 0.0
    %91 = vmatpush1.msra.mxu0 %v43
    %92 = vmatprep.subr.mxu0 0.0
    %93 = vmatpush1.msra.mxu0 %v42
    %94 = vmatprep.subr.mxu0 0.0
    %95 = vmatpush2.msra.mxu0 0.0
    %96 = vmatprep.subr.mxu0 0.0
    %97 = vmatpush2.msra.mxu0 0.0
    %98 = vmatprep.subr.mxu0 0.0
    %99 = vmatpush2.msra.mxu0 0.0
    %100 = vmatprep.subr.mxu0 0.0
    %101 = vmatpush2.msra.mxu0 0.0
    %102 = vmatprep.subr.mxu0 0.0
    %103 = vmatpush2.msra.mxu0 0.0
    %104 = vmatprep.subr.mxu0 0.0
    %105 = vmatpush2.msra.mxu0 0.0
    %106 = vmatprep.subr.mxu0 0.0
    %107 = vmatpush2.msra.mxu0 0.0
    %108 = vmatprep.subr.mxu0 0.0
    %109 = vmatpush2.msra.mxu0 0.0
    %110 = vmatprep.subr.mxu0 0.0
    %111 = vmatpush2.msra.mxu0 0.0
    %112 = vmatprep.subr.mxu0 0.0
    %113 = vmatpush2.msra.mxu0 0.0
    %114 = vmatprep.subr.mxu0 0.0
    %115 = vmatpush2.msra.mxu0 0.0
    %116 = vmatprep.subr.mxu0 0.0
    %117 = vmatpush2.msra.mxu0 0.0
    %118 = vmatprep.subr.mxu0 0.0
    %119 = vmatpush2.msra.mxu0 0.0
    %120 = vmatprep.subr.mxu0 0.0
    %121 = vmatpush2.msra.mxu0 0.0
    %122 = vmatprep.subr.mxu0 0.0
    %123 = vmatpush2.msra.mxu0 0.0
    %124 = vmatprep.subr.mxu0 0.0
    %125 = vmatpush2.msra.mxu0 0.0
    %126 = vmatprep.mubr.f32.mxu0 0.0
    %127 = vmatmul.mubr.f32.gmra.mxu0 %v57
    %v128 = vpop.f32.mrf.mxu0
    %v129 = vadd.f32 %v54, %v128
    %v130 = vpop.f32.mrf.mxu0
    %131 = vmatprep.mubr.f32.mxu0 0.0
    %132 = vmatmul.mubr.f32.gmra.mxu0 %v60
    %v133 = vpop.f32.mrf.mxu0
    %v134 = vadd.f32 %v54, %v133
    %v135 = vpop.f32.mrf.mxu0
    %136 = vdwg.mxu0
    %138 = vrot.lane.b32.xlu0 %v129, 96
    %v139 = vpop.permute.xlu0 %138
    %vm140 = vcmask 64512
    %v141 = vsel %vm140, %v129, 0
    %v143 = vsel %vm140, %v139, 0
    %145 = vmatprep.subr.mxu0 0.0
    %146 = vmatpush1.xpose.msra.mxu0 0.0
    %147 = vmatprep.subr.mxu0 0.0
    %148 = vmatpush1.xpose.msra.mxu0 0.0
    %149 = vmatprep.subr.mxu0 0.0
    %150 = vmatpush1.xpose.msra.mxu0 0.0
    %151 = vmatprep.subr.mxu0 0.0
    %152 = vmatpush1.xpose.msra.mxu0 0.0
    %153 = vmatprep.subr.mxu0 0.0
    %154 = vmatpush1.xpose.msra.mxu0 0.0
    %155 = vmatprep.subr.mxu0 0.0
    %156 = vmatpush1.xpose.msra.mxu0 0.0
    %157 = vmatprep.subr.mxu0 0.0
    %158 = vmatpush1.xpose.msra.mxu0 0.0
    %159 = vmatprep.subr.mxu0 0.0
    %160 = vmatpush1.xpose.msra.mxu0 0.0
    %161 = vmatprep.subr.mxu0 0.0
    %162 = vmatpush1.xpose.msra.mxu0 0.0
    %163 = vmatprep.subr.mxu0 0.0
    %164 = vmatpush1.xpose.msra.mxu0 0.0
    %165 = vmatprep.subr.mxu0 0.0
    %166 = vmatpush1.xpose.msra.mxu0 0.0
    %167 = vmatprep.subr.mxu0 0.0
    %168 = vmatpush1.xpose.msra.mxu0 0.0
    %169 = vmatprep.subr.mxu0 0.0
    %170 = vmatpush1.xpose.msra.mxu0 0.0
    %171 = vmatprep.subr.mxu0 0.0
    %172 = vmatpush1.xpose.msra.mxu0 0.0
    %173 = vmatprep.subr.mxu0 0.0
    %174 = vmatpush1.xpose.msra.mxu0 0.0
    %175 = vmatprep.subr.mxu0 0.0
    %176 = vmatpush1.xpose.msra.mxu0 %v143
    %177 = vmatprep.subr.mxu0 0.0
    %178 = vmatpush2.xpose.msra.mxu0 0.0
    %179 = vmatprep.subr.mxu0 0.0
    %180 = vmatpush2.xpose.msra.mxu0 0.0
    %181 = vmatprep.subr.mxu0 0.0
    %182 = vmatpush2.xpose.msra.mxu0 0.0
    %183 = vmatprep.subr.mxu0 0.0
    %184 = vmatpush2.xpose.msra.mxu0 0.0
    %185 = vmatprep.subr.mxu0 0.0
    %186 = vmatpush2.xpose.msra.mxu0 0.0
    %187 = vmatprep.subr.mxu0 0.0
    %188 = vmatpush2.xpose.msra.mxu0 0.0
    %189 = vmatprep.subr.mxu0 0.0
    %190 = vmatpush2.xpose.msra.mxu0 0.0
    %191 = vmatprep.subr.mxu0 0.0
    %192 = vmatpush2.xpose.msra.mxu0 0.0
    %193 = vmatprep.subr.mxu0 0.0
    %194 = vmatpush2.xpose.msra.mxu0 0.0
    %195 = vmatprep.subr.mxu0 0.0
    %196 = vmatpush2.xpose.msra.mxu0 0.0
    %197 = vmatprep.subr.mxu0 0.0
    %198 = vmatpush2.xpose.msra.mxu0 0.0
    %199 = vmatprep.subr.mxu0 0.0
    %200 = vmatpush2.xpose.msra.mxu0 0.0
    %201 = vmatprep.subr.mxu0 0.0
    %202 = vmatpush2.xpose.msra.mxu0 0.0
    %203 = vmatprep.subr.mxu0 0.0
    %204 = vmatpush2.xpose.msra.mxu0 0.0
    %205 = vmatprep.subr.mxu0 0.0
    %206 = vmatpush2.xpose.msra.mxu0 0.0
    %207 = vmatprep.subr.mxu0 0.0
    %208 = vmatpush2.xpose.msra.mxu0 0.0
    %209 = vmatprep.mubr.f32.mxu0 0.0
    %210 = vmatmul.mubr.f32.gmra.mxu0 %v141
    %v211 = vpop.f32.mrf.mxu0
    %v212 = vadd.f32 0.0, %v211
    %v213 = vpop.f32.mrf.mxu0
    %214 = vdwg.mxu0
    %v215 = vmul.f32 %v212, 0.35355338
    %v216 = vsel %vm140, %v215, -inf
    %217 = vmax.xlane.f32.xlu0 %v216
    %v218 = vpop.xlane.xlu0 %217
    %v219 = vsub.f32 %v215, %v218
    %v220 = vmul.f32 %v219, 1.442695
    %v221 = vpow.pop %v220
    %v222 = vsel %vm140, %v221, 0.0
    %223 = vadd.xlane.f32.xlu0 %v222
    %v224 = vpop.xlane.xlu0 %223
    %v225 = vrcp.pop %v224
    %v226 = vmul.f32 %v221, %v225
    %227 = vrot.lane.b32.xlu0 %v129, 64
    %v228 = vpop.permute.xlu0 %227
    %v231 = vsel %vm140, %v226, 0
    %233 = vmatprep.subr.mxu0 0.0
    %234 = vmatpush1.msra.mxu0 0.0
    %235 = vmatprep.subr.mxu0 0.0
    %236 = vmatpush1.msra.mxu0 0.0
    %237 = vmatprep.subr.mxu0 0.0
    %238 = vmatpush1.msra.mxu0 0.0
    %239 = vmatprep.subr.mxu0 0.0
    %240 = vmatpush1.msra.mxu0 0.0
    %241 = vmatprep.subr.mxu0 0.0
    %242 = vmatpush1.msra.mxu0 0.0
    %243 = vmatprep.subr.mxu0 0.0
    %244 = vmatpush1.msra.mxu0 0.0
    %245 = vmatprep.subr.mxu0 0.0
    %246 = vmatpush1.msra.mxu0 0.0
    %247 = vmatprep.subr.mxu0 0.0
    %248 = vmatpush1.msra.mxu0 0.0
    %249 = vmatprep.subr.mxu0 0.0
    %250 = vmatpush1.msra.mxu0 0.0
    %251 = vmatprep.subr.mxu0 0.0
    %252 = vmatpush1.msra.mxu0 0.0
    %253 = vmatprep.subr.mxu0 0.0
    %254 = vmatpush1.msra.mxu0 0.0
    %255 = vmatprep.subr.mxu0 0.0
    %256 = vmatpush1.msra.mxu0 0.0
    %257 = vmatprep.subr.mxu0 0.0
    %258 = vmatpush1.msra.mxu0 0.0
    %259 = vmatprep.subr.mxu0 0.0
    %260 = vmatpush1.msra.mxu0 0.0
    %261 = vmatprep.subr.mxu0 0.0
    %262 = vmatpush1.msra.mxu0 0.0
    %263 = vmatprep.subr.mxu0 0.0
    %264 = vmatpush1.msra.mxu0 %v228
    %265 = vmatprep.subr.mxu0 0.0
    %266 = vmatpush2.msra.mxu0 0.0
    %267 = vmatprep.subr.mxu0 0.0
    %268 = vmatpush2.msra.mxu0 0.0
    %269 = vmatprep.subr.mxu0 0.0
    %270 = vmatpush2.msra.mxu0 0.0
    %271 = vmatprep.subr.mxu0 0.0
    %272 = vmatpush2.msra.mxu0 0.0
    %273 = vmatprep.subr.mxu0 0.0
    %274 = vmatpush2.msra.mxu0 0.0
    %275 = vmatprep.subr.mxu0 0.0
    %276 = vmatpush2.msra.mxu0 0.0
    %277 = vmatprep.subr.mxu0 0.0
    %278 = vmatpush2.msra.mxu0 0.0
    %279 = vmatprep.subr.mxu0 0.0
    %280 = vmatpush2.msra.mxu0 0.0
    %281 = vmatprep.subr.mxu0 0.0
    %282 = vmatpush2.msra.mxu0 0.0
    %283 = vmatprep.subr.mxu0 0.0
    %284 = vmatpush2.msra.mxu0 0.0
    %285 = vmatprep.subr.mxu0 0.0
    %286 = vmatpush2.msra.mxu0 0.0
    %287 = vmatprep.subr.mxu0 0.0
    %288 = vmatpush2.msra.mxu0 0.0
    %289 = vmatprep.subr.mxu0 0.0
    %290 = vmatpush2.msra.mxu0 0.0
    %291 = vmatprep.subr.mxu0 0.0
    %292 = vmatpush2.msra.mxu0 0.0
    %293 = vmatprep.subr.mxu0 0.0
    %294 = vmatpush2.msra.mxu0 0.0
    %295 = vmatprep.subr.mxu0 0.0
    %296 = vmatpush2.msra.mxu0 0.0
    %297 = vmatprep.mubr.f32.mxu0 0.0
    %298 = vmatmul.mubr.f32.gmra.mxu0 %v231
    %v299 = vpop.f32.mrf.mxu0
    %v300 = vadd.f32 0.0, %v299
    %v301 = vpop.f32.mrf.mxu0
    %302 = vdwg.mxu0
    %303 = vrot.lane.b32.xlu0 %v129, 120
    %v304 = vpop.permute.xlu0 %303
    %305 = vrot.lane.b32.xlu0 %v129, 88
    %v306 = vpop.permute.xlu0 %305
    %v307 = vsel %vm140, %v304, 0
    %v309 = vsel %vm140, %v306, 0
    %311 = vmatprep.subr.mxu0 0.0
    %312 = vmatpush1.xpose.msra.mxu0 0.0
    %313 = vmatprep.subr.mxu0 0.0
    %314 = vmatpush1.xpose.msra.mxu0 0.0
    %315 = vmatprep.subr.mxu0 0.0
    %316 = vmatpush1.xpose.msra.mxu0 0.0
    %317 = vmatprep.subr.mxu0 0.0
    %318 = vmatpush1.xpose.msra.mxu0 0.0
    %319 = vmatprep.subr.mxu0 0.0
    %320 = vmatpush1.xpose.msra.mxu0 0.0
    %321 = vmatprep.subr.mxu0 0.0
    %322 = vmatpush1.xpose.msra.mxu0 0.0
    %323 = vmatprep.subr.mxu0 0.0
    %324 = vmatpush1.xpose.msra.mxu0 0.0
    %325 = vmatprep.subr.mxu0 0.0
    %326 = vmatpush1.xpose.msra.mxu0 0.0
    %327 = vmatprep.subr.mxu0 0.0
    %328 = vmatpush1.xpose.msra.mxu0 0.0
    %329 = vmatprep.subr.mxu0 0.0
    %330 = vmatpush1.xpose.msra.mxu0 0.0
    %331 = vmatprep.subr.mxu0 0.0
    %332 = vmatpush1.xpose.msra.mxu0 0.0
    %333 = vmatprep.subr.mxu0 0.0
    %334 = vmatpush1.xpose.msra.mxu0 0.0
    %335 = vmatprep.subr.mxu0 0.0
    %336 = vmatpush1.xpose.msra.mxu0 0.0
    %337 = vmatprep.subr.mxu0 0.0
    %338 = vmatpush1.xpose.msra.mxu0 0.0
    %339 = vmatprep.subr.mxu0 0.0
    %340 = vmatpush1.xpose.msra.mxu0 0.0
    %341 = vmatprep.subr.mxu0 0.0
    %342 = vmatpush1.xpose.msra.mxu0 %v309
    %343 = vmatprep.subr.mxu0 0.0
    %344 = vmatpush2.xpose.msra.mxu0 0.0
    %345 = vmatprep.subr.mxu0 0.0
    %346 = vmatpush2.xpose.msra.mxu0 0.0
    %347 = vmatprep.subr.mxu0 0.0
    %348 = vmatpush2.xpose.msra.mxu0 0.0
    %349 = vmatprep.subr.mxu0 0.0
    %350 = vmatpush2.xpose.msra.mxu0 0.0
    %351 = vmatprep.subr.mxu0 0.0
    %352 = vmatpush2.xpose.msra.mxu0 0.0
    %353 = vmatprep.subr.mxu0 0.0
    %354 = vmatpush2.xpose.msra.mxu0 0.0
    %355 = vmatprep.subr.mxu0 0.0
    %356 = vmatpush2.xpose.msra.mxu0 0.0
    %357 = vmatprep.subr.mxu0 0.0
    %358 = vmatpush2.xpose.msra.mxu0 0.0
    %359 = vmatprep.subr.mxu0 0.0
    %360 = vmatpush2.xpose.msra.mxu0 0.0
    %361 = vmatprep.subr.mxu0 0.0
    %362 = vmatpush2.xpose.msra.mxu0 0.0
    %363 = vmatprep.subr.mxu0 0.0
    %364 = vmatpush2.xpose.msra.mxu0 0.0
    %365 = vmatprep.subr.mxu0 0.0
    %366 = vmatpush2.xpose.msra.mxu0 0.0
    %367 = vmatprep.subr.mxu0 0.0
    %368 = vmatpush2.xpose.msra.mxu0 0.0
    %369 = vmatprep.subr.mxu0 0.0
    %370 = vmatpush2.xpose.msra.mxu0 0.0
    %371 = vmatprep.subr.mxu0 0.0
    %372 = vmatpush2.xpose.msra.mxu0 0.0
    %373 = vmatprep.subr.mxu0 0.0
    %374 = vmatpush2.xpose.msra.mxu0 0.0
    %375 = vmatprep.mubr.f32.mxu0 0.0
    %376 = vmatmul.mubr.f32.gmra.mxu0 %v307
    %v377 = vpop.f32.mrf.mxu0
    %v378 = vadd.f32 0.0, %v377
    %v379 = vpop.f32.mrf.mxu0
    %380 = vdwg.mxu0
    %v381 = vmul.f32 %v378, 0.35355338
    %v382 = vsel %vm140, %v381, -inf
    %383 = vmax.xlane.f32.xlu0 %v382
    %v384 = vpop.xlane.xlu0 %383
    %v385 = vsub.f32 %v381, %v384
    %v386 = vmul.f32 %v385, 1.442695
    %v387 = vpow.pop %v386
    %v388 = vsel %vm140, %v387, 0.0
    %389 = vadd.xlane.f32.xlu0 %v388
    %v390 = vpop.xlane.xlu0 %389
    %v391 = vrcp.pop %v390
    %v392 = vmul.f32 %v387, %v391
    %393 = vrot.lane.b32.xlu0 %v129, 56
    %v394 = vpop.permute.xlu0 %393
    %v397 = vsel %vm140, %v392, 0
    %399 = vmatprep.subr.mxu0 0.0
    %400 = vmatpush1.msra.mxu0 0.0
    %401 = vmatprep.subr.mxu0 0.0
    %402 = vmatpush1.msra.mxu0 0.0
    %403 = vmatprep.subr.mxu0 0.0
    %404 = vmatpush1.msra.mxu0 0.0
    %405 = vmatprep.subr.mxu0 0.0
    %406 = vmatpush1.msra.mxu0 0.0
    %407 = vmatprep.subr.mxu0 0.0
    %408 = vmatpush1.msra.mxu0 0.0
    %409 = vmatprep.subr.mxu0 0.0
    %410 = vmatpush1.msra.mxu0 0.0
    %411 = vmatprep.subr.mxu0 0.0
    %412 = vmatpush1.msra.mxu0 0.0
    %413 = vmatprep.subr.mxu0 0.0
    %414 = vmatpush1.msra.mxu0 0.0
    %415 = vmatprep.subr.mxu0 0.0
    %416 = vmatpush1.msra.mxu0 0.0
    %417 = vmatprep.subr.mxu0 0.0
    %418 = vmatpush1.msra.mxu0 0.0
    %419 = vmatprep.subr.mxu0 0.0
    %420 = vmatpush1.msra.mxu0 0.0
    %421 = vmatprep.subr.mxu0 0.0
    %422 = vmatpush1.msra.mxu0 0.0
    %423 = vmatprep.subr.mxu0 0.0
    %424 = vmatpush1.msra.mxu0 0.0
    %425 = vmatprep.subr.mxu0 0.0
    %426 = vmatpush1.msra.mxu0 0.0
    %427 = vmatprep.subr.mxu0 0.0
    %428 = vmatpush1.msra.mxu0 0.0
    %429 = vmatprep.subr.mxu0 0.0
    %430 = vmatpush1.msra.mxu0 %v394
    %431 = vmatprep.subr.mxu0 0.0
    %432 = vmatpush2.msra.mxu0 0.0
    %433 = vmatprep.subr.mxu0 0.0
    %434 = vmatpush2.msra.mxu0 0.0
    %435 = vmatprep.subr.mxu0 0.0
    %436 = vmatpush2.msra.mxu0 0.0
    %437 = vmatprep.subr.mxu0 0.0
    %438 = vmatpush2.msra.mxu0 0.0
    %439 = vmatprep.subr.mxu0 0.0
    %440 = vmatpush2.msra.mxu0 0.0
    %441 = vmatprep.subr.mxu0 0.0
    %442 = vmatpush2.msra.mxu0 0.0
    %443 = vmatprep.subr.mxu0 0.0
    %444 = vmatpush2.msra.mxu0 0.0
    %445 = vmatprep.subr.mxu0 0.0
    %446 = vmatpush2.msra.mxu0 0.0
    %447 = vmatprep.subr.mxu0 0.0
    %448 = vmatpush2.msra.mxu0 0.0
    %449 = vmatprep.subr.mxu0 0.0
    %450 = vmatpush2.msra.mxu0 0.0
    %451 = vmatprep.subr.mxu0 0.0
    %452 = vmatpush2.msra.mxu0 0.0
    %453 = vmatprep.subr.mxu0 0.0
    %454 = vmatpush2.msra.mxu0 0.0
    %455 = vmatprep.subr.mxu0 0.0
    %456 = vmatpush2.msra.mxu0 0.0
    %457 = vmatprep.subr.mxu0 0.0
    %458 = vmatpush2.msra.mxu0 0.0
    %459 = vmatprep.subr.mxu0 0.0
    %460 = vmatpush2.msra.mxu0 0.0
    %461 = vmatprep.subr.mxu0 0.0
    %462 = vmatpush2.msra.mxu0 0.0
    %463 = vmatprep.mubr.f32.mxu0 0.0
    %464 = vmatmul.mubr.f32.gmra.mxu0 %v397
    %v465 = vpop.f32.mrf.mxu0
    %v466 = vadd.f32 0.0, %v465
    %v467 = vpop.f32.mrf.mxu0
    %468 = vdwg.mxu0
    %469 = vrot.lane.b32.xlu0 %v129, 112
    %v470 = vpop.permute.xlu0 %469
    %471 = vrot.lane.b32.xlu0 %v129, 80
    %v472 = vpop.permute.xlu0 %471
    %v473 = vsel %vm140, %v470, 0
    %v475 = vsel %vm140, %v472, 0
    %477 = vmatprep.subr.mxu0 0.0
    %478 = vmatpush1.xpose.msra.mxu0 0.0
    %479 = vmatprep.subr.mxu0 0.0
    %480 = vmatpush1.xpose.msra.mxu0 0.0
    %481 = vmatprep.subr.mxu0 0.0
    %482 = vmatpush1.xpose.msra.mxu0 0.0
    %483 = vmatprep.subr.mxu0 0.0
    %484 = vmatpush1.xpose.msra.mxu0 0.0
    %485 = vmatprep.subr.mxu0 0.0
    %486 = vmatpush1.xpose.msra.mxu0 0.0
    %487 = vmatprep.subr.mxu0 0.0
    %488 = vmatpush1.xpose.msra.mxu0 0.0
    %489 = vmatprep.subr.mxu0 0.0
    %490 = vmatpush1.xpose.msra.mxu0 0.0
    %491 = vmatprep.subr.mxu0 0.0
    %492 = vmatpush1.xpose.msra.mxu0 0.0
    %493 = vmatprep.subr.mxu0 0.0
    %494 = vmatpush1.xpose.msra.mxu0 0.0
    %495 = vmatprep.subr.mxu0 0.0
    %496 = vmatpush1.xpose.msra.mxu0 0.0
    %497 = vmatprep.subr.mxu0 0.0
    %498 = vmatpush1.xpose.msra.mxu0 0.0
    %499 = vmatprep.subr.mxu0 0.0
    %500 = vmatpush1.xpose.msra.mxu0 0.0
    %501 = vmatprep.subr.mxu0 0.0
    %502 = vmatpush1.xpose.msra.mxu0 0.0
    %503 = vmatprep.subr.mxu0 0.0
    %504 = vmatpush1.xpose.msra.mxu0 0.0
    %505 = vmatprep.subr.mxu0 0.0
    %506 = vmatpush1.xpose.msra.mxu0 0.0
    %507 = vmatprep.subr.mxu0 0.0
    %508 = vmatpush1.xpose.msra.mxu0 %v475
    %509 = vmatprep.subr.mxu0 0.0
    %510 = vmatpush2.xpose.msra.mxu0 0.0
    %511 = vmatprep.subr.mxu0 0.0
    %512 = vmatpush2.xpose.msra.mxu0 0.0
    %513 = vmatprep.subr.mxu0 0.0
    %514 = vmatpush2.xpose.msra.mxu0 0.0
    %515 = vmatprep.subr.mxu0 0.0
    %516 = vmatpush2.xpose.msra.mxu0 0.0
    %517 = vmatprep.subr.mxu0 0.0
    %518 = vmatpush2.xpose.msra.mxu0 0.0
    %519 = vmatprep.subr.mxu0 0.0
    %520 = vmatpush2.xpose.msra.mxu0 0.0
    %521 = vmatprep.subr.mxu0 0.0
    %522 = vmatpush2.xpose.msra.mxu0 0.0
    %523 = vmatprep.subr.mxu0 0.0
    %524 = vmatpush2.xpose.msra.mxu0 0.0
    %525 = vmatprep.subr.mxu0 0.0
    %526 = vmatpush2.xpose.msra.mxu0 0.0
    %527 = vmatprep.subr.mxu0 0.0
    %528 = vmatpush2.xpose.msra.mxu0 0.0
    %529 = vmatprep.subr.mxu0 0.0
    %530 = vmatpush2.xpose.msra.mxu0 0.0
    %531 = vmatprep.subr.mxu0 0.0
    %532 = vmatpush2.xpose.msra.mxu0 0.0
    %533 = vmatprep.subr.mxu0 0.0
    %534 = vmatpush2.xpose.msra.mxu0 0.0
    %535 = vmatprep.subr.mxu0 0.0
    %536 = vmatpush2.xpose.msra.mxu0 0.0
    %537 = vmatprep.subr.mxu0 0.0
    %538 = vmatpush2.xpose.msra.mxu0 0.0
    %539 = vmatprep.subr.mxu0 0.0
    %540 = vmatpush2.xpose.msra.mxu0 0.0
    %541 = vmatprep.mubr.f32.mxu0 0.0
    %542 = vmatmul.mubr.f32.gmra.mxu0 %v473
    %v543 = vpop.f32.mrf.mxu0
    %v544 = vadd.f32 0.0, %v543
    %v545 = vpop.f32.mrf.mxu0
    %546 = vdwg.mxu0
    %v547 = vmul.f32 %v544, 0.35355338
    %v548 = vsel %vm140, %v547, -inf
    %549 = vmax.xlane.f32.xlu0 %v548
    %v550 = vpop.xlane.xlu0 %549
    %v551 = vsub.f32 %v547, %v550
    %v552 = vmul.f32 %v551, 1.442695
    %v553 = vpow.pop %v552
    %v554 = vsel %vm140, %v553, 0.0
    %555 = vadd.xlane.f32.xlu0 %v554
    %v556 = vpop.xlane.xlu0 %555
    %v557 = vrcp.pop %v556
    %v558 = vmul.f32 %v553, %v557
    %559 = vrot.lane.b32.xlu0 %v129, 48
    %v560 = vpop.permute.xlu0 %559
    %v563 = vsel %vm140, %v558, 0
    %565 = vmatprep.subr.mxu0 0.0
    %566 = vmatpush1.msra.mxu0 0.0
    %567 = vmatprep.subr.mxu0 0.0
    %568 = vmatpush1.msra.mxu0 0.0
    %569 = vmatprep.subr.mxu0 0.0
    %570 = vmatpush1.msra.mxu0 0.0
    %571 = vmatprep.subr.mxu0 0.0
    %572 = vmatpush1.msra.mxu0 0.0
    %573 = vmatprep.subr.mxu0 0.0
    %574 = vmatpush1.msra.mxu0 0.0
    %575 = vmatprep.subr.mxu0 0.0
    %576 = vmatpush1.msra.mxu0 0.0
    %577 = vmatprep.subr.mxu0 0.0
    %578 = vmatpush1.msra.mxu0 0.0
    %579 = vmatprep.subr.mxu0 0.0
    %580 = vmatpush1.msra.mxu0 0.0
    %581 = vmatprep.subr.mxu0 0.0
    %582 = vmatpush1.msra.mxu0 0.0
    %583 = vmatprep.subr.mxu0 0.0
    %584 = vmatpush1.msra.mxu0 0.0
    %585 = vmatprep.subr.mxu0 0.0
    %586 = vmatpush1.msra.mxu0 0.0
    %587 = vmatprep.subr.mxu0 0.0
    %588 = vmatpush1.msra.mxu0 0.0
    %589 = vmatprep.subr.mxu0 0.0
    %590 = vmatpush1.msra.mxu0 0.0
    %591 = vmatprep.subr.mxu0 0.0
    %592 = vmatpush1.msra.mxu0 0.0
    %593 = vmatprep.subr.mxu0 0.0
    %594 = vmatpush1.msra.mxu0 0.0
    %595 = vmatprep.subr.mxu0 0.0
    %596 = vmatpush1.msra.mxu0 %v560
    %597 = vmatprep.subr.mxu0 0.0
    %598 = vmatpush2.msra.mxu0 0.0
    %599 = vmatprep.subr.mxu0 0.0
    %600 = vmatpush2.msra.mxu0 0.0
    %601 = vmatprep.subr.mxu0 0.0
    %602 = vmatpush2.msra.mxu0 0.0
    %603 = vmatprep.subr.mxu0 0.0
    %604 = vmatpush2.msra.mxu0 0.0
    %605 = vmatprep.subr.mxu0 0.0
    %606 = vmatpush2.msra.mxu0 0.0
    %607 = vmatprep.subr.mxu0 0.0
    %608 = vmatpush2.msra.mxu0 0.0
    %609 = vmatprep.subr.mxu0 0.0
    %610 = vmatpush2.msra.mxu0 0.0
    %611 = vmatprep.subr.mxu0 0.0
    %612 = vmatpush2.msra.mxu0 0.0
    %613 = vmatprep.subr.mxu0 0.0
    %614 = vmatpush2.msra.mxu0 0.0
    %615 = vmatprep.subr.mxu0 0.0
    %616 = vmatpush2.msra.mxu0 0.0
    %617 = vmatprep.subr.mxu0 0.0
    %618 = vmatpush2.msra.mxu0 0.0
    %619 = vmatprep.subr.mxu0 0.0
    %620 = vmatpush2.msra.mxu0 0.0
    %621 = vmatprep.subr.mxu0 0.0
    %622 = vmatpush2.msra.mxu0 0.0
    %623 = vmatprep.subr.mxu0 0.0
    %624 = vmatpush2.msra.mxu0 0.0
    %625 = vmatprep.subr.mxu0 0.0
    %626 = vmatpush2.msra.mxu0 0.0
    %627 = vmatprep.subr.mxu0 0.0
    %628 = vmatpush2.msra.mxu0 0.0
    %629 = vmatprep.mubr.f32.mxu0 0.0
    %630 = vmatmul.mubr.f32.gmra.mxu0 %v563
    %v631 = vpop.f32.mrf.mxu0
    %v632 = vadd.f32 0.0, %v631
    %v633 = vpop.f32.mrf.mxu0
    %634 = vdwg.mxu0
    %635 = vrot.lane.b32.xlu0 %v129, 104
    %v636 = vpop.permute.xlu0 %635
    %637 = vrot.lane.b32.xlu0 %v129, 72
    %v638 = vpop.permute.xlu0 %637
    %v639 = vsel %vm140, %v636, 0
    %v641 = vsel %vm140, %v638, 0
    %643 = vmatprep.subr.mxu0 0.0
    %644 = vmatpush1.xpose.msra.mxu0 0.0
    %645 = vmatprep.subr.mxu0 0.0
    %646 = vmatpush1.xpose.msra.mxu0 0.0
    %647 = vmatprep.subr.mxu0 0.0
    %648 = vmatpush1.xpose.msra.mxu0 0.0
    %649 = vmatprep.subr.mxu0 0.0
    %650 = vmatpush1.xpose.msra.mxu0 0.0
    %651 = vmatprep.subr.mxu0 0.0
    %652 = vmatpush1.xpose.msra.mxu0 0.0
    %653 = vmatprep.subr.mxu0 0.0
    %654 = vmatpush1.xpose.msra.mxu0 0.0
    %655 = vmatprep.subr.mxu0 0.0
    %656 = vmatpush1.xpose.msra.mxu0 0.0
    %657 = vmatprep.subr.mxu0 0.0
    %658 = vmatpush1.xpose.msra.mxu0 0.0
    %659 = vmatprep.subr.mxu0 0.0
    %660 = vmatpush1.xpose.msra.mxu0 0.0
    %661 = vmatprep.subr.mxu0 0.0
    %662 = vmatpush1.xpose.msra.mxu0 0.0
    %663 = vmatprep.subr.mxu0 0.0
    %664 = vmatpush1.xpose.msra.mxu0 0.0
    %665 = vmatprep.subr.mxu0 0.0
    %666 = vmatpush1.xpose.msra.mxu0 0.0
    %667 = vmatprep.subr.mxu0 0.0
    %668 = vmatpush1.xpose.msra.mxu0 0.0
    %669 = vmatprep.subr.mxu0 0.0
    %670 = vmatpush1.xpose.msra.mxu0 0.0
    %671 = vmatprep.subr.mxu0 0.0
    %672 = vmatpush1.xpose.msra.mxu0 0.0
    %673 = vmatprep.subr.mxu0 0.0
    %674 = vmatpush1.xpose.msra.mxu0 %v641
    %675 = vmatprep.subr.mxu0 0.0
    %676 = vmatpush2.xpose.msra.mxu0 0.0
    %677 = vmatprep.subr.mxu0 0.0
    %678 = vmatpush2.xpose.msra.mxu0 0.0
    %679 = vmatprep.subr.mxu0 0.0
    %680 = vmatpush2.xpose.msra.mxu0 0.0
    %681 = vmatprep.subr.mxu0 0.0
    %682 = vmatpush2.xpose.msra.mxu0 0.0
    %683 = vmatprep.subr.mxu0 0.0
    %684 = vmatpush2.xpose.msra.mxu0 0.0
    %685 = vmatprep.subr.mxu0 0.0
    %686 = vmatpush2.xpose.msra.mxu0 0.0
    %687 = vmatprep.subr.mxu0 0.0
    %688 = vmatpush2.xpose.msra.mxu0 0.0
    %689 = vmatprep.subr.mxu0 0.0
    %690 = vmatpush2.xpose.msra.mxu0 0.0
    %691 = vmatprep.subr.mxu0 0.0
    %692 = vmatpush2.xpose.msra.mxu0 0.0
    %693 = vmatprep.subr.mxu0 0.0
    %694 = vmatpush2.xpose.msra.mxu0 0.0
    %695 = vmatprep.subr.mxu0 0.0
    %696 = vmatpush2.xpose.msra.mxu0 0.0
    %697 = vmatprep.subr.mxu0 0.0
    %698 = vmatpush2.xpose.msra.mxu0 0.0
    %699 = vmatprep.subr.mxu0 0.0
    %700 = vmatpush2.xpose.msra.mxu0 0.0
    %701 = vmatprep.subr.mxu0 0.0
    %702 = vmatpush2.xpose.msra.mxu0 0.0
    %703 = vmatprep.subr.mxu0 0.0
    %704 = vmatpush2.xpose.msra.mxu0 0.0
    %705 = vmatprep.subr.mxu0 0.0
    %706 = vmatpush2.xpose.msra.mxu0 0.0
    %707 = vmatprep.mubr.f32.mxu0 0.0
    %708 = vmatmul.mubr.f32.gmra.mxu0 %v639
    %v709 = vpop.f32.mrf.mxu0
    %v710 = vadd.f32 0.0, %v709
    %v711 = vpop.f32.mrf.mxu0
    %712 = vdwg.mxu0
    %v713 = vmul.f32 %v710, 0.35355338
    %v714 = vsel %vm140, %v713, -inf
    %715 = vmax.xlane.f32.xlu0 %v714
    %v716 = vpop.xlane.xlu0 %715
    %v717 = vsub.f32 %v713, %v716
    %v718 = vmul.f32 %v717, 1.442695
    %v719 = vpow.pop %v718
    %v720 = vsel %vm140, %v719, 0.0
    %721 = vadd.xlane.f32.xlu0 %v720
    %v722 = vpop.xlane.xlu0 %721
    %v723 = vrcp.pop %v722
    %v724 = vmul.f32 %v719, %v723
    %725 = vrot.lane.b32.xlu0 %v129, 40
    %v726 = vpop.permute.xlu0 %725
    %v729 = vsel %vm140, %v724, 0
    %731 = vmatprep.subr.mxu0 0.0
    %732 = vmatpush1.msra.mxu0 0.0
    %733 = vmatprep.subr.mxu0 0.0
    %734 = vmatpush1.msra.mxu0 0.0
    %735 = vmatprep.subr.mxu0 0.0
    %736 = vmatpush1.msra.mxu0 0.0
    %737 = vmatprep.subr.mxu0 0.0
    %738 = vmatpush1.msra.mxu0 0.0
    %739 = vmatprep.subr.mxu0 0.0
    %740 = vmatpush1.msra.mxu0 0.0
    %741 = vmatprep.subr.mxu0 0.0
    %742 = vmatpush1.msra.mxu0 0.0
    %743 = vmatprep.subr.mxu0 0.0
    %744 = vmatpush1.msra.mxu0 0.0
    %745 = vmatprep.subr.mxu0 0.0
    %746 = vmatpush1.msra.mxu0 0.0
    %747 = vmatprep.subr.mxu0 0.0
    %748 = vmatpush1.msra.mxu0 0.0
    %749 = vmatprep.subr.mxu0 0.0
    %750 = vmatpush1.msra.mxu0 0.0
    %751 = vmatprep.subr.mxu0 0.0
    %752 = vmatpush1.msra.mxu0 0.0
    %753 = vmatprep.subr.mxu0 0.0
    %754 = vmatpush1.msra.mxu0 0.0
    %755 = vmatprep.subr.mxu0 0.0
    %756 = vmatpush1.msra.mxu0 0.0
    %757 = vmatprep.subr.mxu0 0.0
    %758 = vmatpush1.msra.mxu0 0.0
    %759 = vmatprep.subr.mxu0 0.0
    %760 = vmatpush1.msra.mxu0 0.0
    %761 = vmatprep.subr.mxu0 0.0
    %762 = vmatpush1.msra.mxu0 %v726
    %763 = vmatprep.subr.mxu0 0.0
    %764 = vmatpush2.msra.mxu0 0.0
    %765 = vmatprep.subr.mxu0 0.0
    %766 = vmatpush2.msra.mxu0 0.0
    %767 = vmatprep.subr.mxu0 0.0
    %768 = vmatpush2.msra.mxu0 0.0
    %769 = vmatprep.subr.mxu0 0.0
    %770 = vmatpush2.msra.mxu0 0.0
    %771 = vmatprep.subr.mxu0 0.0
    %772 = vmatpush2.msra.mxu0 0.0
    %773 = vmatprep.subr.mxu0 0.0
    %774 = vmatpush2.msra.mxu0 0.0
    %775 = vmatprep.subr.mxu0 0.0
    %776 = vmatpush2.msra.mxu0 0.0
    %777 = vmatprep.subr.mxu0 0.0
    %778 = vmatpush2.msra.mxu0 0.0
    %779 = vmatprep.subr.mxu0 0.0
    %780 = vmatpush2.msra.mxu0 0.0
    %781 = vmatprep.subr.mxu0 0.0
    %782 = vmatpush2.msra.mxu0 0.0
    %783 = vmatprep.subr.mxu0 0.0
    %784 = vmatpush2.msra.mxu0 0.0
    %785 = vmatprep.subr.mxu0 0.0
    %786 = vmatpush2.msra.mxu0 0.0
    %787 = vmatprep.subr.mxu0 0.0
    %788 = vmatpush2.msra.mxu0 0.0
    %789 = vmatprep.subr.mxu0 0.0
    %790 = vmatpush2.msra.mxu0 0.0
    %791 = vmatprep.subr.mxu0 0.0
    %792 = vmatpush2.msra.mxu0 0.0
    %793 = vmatprep.subr.mxu0 0.0
    %794 = vmatpush2.msra.mxu0 0.0
    %795 = vmatprep.mubr.f32.mxu0 0.0
    %796 = vmatmul.mubr.f32.gmra.mxu0 %v729
    %v797 = vpop.f32.mrf.mxu0
    %v798 = vadd.f32 0.0, %v797
    %v799 = vpop.f32.mrf.mxu0
    %800 = vdwg.mxu0
    %802 = vrot.lane.b32.xlu0 %v466, 8
    %v803 = vpop.permute.xlu0 %802
    %806 = vrot.lane.b32.xlu0 %v632, 16
    %v807 = vpop.permute.xlu0 %806
    %810 = vrot.lane.b32.xlu0 %v798, 24
    %v811 = vpop.permute.xlu0 %810
    %v813 = vsel %vm140, %v300, %v803
    %vm814 = vcmask 130048
    %v815 = vsel %vm814, %v813, %v807
    %vm816 = vcmask 195584
    %v817 = vsel %vm816, %v815, %v811
    %819 = vrot.lane.b32.xlu0 %v134, 96
    %v820 = vpop.permute.xlu0 %819
    %v821 = vsel %vm140, %v134, 0
    %v823 = vsel %vm140, %v820, 0
    %825 = vmatprep.subr.mxu0 0.0
    %826 = vmatpush1.xpose.msra.mxu0 0.0
    %827 = vmatprep.subr.mxu0 0.0
    %828 = vmatpush1.xpose.msra.mxu0 0.0
    %829 = vmatprep.subr.mxu0 0.0
    %830 = vmatpush1.xpose.msra.mxu0 0.0
    %831 = vmatprep.subr.mxu0 0.0
    %832 = vmatpush1.xpose.msra.mxu0 0.0
    %833 = vmatprep.subr.mxu0 0.0
    %834 = vmatpush1.xpose.msra.mxu0 0.0
    %835 = vmatprep.subr.mxu0 0.0
    %836 = vmatpush1.xpose.msra.mxu0 0.0
    %837 = vmatprep.subr.mxu0 0.0
    %838 = vmatpush1.xpose.msra.mxu0 0.0
    %839 = vmatprep.subr.mxu0 0.0
    %840 = vmatpush1.xpose.msra.mxu0 0.0
    %841 = vmatprep.subr.mxu0 0.0
    %842 = vmatpush1.xpose.msra.mxu0 0.0
    %843 = vmatprep.subr.mxu0 0.0
    %844 = vmatpush1.xpose.msra.mxu0 0.0
    %845 = vmatprep.subr.mxu0 0.0
    %846 = vmatpush1.xpose.msra.mxu0 0.0
    %847 = vmatprep.subr.mxu0 0.0
    %848 = vmatpush1.xpose.msra.mxu0 0.0
    %849 = vmatprep.subr.mxu0 0.0
    %850 = vmatpush1.xpose.msra.mxu0 0.0
    %851 = vmatprep.subr.mxu0 0.0
    %852 = vmatpush1.xpose.msra.mxu0 0.0
    %853 = vmatprep.subr.mxu0 0.0
    %854 = vmatpush1.xpose.msra.mxu0 0.0
    %855 = vmatprep.subr.mxu0 0.0
    %856 = vmatpush1.xpose.msra.mxu0 %v823
    %857 = vmatprep.subr.mxu0 0.0
    %858 = vmatpush2.xpose.msra.mxu0 0.0
    %859 = vmatprep.subr.mxu0 0.0
    %860 = vmatpush2.xpose.msra.mxu0 0.0
    %861 = vmatprep.subr.mxu0 0.0
    %862 = vmatpush2.xpose.msra.mxu0 0.0
    %863 = vmatprep.subr.mxu0 0.0
    %864 = vmatpush2.xpose.msra.mxu0 0.0
    %865 = vmatprep.subr.mxu0 0.0
    %866 = vmatpush2.xpose.msra.mxu0 0.0
    %867 = vmatprep.subr.mxu0 0.0
    %868 = vmatpush2.xpose.msra.mxu0 0.0
    %869 = vmatprep.subr.mxu0 0.0
    %870 = vmatpush2.xpose.msra.mxu0 0.0
    %871 = vmatprep.subr.mxu0 0.0
    %872 = vmatpush2.xpose.msra.mxu0 0.0
    %873 = vmatprep.subr.mxu0 0.0
    %874 = vmatpush2.xpose.msra.mxu0 0.0
    %875 = vmatprep.subr.mxu0 0.0
    %876 = vmatpush2.xpose.msra.mxu0 0.0
    %877 = vmatprep.subr.mxu0 0.0
    %878 = vmatpush2.xpose.msra.mxu0 0.0
    %879 = vmatprep.subr.mxu0 0.0
    %880 = vmatpush2.xpose.msra.mxu0 0.0
    %881 = vmatprep.subr.mxu0 0.0
    %882 = vmatpush2.xpose.msra.mxu0 0.0
    %883 = vmatprep.subr.mxu0 0.0
    %884 = vmatpush2.xpose.msra.mxu0 0.0
    %885 = vmatprep.subr.mxu0 0.0
    %886 = vmatpush2.xpose.msra.mxu0 0.0
    %887 = vmatprep.subr.mxu0 0.0
    %888 = vmatpush2.xpose.msra.mxu0 0.0
    %889 = vmatprep.mubr.f32.mxu0 0.0
    %890 = vmatmul.mubr.f32.gmra.mxu0 %v821
    %v891 = vpop.f32.mrf.mxu0
    %v892 = vadd.f32 0.0, %v891
    %v893 = vpop.f32.mrf.mxu0
    %894 = vdwg.mxu0
    %v895 = vmul.f32 %v892, 0.35355338
    %v896 = vsel %vm140, %v895, -inf
    %897 = vmax.xlane.f32.xlu0 %v896
    %v898 = vpop.xlane.xlu0 %897
    %v899 = vsub.f32 %v895, %v898
    %v900 = vmul.f32 %v899, 1.442695
    %v901 = vpow.pop %v900
    %v902 = vsel %vm140, %v901, 0.0
    %903 = vadd.xlane.f32.xlu0 %v902
    %v904 = vpop.xlane.xlu0 %903
    %v905 = vrcp.pop %v904
    %v906 = vmul.f32 %v901, %v905
    %907 = vrot.lane.b32.xlu0 %v134, 64
    %v908 = vpop.permute.xlu0 %907
    %v911 = vsel %vm140, %v906, 0
    %913 = vmatprep.subr.mxu0 0.0
    %914 = vmatpush1.msra.mxu0 0.0
    %915 = vmatprep.subr.mxu0 0.0
    %916 = vmatpush1.msra.mxu0 0.0
    %917 = vmatprep.subr.mxu0 0.0
    %918 = vmatpush1.msra.mxu0 0.0
    %919 = vmatprep.subr.mxu0 0.0
    %920 = vmatpush1.msra.mxu0 0.0
    %921 = vmatprep.subr.mxu0 0.0
    %922 = vmatpush1.msra.mxu0 0.0
    %923 = vmatprep.subr.mxu0 0.0
    %924 = vmatpush1.msra.mxu0 0.0
    %925 = vmatprep.subr.mxu0 0.0
    %926 = vmatpush1.msra.mxu0 0.0
    %927 = vmatprep.subr.mxu0 0.0
    %928 = vmatpush1.msra.mxu0 0.0
    %929 = vmatprep.subr.mxu0 0.0
    %930 = vmatpush1.msra.mxu0 0.0
    %931 = vmatprep.subr.mxu0 0.0
    %932 = vmatpush1.msra.mxu0 0.0
    %933 = vmatprep.subr.mxu0 0.0
    %934 = vmatpush1.msra.mxu0 0.0
    %935 = vmatprep.subr.mxu0 0.0
    %936 = vmatpush1.msra.mxu0 0.0
    %937 = vmatprep.subr.mxu0 0.0
    %938 = vmatpush1.msra.mxu0 0.0
    %939 = vmatprep.subr.mxu0 0.0
    %940 = vmatpush1.msra.mxu0 0.0
    %941 = vmatprep.subr.mxu0 0.0
    %942 = vmatpush1.msra.mxu0 0.0
    %943 = vmatprep.subr.mxu0 0.0
    %944 = vmatpush1.msra.mxu0 %v908
    %945 = vmatprep.subr.mxu0 0.0
    %946 = vmatpush2.msra.mxu0 0.0
    %947 = vmatprep.subr.mxu0 0.0
    %948 = vmatpush2.msra.mxu0 0.0
    %949 = vmatprep.subr.mxu0 0.0
    %950 = vmatpush2.msra.mxu0 0.0
    %951 = vmatprep.subr.mxu0 0.0
    %952 = vmatpush2.msra.mxu0 0.0
    %953 = vmatprep.subr.mxu0 0.0
    %954 = vmatpush2.msra.mxu0 0.0
    %955 = vmatprep.subr.mxu0 0.0
    %956 = vmatpush2.msra.mxu0 0.0
    %957 = vmatprep.subr.mxu0 0.0
    %958 = vmatpush2.msra.mxu0 0.0
    %959 = vmatprep.subr.mxu0 0.0
    %960 = vmatpush2.msra.mxu0 0.0
    %961 = vmatprep.subr.mxu0 0.0
    %962 = vmatpush2.msra.mxu0 0.0
    %963 = vmatprep.subr.mxu0 0.0
    %964 = vmatpush2.msra.mxu0 0.0
    %965 = vmatprep.subr.mxu0 0.0
    %966 = vmatpush2.msra.mxu0 0.0
    %967 = vmatprep.subr.mxu0 0.0
    %968 = vmatpush2.msra.mxu0 0.0
    %969 = vmatprep.subr.mxu0 0.0
    %970 = vmatpush2.msra.mxu0 0.0
    %971 = vmatprep.subr.mxu0 0.0
    %972 = vmatpush2.msra.mxu0 0.0
    %973 = vmatprep.subr.mxu0 0.0
    %974 = vmatpush2.msra.mxu0 0.0
    %975 = vmatprep.subr.mxu0 0.0
    %976 = vmatpush2.msra.mxu0 0.0
    %977 = vmatprep.mubr.f32.mxu0 0.0
    %978 = vmatmul.mubr.f32.gmra.mxu0 %v911
    %v979 = vpop.f32.mrf.mxu0
    %v980 = vadd.f32 0.0, %v979
    %v981 = vpop.f32.mrf.mxu0
    %982 = vdwg.mxu0
    %983 = vrot.lane.b32.xlu0 %v134, 120
    %v984 = vpop.permute.xlu0 %983
    %985 = vrot.lane.b32.xlu0 %v134, 88
    %v986 = vpop.permute.xlu0 %985
    %v987 = vsel %vm140, %v984, 0
    %v989 = vsel %vm140, %v986, 0
    %991 = vmatprep.subr.mxu0 0.0
    %992 = vmatpush1.xpose.msra.mxu0 0.0
    %993 = vmatprep.subr.mxu0 0.0
    %994 = vmatpush1.xpose.msra.mxu0 0.0
    %995 = vmatprep.subr.mxu0 0.0
    %996 = vmatpush1.xpose.msra.mxu0 0.0
    %997 = vmatprep.subr.mxu0 0.0
    %998 = vmatpush1.xpose.msra.mxu0 0.0
    %999 = vmatprep.subr.mxu0 0.0
    %1000 = vmatpush1.xpose.msra.mxu0 0.0
    %1001 = vmatprep.subr.mxu0 0.0
    %1002 = vmatpush1.xpose.msra.mxu0 0.0
    %1003 = vmatprep.subr.mxu0 0.0
    %1004 = vmatpush1.xpose.msra.mxu0 0.0
    %1005 = vmatprep.subr.mxu0 0.0
    %1006 = vmatpush1.xpose.msra.mxu0 0.0
    %1007 = vmatprep.subr.mxu0 0.0
    %1008 = vmatpush1.xpose.msra.mxu0 0.0
    %1009 = vmatprep.subr.mxu0 0.0
    %1010 = vmatpush1.xpose.msra.mxu0 0.0
    %1011 = vmatprep.subr.mxu0 0.0
    %1012 = vmatpush1.xpose.msra.mxu0 0.0
    %1013 = vmatprep.subr.mxu0 0.0
    %1014 = vmatpush1.xpose.msra.mxu0 0.0
    %1015 = vmatprep.subr.mxu0 0.0
    %1016 = vmatpush1.xpose.msra.mxu0 0.0
    %1017 = vmatprep.subr.mxu0 0.0
    %1018 = vmatpush1.xpose.msra.mxu0 0.0
    %1019 = vmatprep.subr.mxu0 0.0
    %1020 = vmatpush1.xpose.msra.mxu0 0.0
    %1021 = vmatprep.subr.mxu0 0.0
    %1022 = vmatpush1.xpose.msra.mxu0 %v989
    %1023 = vmatprep.subr.mxu0 0.0
    %1024 = vmatpush2.xpose.msra.mxu0 0.0
    %1025 = vmatprep.subr.mxu0 0.0
    %1026 = vmatpush2.xpose.msra.mxu0 0.0
    %1027 = vmatprep.subr.mxu0 0.0
    %1028 = vmatpush2.xpose.msra.mxu0 0.0
    %1029 = vmatprep.subr.mxu0 0.0
    %1030 = vmatpush2.xpose.msra.mxu0 0.0
    %1031 = vmatprep.subr.mxu0 0.0
    %1032 = vmatpush2.xpose.msra.mxu0 0.0
    %1033 = vmatprep.subr.mxu0 0.0
    %1034 = vmatpush2.xpose.msra.mxu0 0.0
    %1035 = vmatprep.subr.mxu0 0.0
    %1036 = vmatpush2.xpose.msra.mxu0 0.0
    %1037 = vmatprep.subr.mxu0 0.0
    %1038 = vmatpush2.xpose.msra.mxu0 0.0
    %1039 = vmatprep.subr.mxu0 0.0
    %1040 = vmatpush2.xpose.msra.mxu0 0.0
    %1041 = vmatprep.subr.mxu0 0.0
    %1042 = vmatpush2.xpose.msra.mxu0 0.0
    %1043 = vmatprep.subr.mxu0 0.0
    %1044 = vmatpush2.xpose.msra.mxu0 0.0
    %1045 = vmatprep.subr.mxu0 0.0
    %1046 = vmatpush2.xpose.msra.mxu0 0.0
    %1047 = vmatprep.subr.mxu0 0.0
    %1048 = vmatpush2.xpose.msra.mxu0 0.0
    %1049 = vmatprep.subr.mxu0 0.0
    %1050 = vmatpush2.xpose.msra.mxu0 0.0
    %1051 = vmatprep.subr.mxu0 0.0
    %1052 = vmatpush2.xpose.msra.mxu0 0.0
    %1053 = vmatprep.subr.mxu0 0.0
    %1054 = vmatpush2.xpose.msra.mxu0 0.0
    %1055 = vmatprep.mubr.f32.mxu0 0.0
    %1056 = vmatmul.mubr.f32.gmra.mxu0 %v987
    %v1057 = vpop.f32.mrf.mxu0
    %v1058 = vadd.f32 0.0, %v1057
    %v1059 = vpop.f32.mrf.mxu0
    %1060 = vdwg.mxu0
    %v1061 = vmul.f32 %v1058, 0.35355338
    %v1062 = vsel %vm140, %v1061, -inf
    %1063 = vmax.xlane.f32.xlu0 %v1062
    %v1064 = vpop.xlane.xlu0 %1063
    %v1065 = vsub.f32 %v1061, %v1064
    %v1066 = vmul.f32 %v1065, 1.442695
    %v1067 = vpow.pop %v1066
    %v1068 = vsel %vm140, %v1067, 0.0
    %1069 = vadd.xlane.f32.xlu0 %v1068
    %v1070 = vpop.xlane.xlu0 %1069
    %v1071 = vrcp.pop %v1070
    %v1072 = vmul.f32 %v1067, %v1071
    %1073 = vrot.lane.b32.xlu0 %v134, 56
    %v1074 = vpop.permute.xlu0 %1073
    %v1077 = vsel %vm140, %v1072, 0
    %1079 = vmatprep.subr.mxu0 0.0
    %1080 = vmatpush1.msra.mxu0 0.0
    %1081 = vmatprep.subr.mxu0 0.0
    %1082 = vmatpush1.msra.mxu0 0.0
    %1083 = vmatprep.subr.mxu0 0.0
    %1084 = vmatpush1.msra.mxu0 0.0
    %1085 = vmatprep.subr.mxu0 0.0
    %1086 = vmatpush1.msra.mxu0 0.0
    %1087 = vmatprep.subr.mxu0 0.0
    %1088 = vmatpush1.msra.mxu0 0.0
    %1089 = vmatprep.subr.mxu0 0.0
    %1090 = vmatpush1.msra.mxu0 0.0
    %1091 = vmatprep.subr.mxu0 0.0
    %1092 = vmatpush1.msra.mxu0 0.0
    %1093 = vmatprep.subr.mxu0 0.0
    %1094 = vmatpush1.msra.mxu0 0.0
    %1095 = vmatprep.subr.mxu0 0.0
    %1096 = vmatpush1.msra.mxu0 0.0
    %1097 = vmatprep.subr.mxu0 0.0
    %1098 = vmatpush1.msra.mxu0 0.0
    %1099 = vmatprep.subr.mxu0 0.0
    %1100 = vmatpush1.msra.mxu0 0.0
    %1101 = vmatprep.subr.mxu0 0.0
    %1102 = vmatpush1.msra.mxu0 0.0
    %1103 = vmatprep.subr.mxu0 0.0
    %1104 = vmatpush1.msra.mxu0 0.0
    %1105 = vmatprep.subr.mxu0 0.0
    %1106 = vmatpush1.msra.mxu0 0.0
    %1107 = vmatprep.subr.mxu0 0.0
    %1108 = vmatpush1.msra.mxu0 0.0
    %1109 = vmatprep.subr.mxu0 0.0
    %1110 = vmatpush1.msra.mxu0 %v1074
    %1111 = vmatprep.subr.mxu0 0.0
    %1112 = vmatpush2.msra.mxu0 0.0
    %1113 = vmatprep.subr.mxu0 0.0
    %1114 = vmatpush2.msra.mxu0 0.0
    %1115 = vmatprep.subr.mxu0 0.0
    %1116 = vmatpush2.msra.mxu0 0.0
    %1117 = vmatprep.subr.mxu0 0.0
    %1118 = vmatpush2.msra.mxu0 0.0
    %1119 = vmatprep.subr.mxu0 0.0
    %1120 = vmatpush2.msra.mxu0 0.0
    %1121 = vmatprep.subr.mxu0 0.0
    %1122 = vmatpush2.msra.mxu0 0.0
    %1123 = vmatprep.subr.mxu0 0.0
    %1124 = vmatpush2.msra.mxu0 0.0
    %1125 = vmatprep.subr.mxu0 0.0
    %1126 = vmatpush2.msra.mxu0 0.0
    %1127 = vmatprep.subr.mxu0 0.0
    %1128 = vmatpush2.msra.mxu0 0.0
    %1129 = vmatprep.subr.mxu0 0.0
    %1130 = vmatpush2.msra.mxu0 0.0
    %1131 = vmatprep.subr.mxu0 0.0
    %1132 = vmatpush2.msra.mxu0 0.0
    %1133 = vmatprep.subr.mxu0 0.0
    %1134 = vmatpush2.msra.mxu0 0.0
    %1135 = vmatprep.subr.mxu0 0.0
    %1136 = vmatpush2.msra.mxu0 0.0
    %1137 = vmatprep.subr.mxu0 0.0
    %1138 = vmatpush2.msra.mxu0 0.0
    %1139 = vmatprep.subr.mxu0 0.0
    %1140 = vmatpush2.msra.mxu0 0.0
    %1141 = vmatprep.subr.mxu0 0.0
    %1142 = vmatpush2.msra.mxu0 0.0
    %1143 = vmatprep.mubr.f32.mxu0 0.0
    %1144 = vmatmul.mubr.f32.gmra.mxu0 %v1077
    %v1145 = vpop.f32.mrf.mxu0
    %v1146 = vadd.f32 0.0, %v1145
    %v1147 = vpop.f32.mrf.mxu0
    %1148 = vdwg.mxu0
    %1149 = vrot.lane.b32.xlu0 %v134, 112
    %v1150 = vpop.permute.xlu0 %1149
    %1151 = vrot.lane.b32.xlu0 %v134, 80
    %v1152 = vpop.permute.xlu0 %1151
    %v1153 = vsel %vm140, %v1150, 0
    %v1155 = vsel %vm140, %v1152, 0
    %1157 = vmatprep.subr.mxu0 0.0
    %1158 = vmatpush1.xpose.msra.mxu0 0.0
    %1159 = vmatprep.subr.mxu0 0.0
    %1160 = vmatpush1.xpose.msra.mxu0 0.0
    %1161 = vmatprep.subr.mxu0 0.0
    %1162 = vmatpush1.xpose.msra.mxu0 0.0
    %1163 = vmatprep.subr.mxu0 0.0
    %1164 = vmatpush1.xpose.msra.mxu0 0.0
    %1165 = vmatprep.subr.mxu0 0.0
    %1166 = vmatpush1.xpose.msra.mxu0 0.0
    %1167 = vmatprep.subr.mxu0 0.0
    %1168 = vmatpush1.xpose.msra.mxu0 0.0
    %1169 = vmatprep.subr.mxu0 0.0
    %1170 = vmatpush1.xpose.msra.mxu0 0.0
    %1171 = vmatprep.subr.mxu0 0.0
    %1172 = vmatpush1.xpose.msra.mxu0 0.0
    %1173 = vmatprep.subr.mxu0 0.0
    %1174 = vmatpush1.xpose.msra.mxu0 0.0
    %1175 = vmatprep.subr.mxu0 0.0
    %1176 = vmatpush1.xpose.msra.mxu0 0.0
    %1177 = vmatprep.subr.mxu0 0.0
    %1178 = vmatpush1.xpose.msra.mxu0 0.0
    %1179 = vmatprep.subr.mxu0 0.0
    %1180 = vmatpush1.xpose.msra.mxu0 0.0
    %1181 = vmatprep.subr.mxu0 0.0
    %1182 = vmatpush1.xpose.msra.mxu0 0.0
    %1183 = vmatprep.subr.mxu0 0.0
    %1184 = vmatpush1.xpose.msra.mxu0 0.0
    %1185 = vmatprep.subr.mxu0 0.0
    %1186 = vmatpush1.xpose.msra.mxu0 0.0
    %1187 = vmatprep.subr.mxu0 0.0
    %1188 = vmatpush1.xpose.msra.mxu0 %v1155
    %1189 = vmatprep.subr.mxu0 0.0
    %1190 = vmatpush2.xpose.msra.mxu0 0.0
    %1191 = vmatprep.subr.mxu0 0.0
    %1192 = vmatpush2.xpose.msra.mxu0 0.0
    %1193 = vmatprep.subr.mxu0 0.0
    %1194 = vmatpush2.xpose.msra.mxu0 0.0
    %1195 = vmatprep.subr.mxu0 0.0
    %1196 = vmatpush2.xpose.msra.mxu0 0.0
    %1197 = vmatprep.subr.mxu0 0.0
    %1198 = vmatpush2.xpose.msra.mxu0 0.0
    %1199 = vmatprep.subr.mxu0 0.0
    %1200 = vmatpush2.xpose.msra.mxu0 0.0
    %1201 = vmatprep.subr.mxu0 0.0
    %1202 = vmatpush2.xpose.msra.mxu0 0.0
    %1203 = vmatprep.subr.mxu0 0.0
    %1204 = vmatpush2.xpose.msra.mxu0 0.0
    %1205 = vmatprep.subr.mxu0 0.0
    %1206 = vmatpush2.xpose.msra.mxu0 0.0
    %1207 = vmatprep.subr.mxu0 0.0
    %1208 = vmatpush2.xpose.msra.mxu0 0.0
    %1209 = vmatprep.subr.mxu0 0.0
    %1210 = vmatpush2.xpose.msra.mxu0 0.0
    %1211 = vmatprep.subr.mxu0 0.0
    %1212 = vmatpush2.xpose.msra.mxu0 0.0
    %1213 = vmatprep.subr.mxu0 0.0
    %1214 = vmatpush2.xpose.msra.mxu0 0.0
    %1215 = vmatprep.subr.mxu0 0.0
    %1216 = vmatpush2.xpose.msra.mxu0 0.0
    %1217 = vmatprep.subr.mxu0 0.0
    %1218 = vmatpush2.xpose.msra.mxu0 0.0
    %1219 = vmatprep.subr.mxu0 0.0
    %1220 = vmatpush2.xpose.msra.mxu0 0.0
    %1221 = vmatprep.mubr.f32.mxu0 0.0
    %1222 = vmatmul.mubr.f32.gmra.mxu0 %v1153
    %v1223 = vpop.f32.mrf.mxu0
    %v1224 = vadd.f32 0.0, %v1223
    %v1225 = vpop.f32.mrf.mxu0
    %1226 = vdwg.mxu0
    %v1227 = vmul.f32 %v1224, 0.35355338
    %v1228 = vsel %vm140, %v1227, -inf
    %1229 = vmax.xlane.f32.xlu0 %v1228
    %v1230 = vpop.xlane.xlu0 %1229
    %v1231 = vsub.f32 %v1227, %v1230
    %v1232 = vmul.f32 %v1231, 1.442695
    %v1233 = vpow.pop %v1232
    %v1234 = vsel %vm140, %v1233, 0.0
    %1235 = vadd.xlane.f32.xlu0 %v1234
    %v1236 = vpop.xlane.xlu0 %1235
    %v1237 = vrcp.pop %v1236
    %v1238 = vmul.f32 %v1233, %v1237
    %1239 = vrot.lane.b32.xlu0 %v134, 48
    %v1240 = vpop.permute.xlu0 %1239
    %v1243 = vsel %vm140, %v1238, 0
    %1245 = vmatprep.subr.mxu0 0.0
    %1246 = vmatpush1.msra.mxu0 0.0
    %1247 = vmatprep.subr.mxu0 0.0
    %1248 = vmatpush1.msra.mxu0 0.0
    %1249 = vmatprep.subr.mxu0 0.0
    %1250 = vmatpush1.msra.mxu0 0.0
    %1251 = vmatprep.subr.mxu0 0.0
    %1252 = vmatpush1.msra.mxu0 0.0
    %1253 = vmatprep.subr.mxu0 0.0
    %1254 = vmatpush1.msra.mxu0 0.0
    %1255 = vmatprep.subr.mxu0 0.0
    %1256 = vmatpush1.msra.mxu0 0.0
    %1257 = vmatprep.subr.mxu0 0.0
    %1258 = vmatpush1.msra.mxu0 0.0
    %1259 = vmatprep.subr.mxu0 0.0
    %1260 = vmatpush1.msra.mxu0 0.0
    %1261 = vmatprep.subr.mxu0 0.0
    %1262 = vmatpush1.msra.mxu0 0.0
    %1263 = vmatprep.subr.mxu0 0.0
    %1264 = vmatpush1.msra.mxu0 0.0
    %1265 = vmatprep.subr.mxu0 0.0
    %1266 = vmatpush1.msra.mxu0 0.0
    %1267 = vmatprep.subr.mxu0 0.0
    %1268 = vmatpush1.msra.mxu0 0.0
    %1269 = vmatprep.subr.mxu0 0.0
    %1270 = vmatpush1.msra.mxu0 0.0
    %1271 = vmatprep.subr.mxu0 0.0
    %1272 = vmatpush1.msra.mxu0 0.0
    %1273 = vmatprep.subr.mxu0 0.0
    %1274 = vmatpush1.msra.mxu0 0.0
    %1275 = vmatprep.subr.mxu0 0.0
    %1276 = vmatpush1.msra.mxu0 %v1240
    %1277 = vmatprep.subr.mxu0 0.0
    %1278 = vmatpush2.msra.mxu0 0.0
    %1279 = vmatprep.subr.mxu0 0.0
    %1280 = vmatpush2.msra.mxu0 0.0
    %1281 = vmatprep.subr.mxu0 0.0
    %1282 = vmatpush2.msra.mxu0 0.0
    %1283 = vmatprep.subr.mxu0 0.0
    %1284 = vmatpush2.msra.mxu0 0.0
    %1285 = vmatprep.subr.mxu0 0.0
    %1286 = vmatpush2.msra.mxu0 0.0
    %1287 = vmatprep.subr.mxu0 0.0
    %1288 = vmatpush2.msra.mxu0 0.0
    %1289 = vmatprep.subr.mxu0 0.0
    %1290 = vmatpush2.msra.mxu0 0.0
    %1291 = vmatprep.subr.mxu0 0.0
    %1292 = vmatpush2.msra.mxu0 0.0
    %1293 = vmatprep.subr.mxu0 0.0
    %1294 = vmatpush2.msra.mxu0 0.0
    %1295 = vmatprep.subr.mxu0 0.0
    %1296 = vmatpush2.msra.mxu0 0.0
    %1297 = vmatprep.subr.mxu0 0.0
    %1298 = vmatpush2.msra.mxu0 0.0
    %1299 = vmatprep.subr.mxu0 0.0
    %1300 = vmatpush2.msra.mxu0 0.0
    %1301 = vmatprep.subr.mxu0 0.0
    %1302 = vmatpush2.msra.mxu0 0.0
    %1303 = vmatprep.subr.mxu0 0.0
    %1304 = vmatpush2.msra.mxu0 0.0
    %1305 = vmatprep.subr.mxu0 0.0
    %1306 = vmatpush2.msra.mxu0 0.0
    %1307 = vmatprep.subr.mxu0 0.0
    %1308 = vmatpush2.msra.mxu0 0.0
    %1309 = vmatprep.mubr.f32.mxu0 0.0
    %1310 = vmatmul.mubr.f32.gmra.mxu0 %v1243
    %v1311 = vpop.f32.mrf.mxu0
    %v1312 = vadd.f32 0.0, %v1311
    %v1313 = vpop.f32.mrf.mxu0
    %1314 = vdwg.mxu0
    %1315 = vrot.lane.b32.xlu0 %v134, 104
    %v1316 = vpop.permute.xlu0 %1315
    %1317 = vrot.lane.b32.xlu0 %v134, 72
    %v1318 = vpop.permute.xlu0 %1317
    %v1319 = vsel %vm140, %v1316, 0
    %v1321 = vsel %vm140, %v1318, 0
    %1323 = vmatprep.subr.mxu0 0.0
    %1324 = vmatpush1.xpose.msra.mxu0 0.0
    %1325 = vmatprep.subr.mxu0 0.0
    %1326 = vmatpush1.xpose.msra.mxu0 0.0
    %1327 = vmatprep.subr.mxu0 0.0
    %1328 = vmatpush1.xpose.msra.mxu0 0.0
    %1329 = vmatprep.subr.mxu0 0.0
    %1330 = vmatpush1.xpose.msra.mxu0 0.0
    %1331 = vmatprep.subr.mxu0 0.0
    %1332 = vmatpush1.xpose.msra.mxu0 0.0
    %1333 = vmatprep.subr.mxu0 0.0
    %1334 = vmatpush1.xpose.msra.mxu0 0.0
    %1335 = vmatprep.subr.mxu0 0.0
    %1336 = vmatpush1.xpose.msra.mxu0 0.0
    %1337 = vmatprep.subr.mxu0 0.0
    %1338 = vmatpush1.xpose.msra.mxu0 0.0
    %1339 = vmatprep.subr.mxu0 0.0
    %1340 = vmatpush1.xpose.msra.mxu0 0.0
    %1341 = vmatprep.subr.mxu0 0.0
    %1342 = vmatpush1.xpose.msra.mxu0 0.0
    %1343 = vmatprep.subr.mxu0 0.0
    %1344 = vmatpush1.xpose.msra.mxu0 0.0
    %1345 = vmatprep.subr.mxu0 0.0
    %1346 = vmatpush1.xpose.msra.mxu0 0.0
    %1347 = vmatprep.subr.mxu0 0.0
    %1348 = vmatpush1.xpose.msra.mxu0 0.0
    %1349 = vmatprep.subr.mxu0 0.0
    %1350 = vmatpush1.xpose.msra.mxu0 0.0
    %1351 = vmatprep.subr.mxu0 0.0
    %1352 = vmatpush1.xpose.msra.mxu0 0.0
    %1353 = vmatprep.subr.mxu0 0.0
    %1354 = vmatpush1.xpose.msra.mxu0 %v1321
    %1355 = vmatprep.subr.mxu0 0.0
    %1356 = vmatpush2.xpose.msra.mxu0 0.0
    %1357 = vmatprep.subr.mxu0 0.0
    %1358 = vmatpush2.xpose.msra.mxu0 0.0
    %1359 = vmatprep.subr.mxu0 0.0
    %1360 = vmatpush2.xpose.msra.mxu0 0.0
    %1361 = vmatprep.subr.mxu0 0.0
    %1362 = vmatpush2.xpose.msra.mxu0 0.0
    %1363 = vmatprep.subr.mxu0 0.0
    %1364 = vmatpush2.xpose.msra.mxu0 0.0
    %1365 = vmatprep.subr.mxu0 0.0
    %1366 = vmatpush2.xpose.msra.mxu0 0.0
    %1367 = vmatprep.subr.mxu0 0.0
    %1368 = vmatpush2.xpose.msra.mxu0 0.0
    %1369 = vmatprep.subr.mxu0 0.0
    %1370 = vmatpush2.xpose.msra.mxu0 0.0
    %1371 = vmatprep.subr.mxu0 0.0
    %1372 = vmatpush2.xpose.msra.mxu0 0.0
    %1373 = vmatprep.subr.mxu0 0.0
    %1374 = vmatpush2.xpose.msra.mxu0 0.0
    %1375 = vmatprep.subr.mxu0 0.0
    %1376 = vmatpush2.xpose.msra.mxu0 0.0
    %1377 = vmatprep.subr.mxu0 0.0
    %1378 = vmatpush2.xpose.msra.mxu0 0.0
    %1379 = vmatprep.subr.mxu0 0.0
    %1380 = vmatpush2.xpose.msra.mxu0 0.0
    %1381 = vmatprep.subr.mxu0 0.0
    %1382 = vmatpush2.xpose.msra.mxu0 0.0
    %1383 = vmatprep.subr.mxu0 0.0
    %1384 = vmatpush2.xpose.msra.mxu0 0.0
    %1385 = vmatprep.subr.mxu0 0.0
    %1386 = vmatpush2.xpose.msra.mxu0 0.0
    %1387 = vmatprep.mubr.f32.mxu0 0.0
    %1388 = vmatmul.mubr.f32.gmra.mxu0 %v1319
    %v1389 = vpop.f32.mrf.mxu0
    %v1390 = vadd.f32 0.0, %v1389
    %v1391 = vpop.f32.mrf.mxu0
    %1392 = vdwg.mxu0
    %v1393 = vmul.f32 %v1390, 0.35355338
    %v1394 = vsel %vm140, %v1393, -inf
    %1395 = vmax.xlane.f32.xlu0 %v1394
    %v1396 = vpop.xlane.xlu0 %1395
    %v1397 = vsub.f32 %v1393, %v1396
    %v1398 = vmul.f32 %v1397, 1.442695
    %v1399 = vpow.pop %v1398
    %v1400 = vsel %vm140, %v1399, 0.0
    %1401 = vadd.xlane.f32.xlu0 %v1400
    %v1402 = vpop.xlane.xlu0 %1401
    %v1403 = vrcp.pop %v1402
    %v1404 = vmul.f32 %v1399, %v1403
    %1405 = vrot.lane.b32.xlu0 %v134, 40
    %v1406 = vpop.permute.xlu0 %1405
    %v1409 = vsel %vm140, %v1404, 0
    %1411 = vmatprep.subr.mxu0 0.0
    %1412 = vmatpush1.msra.mxu0 0.0
    %1413 = vmatprep.subr.mxu0 0.0
    %1414 = vmatpush1.msra.mxu0 0.0
    %1415 = vmatprep.subr.mxu0 0.0
    %1416 = vmatpush1.msra.mxu0 0.0
    %1417 = vmatprep.subr.mxu0 0.0
    %1418 = vmatpush1.msra.mxu0 0.0
    %1419 = vmatprep.subr.mxu0 0.0
    %1420 = vmatpush1.msra.mxu0 0.0
    %1421 = vmatprep.subr.mxu0 0.0
    %1422 = vmatpush1.msra.mxu0 0.0
    %1423 = vmatprep.subr.mxu0 0.0
    %1424 = vmatpush1.msra.mxu0 0.0
    %1425 = vmatprep.subr.mxu0 0.0
    %1426 = vmatpush1.msra.mxu0 0.0
    %1427 = vmatprep.subr.mxu0 0.0
    %1428 = vmatpush1.msra.mxu0 0.0
    %1429 = vmatprep.subr.mxu0 0.0
    %1430 = vmatpush1.msra.mxu0 0.0
    %1431 = vmatprep.subr.mxu0 0.0
    %1432 = vmatpush1.msra.mxu0 0.0
    %1433 = vmatprep.subr.mxu0 0.0
    %1434 = vmatpush1.msra.mxu0 0.0
    %1435 = vmatprep.subr.mxu0 0.0
    %1436 = vmatpush1.msra.mxu0 0.0
    %1437 = vmatprep.subr.mxu0 0.0
    %1438 = vmatpush1.msra.mxu0 0.0
    %1439 = vmatprep.subr.mxu0 0.0
    %1440 = vmatpush1.msra.mxu0 0.0
    %1441 = vmatprep.subr.mxu0 0.0
    %1442 = vmatpush1.msra.mxu0 %v1406
    %1443 = vmatprep.subr.mxu0 0.0
    %1444 = vmatpush2.msra.mxu0 0.0
    %1445 = vmatprep.subr.mxu0 0.0
    %1446 = vmatpush2.msra.mxu0 0.0
    %1447 = vmatprep.subr.mxu0 0.0
    %1448 = vmatpush2.msra.mxu0 0.0
    %1449 = vmatprep.subr.mxu0 0.0
    %1450 = vmatpush2.msra.mxu0 0.0
    %1451 = vmatprep.subr.mxu0 0.0
    %1452 = vmatpush2.msra.mxu0 0.0
    %1453 = vmatprep.subr.mxu0 0.0
    %1454 = vmatpush2.msra.mxu0 0.0
    %1455 = vmatprep.subr.mxu0 0.0
    %1456 = vmatpush2.msra.mxu0 0.0
    %1457 = vmatprep.subr.mxu0 0.0
    %1458 = vmatpush2.msra.mxu0 0.0
    %1459 = vmatprep.subr.mxu0 0.0
    %1460 = vmatpush2.msra.mxu0 0.0
    %1461 = vmatprep.subr.mxu0 0.0
    %1462 = vmatpush2.msra.mxu0 0.0
    %1463 = vmatprep.subr.mxu0 0.0
    %1464 = vmatpush2.msra.mxu0 0.0
    %1465 = vmatprep.subr.mxu0 0.0
    %1466 = vmatpush2.msra.mxu0 0.0
    %1467 = vmatprep.subr.mxu0 0.0
    %1468 = vmatpush2.msra.mxu0 0.0
    %1469 = vmatprep.subr.mxu0 0.0
    %1470 = vmatpush2.msra.mxu0 0.0
    %1471 = vmatprep.subr.mxu0 0.0
    %1472 = vmatpush2.msra.mxu0 0.0
    %1473 = vmatprep.subr.mxu0 0.0
    %1474 = vmatpush2.msra.mxu0 0.0
    %1475 = vmatprep.mubr.f32.mxu0 0.0
    %1476 = vmatmul.mubr.f32.gmra.mxu0 %v1409
    %v1477 = vpop.f32.mrf.mxu0
    %v1478 = vadd.f32 0.0, %v1477
    %v1479 = vpop.f32.mrf.mxu0
    %1480 = vdwg.mxu0
    %1482 = vrot.lane.b32.xlu0 %v1146, 8
    %v1483 = vpop.permute.xlu0 %1482
    %1486 = vrot.lane.b32.xlu0 %v1312, 16
    %v1487 = vpop.permute.xlu0 %1486
    %1490 = vrot.lane.b32.xlu0 %v1478, 24
    %v1491 = vpop.permute.xlu0 %1490
    %v1493 = vsel %vm140, %v980, %v1483
    %v1494 = vsel %vm814, %v1493, %v1487
    %v1495 = vsel %vm816, %v1494, %v1491
    %v1496 = vlaneseq
    %v1497 = vshrl.u32 %v1496, 7
    %v1498 = vsub.s32 1, %v1497
    %v1499 = vrot.slane %v50, %v1498
    %v1501 = vsel %vm55, %v817, 0
    %v1504 = vsel %vm55, %v1495, 0
    %1506 = vmatprep.subr.mxu0 0.0
    %1507 = vmatpush1.msra.mxu0 0.0
    %1508 = vmatprep.subr.mxu0 0.0
    %1509 = vmatpush1.msra.mxu0 0.0
    %1510 = vmatprep.subr.mxu0 0.0
    %1511 = vmatpush1.msra.mxu0 0.0
    %1512 = vmatprep.subr.mxu0 0.0
    %1513 = vmatpush1.msra.mxu0 0.0
    %1514 = vmatprep.subr.mxu0 0.0
    %1515 = vmatpush1.msra.mxu0 0.0
    %1516 = vmatprep.subr.mxu0 0.0
    %1517 = vmatpush1.msra.mxu0 0.0
    %1518 = vmatprep.subr.mxu0 0.0
    %1519 = vmatpush1.msra.mxu0 0.0
    %1520 = vmatprep.subr.mxu0 0.0
    %1521 = vmatpush1.msra.mxu0 0.0
    %1522 = vmatprep.subr.mxu0 0.0
    %1523 = vmatpush1.msra.mxu0 0.0
    %1524 = vmatprep.subr.mxu0 0.0
    %1525 = vmatpush1.msra.mxu0 0.0
    %1526 = vmatprep.subr.mxu0 0.0
    %1527 = vmatpush1.msra.mxu0 0.0
    %1528 = vmatprep.subr.mxu0 0.0
    %1529 = vmatpush1.msra.mxu0 0.0
    %1530 = vmatprep.subr.mxu0 0.0
    %1531 = vmatpush1.msra.mxu0 %v49
    %1532 = vmatprep.subr.mxu0 0.0
    %1533 = vmatpush1.msra.mxu0 %v48
    %1534 = vmatprep.subr.mxu0 0.0
    %1535 = vmatpush1.msra.mxu0 %v47
    %1536 = vmatprep.subr.mxu0 0.0
    %1537 = vmatpush1.msra.mxu0 %v46
    %1538 = vmatprep.subr.mxu0 0.0
    %1539 = vmatpush2.msra.mxu0 0.0
    %1540 = vmatprep.subr.mxu0 0.0
    %1541 = vmatpush2.msra.mxu0 0.0
    %1542 = vmatprep.subr.mxu0 0.0
    %1543 = vmatpush2.msra.mxu0 0.0
    %1544 = vmatprep.subr.mxu0 0.0
    %1545 = vmatpush2.msra.mxu0 0.0
    %1546 = vmatprep.subr.mxu0 0.0
    %1547 = vmatpush2.msra.mxu0 0.0
    %1548 = vmatprep.subr.mxu0 0.0
    %1549 = vmatpush2.msra.mxu0 0.0
    %1550 = vmatprep.subr.mxu0 0.0
    %1551 = vmatpush2.msra.mxu0 0.0
    %1552 = vmatprep.subr.mxu0 0.0
    %1553 = vmatpush2.msra.mxu0 0.0
    %1554 = vmatprep.subr.mxu0 0.0
    %1555 = vmatpush2.msra.mxu0 0.0
    %1556 = vmatprep.subr.mxu0 0.0
    %1557 = vmatpush2.msra.mxu0 0.0
    %1558 = vmatprep.subr.mxu0 0.0
    %1559 = vmatpush2.msra.mxu0 0.0
    %1560 = vmatprep.subr.mxu0 0.0
    %1561 = vmatpush2.msra.mxu0 0.0
    %1562 = vmatprep.subr.mxu0 0.0
    %1563 = vmatpush2.msra.mxu0 0.0
    %1564 = vmatprep.subr.mxu0 0.0
    %1565 = vmatpush2.msra.mxu0 0.0
    %1566 = vmatprep.subr.mxu0 0.0
    %1567 = vmatpush2.msra.mxu0 0.0
    %1568 = vmatprep.subr.mxu0 0.0
    %1569 = vmatpush2.msra.mxu0 0.0
    %1570 = vmatprep.mubr.f32.mxu0 0.0
    %1571 = vmatmul.mubr.f32.gmra.mxu0 %v1501
    %v1572 = vpop.f32.mrf.mxu0
    %v1573 = vadd.f32 %v1499, %v1572
    %v1574 = vpop.f32.mrf.mxu0
    %1575 = vmatprep.mubr.f32.mxu0 0.0
    %1576 = vmatmul.mubr.f32.gmra.mxu0 %v1504
    %v1577 = vpop.f32.mrf.mxu0
    %v1578 = vadd.f32 %v1499, %v1577
    %v1579 = vpop.f32.mrf.mxu0
    %1580 = vdwg.mxu0
    %v1581 = vadd.f32 %v1573, %v40
    %v1582 = vadd.f32 %v1578, %v41
    %v1583 = vsel %vm55, %v1581, 0.0
    %1584 = vadd.xlane.f32.xlu0 %v1583
    %v1585 = vpop.xlane.xlu0 %1584
    %v1586 = vsel %vm55, %v1582, 0.0
    %1587 = vadd.xlane.f32.xlu0 %v1586
    %v1588 = vpop.xlane.xlu0 %1587
    %v1589 = vrcp.pop 32.0
    %v1590 = vmul.f32 %v1585, %v1589
    %v1591 = vmul.f32 %v1588, %v1589
    %v1592 = vsub.f32 %v1581, %v1590
    %v1593 = vsub.f32 %v1582, %v1591
    %v1594 = vmul.f32 %v1592, %v1592
    %v1595 = vmul.f32 %v1593, %v1593
    %v1596 = vsel %vm55, %v1594, 0.0
    %1597 = vadd.xlane.f32.xlu0 %v1596
    %v1598 = vpop.xlane.xlu0 %1597
    %v1599 = vsel %vm55, %v1595, 0.0
    %1600 = vadd.xlane.f32.xlu0 %v1599
    %v1601 = vpop.xlane.xlu0 %1600
    %v1602 = vmul.f32 %v1598, %v1589
    %v1603 = vmul.f32 %v1601, %v1589
    %v1604 = vadd.f32 %v1602, 1e-05
    %v1605 = vadd.f32 %v1603, 1e-05
    %v1606 = vrsqrt.pop %v1604
    %v1607 = vrsqrt.pop %v1605
    %v1608 = vmul.f32 %v1592, %v1606
    %v1609 = vmul.f32 %v1593, %v1607
    %v1610 = vlaneseq
    %v1611 = vshrl.u32 %v1610, 7
    %v1612 = vsub.s32 2, %v1611
    %v1613 = vrot.slane %v50, %v1612
    %v1614 = vmul.f32 %v1608, %v1613
    %v1615 = vmul.f32 %v1609, %v1613
    %v1616 = vlaneseq
    %v1617 = vshrl.u32 %v1616, 7
    %v1618 = vsub.s32 3, %v1617
    %v1619 = vrot.slane %v50, %v1618
    %v1620 = vadd.f32 %v1614, %v1619
    %v1621 = vadd.f32 %v1615, %v1619
    %v1622 = vld [vmem:[#allocation5 + $0x48] sm:$0xff]
    %v1623 = vld [vmem:[#allocation5 + $0x50] sm:$0xff]
    %v1624 = vld [vmem:[#allocation5 + $0x58] sm:$0xff]
    %v1625 = vld [vmem:[#allocation5 + $0x60] sm:$0xff]
    %v1626 = vld [vmem:[#allocation5 + $0x68] sm:$0xff]
    %v1627 = vld [vmem:[#allocation5 + $0x70] sm:$0xff]
    %v1628 = vld [vmem:[#allocation5 + $0x78] sm:$0xff]
    %v1629 = vld [vmem:[#allocation5 + $0x80] sm:$0xff]
    %v1630 = vld [vmem:[#allocation5 + $0x88] sm:$0xff]
    %v1631 = vlaneseq
    %v1632 = vshrl.u32 %v1631, 7
    %v1633 = vsub.s32 0, %v1632
    %v1634 = vrot.slane %v1630, %v1633
    %v1636 = vsel %vm55, %v1620, 0
    %v1639 = vsel %vm55, %v1621, 0
    %1641 = vmatprep.subr.mxu0 0.0
    %1642 = vmatpush1.msra.mxu0 0.0
    %1643 = vmatprep.subr.mxu0 0.0
    %1644 = vmatpush1.msra.mxu0 0.0
    %1645 = vmatprep.subr.mxu0 0.0
    %1646 = vmatpush1.msra.mxu0 0.0
    %1647 = vmatprep.subr.mxu0 0.0
    %1648 = vmatpush1.msra.mxu0 0.0
    %1649 = vmatprep.subr.mxu0 0.0
    %1650 = vmatpush1.msra.mxu0 0.0
    %1651 = vmatprep.subr.mxu0 0.0
    %1652 = vmatpush1.msra.mxu0 0.0
    %1653 = vmatprep.subr.mxu0 0.0
    %1654 = vmatpush1.msra.mxu0 0.0
    %1655 = vmatprep.subr.mxu0 0.0
    %1656 = vmatpush1.msra.mxu0 0.0
    %1657 = vmatprep.subr.mxu0 0.0
    %1658 = vmatpush1.msra.mxu0 0.0
    %1659 = vmatprep.subr.mxu0 0.0
    %1660 = vmatpush1.msra.mxu0 0.0
    %1661 = vmatprep.subr.mxu0 0.0
    %1662 = vmatpush1.msra.mxu0 0.0
    %1663 = vmatprep.subr.mxu0 0.0
    %1664 = vmatpush1.msra.mxu0 0.0
    %1665 = vmatprep.subr.mxu0 0.0
    %1666 = vmatpush1.msra.mxu0 %v1625
    %1667 = vmatprep.subr.mxu0 0.0
    %1668 = vmatpush1.msra.mxu0 %v1624
    %1669 = vmatprep.subr.mxu0 0.0
    %1670 = vmatpush1.msra.mxu0 %v1623
    %1671 = vmatprep.subr.mxu0 0.0
    %1672 = vmatpush1.msra.mxu0 %v1622
    %1673 = vmatprep.subr.mxu0 0.0
    %1674 = vmatpush2.msra.mxu0 0.0
    %1675 = vmatprep.subr.mxu0 0.0
    %1676 = vmatpush2.msra.mxu0 0.0
    %1677 = vmatprep.subr.mxu0 0.0
    %1678 = vmatpush2.msra.mxu0 0.0
    %1679 = vmatprep.subr.mxu0 0.0
    %1680 = vmatpush2.msra.mxu0 0.0
    %1681 = vmatprep.subr.mxu0 0.0
    %1682 = vmatpush2.msra.mxu0 0.0
    %1683 = vmatprep.subr.mxu0 0.0
    %1684 = vmatpush2.msra.mxu0 0.0
    %1685 = vmatprep.subr.mxu0 0.0
    %1686 = vmatpush2.msra.mxu0 0.0
    %1687 = vmatprep.subr.mxu0 0.0
    %1688 = vmatpush2.msra.mxu0 0.0
    %1689 = vmatprep.subr.mxu0 0.0
    %1690 = vmatpush2.msra.mxu0 0.0
    %1691 = vmatprep.subr.mxu0 0.0
    %1692 = vmatpush2.msra.mxu0 0.0
    %1693 = vmatprep.subr.mxu0 0.0
    %1694 = vmatpush2.msra.mxu0 0.0
    %1695 = vmatprep.subr.mxu0 0.0
    %1696 = vmatpush2.msra.mxu0 0.0
    %1697 = vmatprep.subr.mxu0 0.0
    %1698 = vmatpush2.msra.mxu0 0.0
    %1699 = vmatprep.subr.mxu0 0.0
    %1700 = vmatpush2.msra.mxu0 0.0
    %1701 = vmatprep.subr.mxu0 0.0
    %1702 = vmatpush2.msra.mxu0 0.0
    %1703 = vmatprep.subr.mxu0 0.0
    %1704 = vmatpush2.msra.mxu0 0.0
    %1705 = vmatprep.mubr.f32.mxu0 0.0
    %1706 = vmatmul.mubr.f32.gmra.mxu0 %v1636
    %v1707 = vpop.f32.mrf.mxu0
    %v1708 = vadd.f32 %v1634, %v1707
    %v1709 = vpop.f32.mrf.mxu0
    %1710 = vmatprep.mubr.f32.mxu0 0.0
    %1711 = vmatmul.mubr.f32.gmra.mxu0 %v1639
    %v1712 = vpop.f32.mrf.mxu0
    %v1713 = vadd.f32 %v1634, %v1712
    %v1714 = vpop.f32.mrf.mxu0
    %1715 = vdwg.mxu0
    %1717 = vrot.lane.b32.xlu0 %v1708, 96
    %v1718 = vpop.permute.xlu0 %1717
    %v1719 = vsel %vm140, %v1708, 0
    %v1721 = vsel %vm140, %v1718, 0
    %1723 = vmatprep.subr.mxu0 0.0
    %1724 = vmatpush1.xpose.msra.mxu0 0.0
    %1725 = vmatprep.subr.mxu0 0.0
    %1726 = vmatpush1.xpose.msra.mxu0 0.0
    %1727 = vmatprep.subr.mxu0 0.0
    %1728 = vmatpush1.xpose.msra.mxu0 0.0
    %1729 = vmatprep.subr.mxu0 0.0
    %1730 = vmatpush1.xpose.msra.mxu0 0.0
    %1731 = vmatprep.subr.mxu0 0.0
    %1732 = vmatpush1.xpose.msra.mxu0 0.0
    %1733 = vmatprep.subr.mxu0 0.0
    %1734 = vmatpush1.xpose.msra.mxu0 0.0
    %1735 = vmatprep.subr.mxu0 0.0
    %1736 = vmatpush1.xpose.msra.mxu0 0.0
    %1737 = vmatprep.subr.mxu0 0.0
    %1738 = vmatpush1.xpose.msra.mxu0 0.0
    %1739 = vmatprep.subr.mxu0 0.0
    %1740 = vmatpush1.xpose.msra.mxu0 0.0
    %1741 = vmatprep.subr.mxu0 0.0
    %1742 = vmatpush1.xpose.msra.mxu0 0.0
    %1743 = vmatprep.subr.mxu0 0.0
    %1744 = vmatpush1.xpose.msra.mxu0 0.0
    %1745 = vmatprep.subr.mxu0 0.0
    %1746 = vmatpush1.xpose.msra.mxu0 0.0
    %1747 = vmatprep.subr.mxu0 0.0
    %1748 = vmatpush1.xpose.msra.mxu0 0.0
    %1749 = vmatprep.subr.mxu0 0.0
    %1750 = vmatpush1.xpose.msra.mxu0 0.0
    %1751 = vmatprep.subr.mxu0 0.0
    %1752 = vmatpush1.xpose.msra.mxu0 0.0
    %1753 = vmatprep.subr.mxu0 0.0
    %1754 = vmatpush1.xpose.msra.mxu0 %v1721
    %1755 = vmatprep.subr.mxu0 0.0
    %1756 = vmatpush2.xpose.msra.mxu0 0.0
    %1757 = vmatprep.subr.mxu0 0.0
    %1758 = vmatpush2.xpose.msra.mxu0 0.0
    %1759 = vmatprep.subr.mxu0 0.0
    %1760 = vmatpush2.xpose.msra.mxu0 0.0
    %1761 = vmatprep.subr.mxu0 0.0
    %1762 = vmatpush2.xpose.msra.mxu0 0.0
    %1763 = vmatprep.subr.mxu0 0.0
    %1764 = vmatpush2.xpose.msra.mxu0 0.0
    %1765 = vmatprep.subr.mxu0 0.0
    %1766 = vmatpush2.xpose.msra.mxu0 0.0
    %1767 = vmatprep.subr.mxu0 0.0
    %1768 = vmatpush2.xpose.msra.mxu0 0.0
    %1769 = vmatprep.subr.mxu0 0.0
    %1770 = vmatpush2.xpose.msra.mxu0 0.0
    %1771 = vmatprep.subr.mxu0 0.0
    %1772 = vmatpush2.xpose.msra.mxu0 0.0
    %1773 = vmatprep.subr.mxu0 0.0
    %1774 = vmatpush2.xpose.msra.mxu0 0.0
    %1775 = vmatprep.subr.mxu0 0.0
    %1776 = vmatpush2.xpose.msra.mxu0 0.0
    %1777 = vmatprep.subr.mxu0 0.0
    %1778 = vmatpush2.xpose.msra.mxu0 0.0
    %1779 = vmatprep.subr.mxu0 0.0
    %1780 = vmatpush2.xpose.msra.mxu0 0.0
    %1781 = vmatprep.subr.mxu0 0.0
    %1782 = vmatpush2.xpose.msra.mxu0 0.0
    %1783 = vmatprep.subr.mxu0 0.0
    %1784 = vmatpush2.xpose.msra.mxu0 0.0
    %1785 = vmatprep.subr.mxu0 0.0
    %1786 = vmatpush2.xpose.msra.mxu0 0.0
    %1787 = vmatprep.mubr.f32.mxu0 0.0
    %1788 = vmatmul.mubr.f32.gmra.mxu0 %v1719
    %v1789 = vpop.f32.mrf.mxu0
    %v1790 = vadd.f32 0.0, %v1789
    %v1791 = vpop.f32.mrf.mxu0
    %1792 = vdwg.mxu0
    %v1793 = vmul.f32 %v1790, 0.35355338
    %v1794 = vsel %vm140, %v1793, -inf
    %1795 = vmax.xlane.f32.xlu0 %v1794
    %v1796 = vpop.xlane.xlu0 %1795
    %v1797 = vsub.f32 %v1793, %v1796
    %v1798 = vmul.f32 %v1797, 1.442695
    %v1799 = vpow.pop %v1798
    %v1800 = vsel %vm140, %v1799, 0.0
    %1801 = vadd.xlane.f32.xlu0 %v1800
    %v1802 = vpop.xlane.xlu0 %1801
    %v1803 = vrcp.pop %v1802
    %v1804 = vmul.f32 %v1799, %v1803
    %1805 = vrot.lane.b32.xlu0 %v1708, 64
    %v1806 = vpop.permute.xlu0 %1805
    %v1809 = vsel %vm140, %v1804, 0
    %1811 = vmatprep.subr.mxu0 0.0
    %1812 = vmatpush1.msra.mxu0 0.0
    %1813 = vmatprep.subr.mxu0 0.0
    %1814 = vmatpush1.msra.mxu0 0.0
    %1815 = vmatprep.subr.mxu0 0.0
    %1816 = vmatpush1.msra.mxu0 0.0
    %1817 = vmatprep.subr.mxu0 0.0
    %1818 = vmatpush1.msra.mxu0 0.0
    %1819 = vmatprep.subr.mxu0 0.0
    %1820 = vmatpush1.msra.mxu0 0.0
    %1821 = vmatprep.subr.mxu0 0.0
    %1822 = vmatpush1.msra.mxu0 0.0
    %1823 = vmatprep.subr.mxu0 0.0
    %1824 = vmatpush1.msra.mxu0 0.0
    %1825 = vmatprep.subr.mxu0 0.0
    %1826 = vmatpush1.msra.mxu0 0.0
    %1827 = vmatprep.subr.mxu0 0.0
    %1828 = vmatpush1.msra.mxu0 0.0
    %1829 = vmatprep.subr.mxu0 0.0
    %1830 = vmatpush1.msra.mxu0 0.0
    %1831 = vmatprep.subr.mxu0 0.0
    %1832 = vmatpush1.msra.mxu0 0.0
    %1833 = vmatprep.subr.mxu0 0.0
    %1834 = vmatpush1.msra.mxu0 0.0
    %1835 = vmatprep.subr.mxu0 0.0
    %1836 = vmatpush1.msra.mxu0 0.0
    %1837 = vmatprep.subr.mxu0 0.0
    %1838 = vmatpush1.msra.mxu0 0.0
    %1839 = vmatprep.subr.mxu0 0.0
    %1840 = vmatpush1.msra.mxu0 0.0
    %1841 = vmatprep.subr.mxu0 0.0
    %1842 = vmatpush1.msra.mxu0 %v1806
    %1843 = vmatprep.subr.mxu0 0.0
    %1844 = vmatpush2.msra.mxu0 0.0
    %1845 = vmatprep.subr.mxu0 0.0
    %1846 = vmatpush2.msra.mxu0 0.0
    %1847 = vmatprep.subr.mxu0 0.0
    %1848 = vmatpush2.msra.mxu0 0.0
    %1849 = vmatprep.subr.mxu0 0.0
    %1850 = vmatpush2.msra.mxu0 0.0
    %1851 = vmatprep.subr.mxu0 0.0
    %1852 = vmatpush2.msra.mxu0 0.0
    %1853 = vmatprep.subr.mxu0 0.0
    %1854 = vmatpush2.msra.mxu0 0.0
    %1855 = vmatprep.subr.mxu0 0.0
    %1856 = vmatpush2.msra.mxu0 0.0
    %1857 = vmatprep.subr.mxu0 0.0
    %1858 = vmatpush2.msra.mxu0 0.0
    %1859 = vmatprep.subr.mxu0 0.0
    %1860 = vmatpush2.msra.mxu0 0.0
    %1861 = vmatprep.subr.mxu0 0.0
    %1862 = vmatpush2.msra.mxu0 0.0
    %1863 = vmatprep.subr.mxu0 0.0
    %1864 = vmatpush2.msra.mxu0 0.0
    %1865 = vmatprep.subr.mxu0 0.0
    %1866 = vmatpush2.msra.mxu0 0.0
    %1867 = vmatprep.subr.mxu0 0.0
    %1868 = vmatpush2.msra.mxu0 0.0
    %1869 = vmatprep.subr.mxu0 0.0
    %1870 = vmatpush2.msra.mxu0 0.0
    %1871 = vmatprep.subr.mxu0 0.0
    %1872 = vmatpush2.msra.mxu0 0.0
    %1873 = vmatprep.subr.mxu0 0.0
    %1874 = vmatpush2.msra.mxu0 0.0
    %1875 = vmatprep.mubr.f32.mxu0 0.0
    %1876 = vmatmul.mubr.f32.gmra.mxu0 %v1809
    %v1877 = vpop.f32.mrf.mxu0
    %v1878 = vadd.f32 0.0, %v1877
    %v1879 = vpop.f32.mrf.mxu0
    %1880 = vdwg.mxu0
    %1881 = vrot.lane.b32.xlu0 %v1708, 120
    %v1882 = vpop.permute.xlu0 %1881
    %1883 = vrot.lane.b32.xlu0 %v1708, 88
    %v1884 = vpop.permute.xlu0 %1883
    %v1885 = vsel %vm140, %v1882, 0
    %v1887 = vsel %vm140, %v1884, 0
    %1889 = vmatprep.subr.mxu0 0.0
    %1890 = vmatpush1.xpose.msra.mxu0 0.0
    %1891 = vmatprep.subr.mxu0 0.0
    %1892 = vmatpush1.xpose.msra.mxu0 0.0
    %1893 = vmatprep.subr.mxu0 0.0
    %1894 = vmatpush1.xpose.msra.mxu0 0.0
    %1895 = vmatprep.subr.mxu0 0.0
    %1896 = vmatpush1.xpose.msra.mxu0 0.0
    %1897 = vmatprep.subr.mxu0 0.0
    %1898 = vmatpush1.xpose.msra.mxu0 0.0
    %1899 = vmatprep.subr.mxu0 0.0
    %1900 = vmatpush1.xpose.msra.mxu0 0.0
    %1901 = vmatprep.subr.mxu0 0.0
    %1902 = vmatpush1.xpose.msra.mxu0 0.0
    %1903 = vmatprep.subr.mxu0 0.0
    %1904 = vmatpush1.xpose.msra.mxu0 0.0
    %1905 = vmatprep.subr.mxu0 0.0
    %1906 = vmatpush1.xpose.msra.mxu0 0.0
    %1907 = vmatprep.subr.mxu0 0.0
    %1908 = vmatpush1.xpose.msra.mxu0 0.0
    %1909 = vmatprep.subr.mxu0 0.0
    %1910 = vmatpush1.xpose.msra.mxu0 0.0
    %1911 = vmatprep.subr.mxu0 0.0
    %1912 = vmatpush1.xpose.msra.mxu0 0.0
    %1913 = vmatprep.subr.mxu0 0.0
    %1914 = vmatpush1.xpose.msra.mxu0 0.0
    %1915 = vmatprep.subr.mxu0 0.0
    %1916 = vmatpush1.xpose.msra.mxu0 0.0
    %1917 = vmatprep.subr.mxu0 0.0
    %1918 = vmatpush1.xpose.msra.mxu0 0.0
    %1919 = vmatprep.subr.mxu0 0.0
    %1920 = vmatpush1.xpose.msra.mxu0 %v1887
    %1921 = vmatprep.subr.mxu0 0.0
    %1922 = vmatpush2.xpose.msra.mxu0 0.0
    %1923 = vmatprep.subr.mxu0 0.0
    %1924 = vmatpush2.xpose.msra.mxu0 0.0
    %1925 = vmatprep.subr.mxu0 0.0
    %1926 = vmatpush2.xpose.msra.mxu0 0.0
    %1927 = vmatprep.subr.mxu0 0.0
    %1928 = vmatpush2.xpose.msra.mxu0 0.0
    %1929 = vmatprep.subr.mxu0 0.0
    %1930 = vmatpush2.xpose.msra.mxu0 0.0
    %1931 = vmatprep.subr.mxu0 0.0
    %1932 = vmatpush2.xpose.msra.mxu0 0.0
    %1933 = vmatprep.subr.mxu0 0.0
    %1934 = vmatpush2.xpose.msra.mxu0 0.0
    %1935 = vmatprep.subr.mxu0 0.0
    %1936 = vmatpush2.xpose.msra.mxu0 0.0
    %1937 = vmatprep.subr.mxu0 0.0
    %1938 = vmatpush2.xpose.msra.mxu0 0.0
    %1939 = vmatprep.subr.mxu0 0.0
    %1940 = vmatpush2.xpose.msra.mxu0 0.0
    %1941 = vmatprep.subr.mxu0 0.0
    %1942 = vmatpush2.xpose.msra.mxu0 0.0
    %1943 = vmatprep.subr.mxu0 0.0
    %1944 = vmatpush2.xpose.msra.mxu0 0.0
    %1945 = vmatprep.subr.mxu0 0.0
    %1946 = vmatpush2.xpose.msra.mxu0 0.0
    %1947 = vmatprep.subr.mxu0 0.0
    %1948 = vmatpush2.xpose.msra.mxu0 0.0
    %1949 = vmatprep.subr.mxu0 0.0
    %1950 = vmatpush2.xpose.msra.mxu0 0.0
    %1951 = vmatprep.subr.mxu0 0.0
    %1952 = vmatpush2.xpose.msra.mxu0 0.0
    %1953 = vmatprep.mubr.f32.mxu0 0.0
    %1954 = vmatmul.mubr.f32.gmra.mxu0 %v1885
    %v1955 = vpop.f32.mrf.mxu0
    %v1956 = vadd.f32 0.0, %v1955
    %v1957 = vpop.f32.mrf.mxu0
    %1958 = vdwg.mxu0
    %v1959 = vmul.f32 %v1956, 0.35355338
    %v1960 = vsel %vm140, %v1959, -inf
    %1961 = vmax.xlane.f32.xlu0 %v1960
    %v1962 = vpop.xlane.xlu0 %1961
    %v1963 = vsub.f32 %v1959, %v1962
    %v1964 = vmul.f32 %v1963, 1.442695
    %v1965 = vpow.pop %v1964
    %v1966 = vsel %vm140, %v1965, 0.0
    %1967 = vadd.xlane.f32.xlu0 %v1966
    %v1968 = vpop.xlane.xlu0 %1967
    %v1969 = vrcp.pop %v1968
    %v1970 = vmul.f32 %v1965, %v1969
    %1971 = vrot.lane.b32.xlu0 %v1708, 56
    %v1972 = vpop.permute.xlu0 %1971
    %v1975 = vsel %vm140, %v1970, 0
    %1977 = vmatprep.subr.mxu0 0.0
    %1978 = vmatpush1.msra.mxu0 0.0
    %1979 = vmatprep.subr.mxu0 0.0
    %1980 = vmatpush1.msra.mxu0 0.0
    %1981 = vmatprep.subr.mxu0 0.0
    %1982 = vmatpush1.msra.mxu0 0.0
    %1983 = vmatprep.subr.mxu0 0.0
    %1984 = vmatpush1.msra.mxu0 0.0
    %1985 = vmatprep.subr.mxu0 0.0
    %1986 = vmatpush1.msra.mxu0 0.0
    %1987 = vmatprep.subr.mxu0 0.0
    %1988 = vmatpush1.msra.mxu0 0.0
    %1989 = vmatprep.subr.mxu0 0.0
    %1990 = vmatpush1.msra.mxu0 0.0
    %1991 = vmatprep.subr.mxu0 0.0
    %1992 = vmatpush1.msra.mxu0 0.0
    %1993 = vmatprep.subr.mxu0 0.0
    %1994 = vmatpush1.msra.mxu0 0.0
    %1995 = vmatprep.subr.mxu0 0.0
    %1996 = vmatpush1.msra.mxu0 0.0
    %1997 = vmatprep.subr.mxu0 0.0
    %1998 = vmatpush1.msra.mxu0 0.0
    %1999 = vmatprep.subr.mxu0 0.0
    %2000 = vmatpush1.msra.mxu0 0.0
    %2001 = vmatprep.subr.mxu0 0.0
    %2002 = vmatpush1.msra.mxu0 0.0
    %2003 = vmatprep.subr.mxu0 0.0
    %2004 = vmatpush1.msra.mxu0 0.0
    %2005 = vmatprep.subr.mxu0 0.0
    %2006 = vmatpush1.msra.mxu0 0.0
    %2007 = vmatprep.subr.mxu0 0.0
    %2008 = vmatpush1.msra.mxu0 %v1972
    %2009 = vmatprep.subr.mxu0 0.0
    %2010 = vmatpush2.msra.mxu0 0.0
    %2011 = vmatprep.subr.mxu0 0.0
    %2012 = vmatpush2.msra.mxu0 0.0
    %2013 = vmatprep.subr.mxu0 0.0
    %2014 = vmatpush2.msra.mxu0 0.0
    %2015 = vmatprep.subr.mxu0 0.0
    %2016 = vmatpush2.msra.mxu0 0.0
    %2017 = vmatprep.subr.mxu0 0.0
    %2018 = vmatpush2.msra.mxu0 0.0
    %2019 = vmatprep.subr.mxu0 0.0
    %2020 = vmatpush2.msra.mxu0 0.0
    %2021 = vmatprep.subr.mxu0 0.0
    %2022 = vmatpush2.msra.mxu0 0.0
    %2023 = vmatprep.subr.mxu0 0.0
    %2024 = vmatpush2.msra.mxu0 0.0
    %2025 = vmatprep.subr.mxu0 0.0
    %2026 = vmatpush2.msra.mxu0 0.0
    %2027 = vmatprep.subr.mxu0 0.0
    %2028 = vmatpush2.msra.mxu0 0.0
    %2029 = vmatprep.subr.mxu0 0.0
    %2030 = vmatpush2.msra.mxu0 0.0
    %2031 = vmatprep.subr.mxu0 0.0
    %2032 = vmatpush2.msra.mxu0 0.0
    %2033 = vmatprep.subr.mxu0 0.0
    %2034 = vmatpush2.msra.mxu0 0.0
    %2035 = vmatprep.subr.mxu0 0.0
    %2036 = vmatpush2.msra.mxu0 0.0
    %2037 = vmatprep.subr.mxu0 0.0
    %2038 = vmatpush2.msra.mxu0 0.0
    %2039 = vmatprep.subr.mxu0 0.0
    %2040 = vmatpush2.msra.mxu0 0.0
    %2041 = vmatprep.mubr.f32.mxu0 0.0
    %2042 = vmatmul.mubr.f32.gmra.mxu0 %v1975
    %v2043 = vpop.f32.mrf.mxu0
    %v2044 = vadd.f32 0.0, %v2043
    %v2045 = vpop.f32.mrf.mxu0
    %2046 = vdwg.mxu0
    %2047 = vrot.lane.b32.xlu0 %v1708, 112
    %v2048 = vpop.permute.xlu0 %2047
    %2049 = vrot.lane.b32.xlu0 %v1708, 80
    %v2050 = vpop.permute.xlu0 %2049
    %v2051 = vsel %vm140, %v2048, 0
    %v2053 = vsel %vm140, %v2050, 0
    %2055 = vmatprep.subr.mxu0 0.0
    %2056 = vmatpush1.xpose.msra.mxu0 0.0
    %2057 = vmatprep.subr.mxu0 0.0
    %2058 = vmatpush1.xpose.msra.mxu0 0.0
    %2059 = vmatprep.subr.mxu0 0.0
    %2060 = vmatpush1.xpose.msra.mxu0 0.0
    %2061 = vmatprep.subr.mxu0 0.0
    %2062 = vmatpush1.xpose.msra.mxu0 0.0
    %2063 = vmatprep.subr.mxu0 0.0
    %2064 = vmatpush1.xpose.msra.mxu0 0.0
    %2065 = vmatprep.subr.mxu0 0.0
    %2066 = vmatpush1.xpose.msra.mxu0 0.0
    %2067 = vmatprep.subr.mxu0 0.0
    %2068 = vmatpush1.xpose.msra.mxu0 0.0
    %2069 = vmatprep.subr.mxu0 0.0
    %2070 = vmatpush1.xpose.msra.mxu0 0.0
    %2071 = vmatprep.subr.mxu0 0.0
    %2072 = vmatpush1.xpose.msra.mxu0 0.0
    %2073 = vmatprep.subr.mxu0 0.0
    %2074 = vmatpush1.xpose.msra.mxu0 0.0
    %2075 = vmatprep.subr.mxu0 0.0
    %2076 = vmatpush1.xpose.msra.mxu0 0.0
    %2077 = vmatprep.subr.mxu0 0.0
    %2078 = vmatpush1.xpose.msra.mxu0 0.0
    %2079 = vmatprep.subr.mxu0 0.0
    %2080 = vmatpush1.xpose.msra.mxu0 0.0
    %2081 = vmatprep.subr.mxu0 0.0
    %2082 = vmatpush1.xpose.msra.mxu0 0.0
    %2083 = vmatprep.subr.mxu0 0.0
    %2084 = vmatpush1.xpose.msra.mxu0 0.0
    %2085 = vmatprep.subr.mxu0 0.0
    %2086 = vmatpush1.xpose.msra.mxu0 %v2053
    %2087 = vmatprep.subr.mxu0 0.0
    %2088 = vmatpush2.xpose.msra.mxu0 0.0
    %2089 = vmatprep.subr.mxu0 0.0
    %2090 = vmatpush2.xpose.msra.mxu0 0.0
    %2091 = vmatprep.subr.mxu0 0.0
    %2092 = vmatpush2.xpose.msra.mxu0 0.0
    %2093 = vmatprep.subr.mxu0 0.0
    %2094 = vmatpush2.xpose.msra.mxu0 0.0
    %2095 = vmatprep.subr.mxu0 0.0
    %2096 = vmatpush2.xpose.msra.mxu0 0.0
    %2097 = vmatprep.subr.mxu0 0.0
    %2098 = vmatpush2.xpose.msra.mxu0 0.0
    %2099 = vmatprep.subr.mxu0 0.0
    %2100 = vmatpush2.xpose.msra.mxu0 0.0
    %2101 = vmatprep.subr.mxu0 0.0
    %2102 = vmatpush2.xpose.msra.mxu0 0.0
    %2103 = vmatprep.subr.mxu0 0.0
    %2104 = vmatpush2.xpose.msra.mxu0 0.0
    %2105 = vmatprep.subr.mxu0 0.0
    %2106 = vmatpush2.xpose.msra.mxu0 0.0
    %2107 = vmatprep.subr.mxu0 0.0
    %2108 = vmatpush2.xpose.msra.mxu0 0.0
    %2109 = vmatprep.subr.mxu0 0.0
    %2110 = vmatpush2.xpose.msra.mxu0 0.0
    %2111 = vmatprep.subr.mxu0 0.0
    %2112 = vmatpush2.xpose.msra.mxu0 0.0
    %2113 = vmatprep.subr.mxu0 0.0
    %2114 = vmatpush2.xpose.msra.mxu0 0.0
    %2115 = vmatprep.subr.mxu0 0.0
    %2116 = vmatpush2.xpose.msra.mxu0 0.0
    %2117 = vmatprep.subr.mxu0 0.0
    %2118 = vmatpush2.xpose.msra.mxu0 0.0
    %2119 = vmatprep.mubr.f32.mxu0 0.0
    %2120 = vmatmul.mubr.f32.gmra.mxu0 %v2051
    %v2121 = vpop.f32.mrf.mxu0
    %v2122 = vadd.f32 0.0, %v2121
    %v2123 = vpop.f32.mrf.mxu0
    %2124 = vdwg.mxu0
    %v2125 = vmul.f32 %v2122, 0.35355338
    %v2126 = vsel %vm140, %v2125, -inf
    %2127 = vmax.xlane.f32.xlu0 %v2126
    %v2128 = vpop.xlane.xlu0 %2127
    %v2129 = vsub.f32 %v2125, %v2128
    %v2130 = vmul.f32 %v2129, 1.442695
    %v2131 = vpow.pop %v2130
    %v2132 = vsel %vm140, %v2131, 0.0
    %2133 = vadd.xlane.f32.xlu0 %v2132
    %v2134 = vpop.xlane.xlu0 %2133
    %v2135 = vrcp.pop %v2134
    %v2136 = vmul.f32 %v2131, %v2135
    %2137 = vrot.lane.b32.xlu0 %v1708, 48
    %v2138 = vpop.permute.xlu0 %2137
    %v2141 = vsel %vm140, %v2136, 0
    %2143 = vmatprep.subr.mxu0 0.0
    %2144 = vmatpush1.msra.mxu0 0.0
    %2145 = vmatprep.subr.mxu0 0.0
    %2146 = vmatpush1.msra.mxu0 0.0
    %2147 = vmatprep.subr.mxu0 0.0
    %2148 = vmatpush1.msra.mxu0 0.0
    %2149 = vmatprep.subr.mxu0 0.0
    %2150 = vmatpush1.msra.mxu0 0.0
    %2151 = vmatprep.subr.mxu0 0.0
    %2152 = vmatpush1.msra.mxu0 0.0
    %2153 = vmatprep.subr.mxu0 0.0
    %2154 = vmatpush1.msra.mxu0 0.0
    %2155 = vmatprep.subr.mxu0 0.0
    %2156 = vmatpush1.msra.mxu0 0.0
    %2157 = vmatprep.subr.mxu0 0.0
    %2158 = vmatpush1.msra.mxu0 0.0
    %2159 = vmatprep.subr.mxu0 0.0
    %2160 = vmatpush1.msra.mxu0 0.0
    %2161 = vmatprep.subr.mxu0 0.0
    %2162 = vmatpush1.msra.mxu0 0.0
    %2163 = vmatprep.subr.mxu0 0.0
    %2164 = vmatpush1.msra.mxu0 0.0
    %2165 = vmatprep.subr.mxu0 0.0
    %2166 = vmatpush1.msra.mxu0 0.0
    %2167 = vmatprep.subr.mxu0 0.0
    %2168 = vmatpush1.msra.mxu0 0.0
    %2169 = vmatprep.subr.mxu0 0.0
    %2170 = vmatpush1.msra.mxu0 0.0
    %2171 = vmatprep.subr.mxu0 0.0
    %2172 = vmatpush1.msra.mxu0 0.0
    %2173 = vmatprep.subr.mxu0 0.0
    %2174 = vmatpush1.msra.mxu0 %v2138
    %2175 = vmatprep.subr.mxu0 0.0
    %2176 = vmatpush2.msra.mxu0 0.0
    %2177 = vmatprep.subr.mxu0 0.0
    %2178 = vmatpush2.msra.mxu0 0.0
    %2179 = vmatprep.subr.mxu0 0.0
    %2180 = vmatpush2.msra.mxu0 0.0
    %2181 = vmatprep.subr.mxu0 0.0
    %2182 = vmatpush2.msra.mxu0 0.0
    %2183 = vmatprep.subr.mxu0 0.0
    %2184 = vmatpush2.msra.mxu0 0.0
    %2185 = vmatprep.subr.mxu0 0.0
    %2186 = vmatpush2.msra.mxu0 0.0
    %2187 = vmatprep.subr.mxu0 0.0
    %2188 = vmatpush2.msra.mxu0 0.0
    %2189 = vmatprep.subr.mxu0 0.0
    %2190 = vmatpush2.msra.mxu0 0.0
    %2191 = vmatprep.subr.mxu0 0.0
    %2192 = vmatpush2.msra.mxu0 0.0
    %2193 = vmatprep.subr.mxu0 0.0
    %2194 = vmatpush2.msra.mxu0 0.0
    %2195 = vmatprep.subr.mxu0 0.0
    %2196 = vmatpush2.msra.mxu0 0.0
    %2197 = vmatprep.subr.mxu0 0.0
    %2198 = vmatpush2.msra.mxu0 0.0
    %2199 = vmatprep.subr.mxu0 0.0
    %2200 = vmatpush2.msra.mxu0 0.0
    %2201 = vmatprep.subr.mxu0 0.0
    %2202 = vmatpush2.msra.mxu0 0.0
    %2203 = vmatprep.subr.mxu0 0.0
    %2204 = vmatpush2.msra.mxu0 0.0
    %2205 = vmatprep.subr.mxu0 0.0
    %2206 = vmatpush2.msra.mxu0 0.0
    %2207 = vmatprep.mubr.f32.mxu0 0.0
    %2208 = vmatmul.mubr.f32.gmra.mxu0 %v2141
    %v2209 = vpop.f32.mrf.mxu0
    %v2210 = vadd.f32 0.0, %v2209
    %v2211 = vpop.f32.mrf.mxu0
    %2212 = vdwg.mxu0
    %2213 = vrot.lane.b32.xlu0 %v1708, 104
    %v2214 = vpop.permute.xlu0 %2213
    %2215 = vrot.lane.b32.xlu0 %v1708, 72
    %v2216 = vpop.permute.xlu0 %2215
    %v2217 = vsel %vm140, %v2214, 0
    %v2219 = vsel %vm140, %v2216, 0
    %2221 = vmatprep.subr.mxu0 0.0
    %2222 = vmatpush1.xpose.msra.mxu0 0.0
    %2223 = vmatprep.subr.mxu0 0.0
    %2224 = vmatpush1.xpose.msra.mxu0 0.0
    %2225 = vmatprep.subr.mxu0 0.0
    %2226 = vmatpush1.xpose.msra.mxu0 0.0
    %2227 = vmatprep.subr.mxu0 0.0
    %2228 = vmatpush1.xpose.msra.mxu0 0.0
    %2229 = vmatprep.subr.mxu0 0.0
    %2230 = vmatpush1.xpose.msra.mxu0 0.0
    %2231 = vmatprep.subr.mxu0 0.0
    %2232 = vmatpush1.xpose.msra.mxu0 0.0
    %2233 = vmatprep.subr.mxu0 0.0
    %2234 = vmatpush1.xpose.msra.mxu0 0.0
    %2235 = vmatprep.subr.mxu0 0.0
    %2236 = vmatpush1.xpose.msra.mxu0 0.0
    %2237 = vmatprep.subr.mxu0 0.0
    %2238 = vmatpush1.xpose.msra.mxu0 0.0
    %2239 = vmatprep.subr.mxu0 0.0
    %2240 = vmatpush1.xpose.msra.mxu0 0.0
    %2241 = vmatprep.subr.mxu0 0.0
    %2242 = vmatpush1.xpose.msra.mxu0 0.0
    %2243 = vmatprep.subr.mxu0 0.0
    %2244 = vmatpush1.xpose.msra.mxu0 0.0
    %2245 = vmatprep.subr.mxu0 0.0
    %2246 = vmatpush1.xpose.msra.mxu0 0.0
    %2247 = vmatprep.subr.mxu0 0.0
    %2248 = vmatpush1.xpose.msra.mxu0 0.0
    %2249 = vmatprep.subr.mxu0 0.0
    %2250 = vmatpush1.xpose.msra.mxu0 0.0
    %2251 = vmatprep.subr.mxu0 0.0
    %2252 = vmatpush1.xpose.msra.mxu0 %v2219
    %2253 = vmatprep.subr.mxu0 0.0
    %2254 = vmatpush2.xpose.msra.mxu0 0.0
    %2255 = vmatprep.subr.mxu0 0.0
    %2256 = vmatpush2.xpose.msra.mxu0 0.0
    %2257 = vmatprep.subr.mxu0 0.0
    %2258 = vmatpush2.xpose.msra.mxu0 0.0
    %2259 = vmatprep.subr.mxu0 0.0
    %2260 = vmatpush2.xpose.msra.mxu0 0.0
    %2261 = vmatprep.subr.mxu0 0.0
    %2262 = vmatpush2.xpose.msra.mxu0 0.0
    %2263 = vmatprep.subr.mxu0 0.0
    %2264 = vmatpush2.xpose.msra.mxu0 0.0
    %2265 = vmatprep.subr.mxu0 0.0
    %2266 = vmatpush2.xpose.msra.mxu0 0.0
    %2267 = vmatprep.subr.mxu0 0.0
    %2268 = vmatpush2.xpose.msra.mxu0 0.0
    %2269 = vmatprep.subr.mxu0 0.0
    %2270 = vmatpush2.xpose.msra.mxu0 0.0
    %2271 = vmatprep.subr.mxu0 0.0
    %2272 = vmatpush2.xpose.msra.mxu0 0.0
    %2273 = vmatprep.subr.mxu0 0.0
    %2274 = vmatpush2.xpose.msra.mxu0 0.0
    %2275 = vmatprep.subr.mxu0 0.0
    %2276 = vmatpush2.xpose.msra.mxu0 0.0
    %2277 = vmatprep.subr.mxu0 0.0
    %2278 = vmatpush2.xpose.msra.mxu0 0.0
    %2279 = vmatprep.subr.mxu0 0.0
    %2280 = vmatpush2.xpose.msra.mxu0 0.0
    %2281 = vmatprep.subr.mxu0 0.0
    %2282 = vmatpush2.xpose.msra.mxu0 0.0
    %2283 = vmatprep.subr.mxu0 0.0
    %2284 = vmatpush2.xpose.msra.mxu0 0.0
    %2285 = vmatprep.mubr.f32.mxu0 0.0
    %2286 = vmatmul.mubr.f32.gmra.mxu0 %v2217
    %v2287 = vpop.f32.mrf.mxu0
    %v2288 = vadd.f32 0.0, %v2287
    %v2289 = vpop.f32.mrf.mxu0
    %2290 = vdwg.mxu0
    %v2291 = vmul.f32 %v2288, 0.35355338
    %v2292 = vsel %vm140, %v2291, -inf
    %2293 = vmax.xlane.f32.xlu0 %v2292
    %v2294 = vpop.xlane.xlu0 %2293
    %v2295 = vsub.f32 %v2291, %v2294
    %v2296 = vmul.f32 %v2295, 1.442695
    %v2297 = vpow.pop %v2296
    %v2298 = vsel %vm140, %v2297, 0.0
    %2299 = vadd.xlane.f32.xlu0 %v2298
    %v2300 = vpop.xlane.xlu0 %2299
    %v2301 = vrcp.pop %v2300
    %v2302 = vmul.f32 %v2297, %v2301
    %2303 = vrot.lane.b32.xlu0 %v1708, 40
    %v2304 = vpop.permute.xlu0 %2303
    %v2307 = vsel %vm140, %v2302, 0
    %2309 = vmatprep.subr.mxu0 0.0
    %2310 = vmatpush1.msra.mxu0 0.0
    %2311 = vmatprep.subr.mxu0 0.0
    %2312 = vmatpush1.msra.mxu0 0.0
    %2313 = vmatprep.subr.mxu0 0.0
    %2314 = vmatpush1.msra.mxu0 0.0
    %2315 = vmatprep.subr.mxu0 0.0
    %2316 = vmatpush1.msra.mxu0 0.0
    %2317 = vmatprep.subr.mxu0 0.0
    %2318 = vmatpush1.msra.mxu0 0.0
    %2319 = vmatprep.subr.mxu0 0.0
    %2320 = vmatpush1.msra.mxu0 0.0
    %2321 = vmatprep.subr.mxu0 0.0
    %2322 = vmatpush1.msra.mxu0 0.0
    %2323 = vmatprep.subr.mxu0 0.0
    %2324 = vmatpush1.msra.mxu0 0.0
    %2325 = vmatprep.subr.mxu0 0.0
    %2326 = vmatpush1.msra.mxu0 0.0
    %2327 = vmatprep.subr.mxu0 0.0
    %2328 = vmatpush1.msra.mxu0 0.0
    %2329 = vmatprep.subr.mxu0 0.0
    %2330 = vmatpush1.msra.mxu0 0.0
    %2331 = vmatprep.subr.mxu0 0.0
    %2332 = vmatpush1.msra.mxu0 0.0
    %2333 = vmatprep.subr.mxu0 0.0
    %2334 = vmatpush1.msra.mxu0 0.0
    %2335 = vmatprep.subr.mxu0 0.0
    %2336 = vmatpush1.msra.mxu0 0.0
    %2337 = vmatprep.subr.mxu0 0.0
    %2338 = vmatpush1.msra.mxu0 0.0
    %2339 = vmatprep.subr.mxu0 0.0
    %2340 = vmatpush1.msra.mxu0 %v2304
    %2341 = vmatprep.subr.mxu0 0.0
    %2342 = vmatpush2.msra.mxu0 0.0
    %2343 = vmatprep.subr.mxu0 0.0
    %2344 = vmatpush2.msra.mxu0 0.0
    %2345 = vmatprep.subr.mxu0 0.0
    %2346 = vmatpush2.msra.mxu0 0.0
    %2347 = vmatprep.subr.mxu0 0.0
    %2348 = vmatpush2.msra.mxu0 0.0
    %2349 = vmatprep.subr.mxu0 0.0
    %2350 = vmatpush2.msra.mxu0 0.0
    %2351 = vmatprep.subr.mxu0 0.0
    %2352 = vmatpush2.msra.mxu0 0.0
    %2353 = vmatprep.subr.mxu0 0.0
    %2354 = vmatpush2.msra.mxu0 0.0
    %2355 = vmatprep.subr.mxu0 0.0
    %2356 = vmatpush2.msra.mxu0 0.0
    %2357 = vmatprep.subr.mxu0 0.0
    %2358 = vmatpush2.msra.mxu0 0.0
    %2359 = vmatprep.subr.mxu0 0.0
    %2360 = vmatpush2.msra.mxu0 0.0
    %2361 = vmatprep.subr.mxu0 0.0
    %2362 = vmatpush2.msra.mxu0 0.0
    %2363 = vmatprep.subr.mxu0 0.0
    %2364 = vmatpush2.msra.mxu0 0.0
    %2365 = vmatprep.subr.mxu0 0.0
    %2366 = vmatpush2.msra.mxu0 0.0
    %2367 = vmatprep.subr.mxu0 0.0
    %2368 = vmatpush2.msra.mxu0 0.0
    %2369 = vmatprep.subr.mxu0 0.0
    %2370 = vmatpush2.msra.mxu0 0.0
    %2371 = vmatprep.subr.mxu0 0.0
    %2372 = vmatpush2.msra.mxu0 0.0
    %2373 = vmatprep.mubr.f32.mxu0 0.0
    %2374 = vmatmul.mubr.f32.gmra.mxu0 %v2307
    %v2375 = vpop.f32.mrf.mxu0
    %v2376 = vadd.f32 0.0, %v2375
    %v2377 = vpop.f32.mrf.mxu0
    %2378 = vdwg.mxu0
    %2380 = vrot.lane.b32.xlu0 %v2044, 8
    %v2381 = vpop.permute.xlu0 %2380
    %2384 = vrot.lane.b32.xlu0 %v2210, 16
    %v2385 = vpop.permute.xlu0 %2384
    %2388 = vrot.lane.b32.xlu0 %v2376, 24
    %v2389 = vpop.permute.xlu0 %2388
    %v2391 = vsel %vm140, %v1878, %v2381
    %v2392 = vsel %vm814, %v2391, %v2385
    %v2393 = vsel %vm816, %v2392, %v2389
    %2395 = vrot.lane.b32.xlu0 %v1713, 96
    %v2396 = vpop.permute.xlu0 %2395
    %v2397 = vsel %vm140, %v1713, 0
    %v2399 = vsel %vm140, %v2396, 0
    %2401 = vmatprep.subr.mxu0 0.0
    %2402 = vmatpush1.xpose.msra.mxu0 0.0
    %2403 = vmatprep.subr.mxu0 0.0
    %2404 = vmatpush1.xpose.msra.mxu0 0.0
    %2405 = vmatprep.subr.mxu0 0.0
    %2406 = vmatpush1.xpose.msra.mxu0 0.0
    %2407 = vmatprep.subr.mxu0 0.0
    %2408 = vmatpush1.xpose.msra.mxu0 0.0
    %2409 = vmatprep.subr.mxu0 0.0
    %2410 = vmatpush1.xpose.msra.mxu0 0.0
    %2411 = vmatprep.subr.mxu0 0.0
    %2412 = vmatpush1.xpose.msra.mxu0 0.0
    %2413 = vmatprep.subr.mxu0 0.0
    %2414 = vmatpush1.xpose.msra.mxu0 0.0
    %2415 = vmatprep.subr.mxu0 0.0
    %2416 = vmatpush1.xpose.msra.mxu0 0.0
    %2417 = vmatprep.subr.mxu0 0.0
    %2418 = vmatpush1.xpose.msra.mxu0 0.0
    %2419 = vmatprep.subr.mxu0 0.0
    %2420 = vmatpush1.xpose.msra.mxu0 0.0
    %2421 = vmatprep.subr.mxu0 0.0
    %2422 = vmatpush1.xpose.msra.mxu0 0.0
    %2423 = vmatprep.subr.mxu0 0.0
    %2424 = vmatpush1.xpose.msra.mxu0 0.0
    %2425 = vmatprep.subr.mxu0 0.0
    %2426 = vmatpush1.xpose.msra.mxu0 0.0
    %2427 = vmatprep.subr.mxu0 0.0
    %2428 = vmatpush1.xpose.msra.mxu0 0.0
    %2429 = vmatprep.subr.mxu0 0.0
    %2430 = vmatpush1.xpose.msra.mxu0 0.0
    %2431 = vmatprep.subr.mxu0 0.0
    %2432 = vmatpush1.xpose.msra.mxu0 %v2399
    %2433 = vmatprep.subr.mxu0 0.0
    %2434 = vmatpush2.xpose.msra.mxu0 0.0
    %2435 = vmatprep.subr.mxu0 0.0
    %2436 = vmatpush2.xpose.msra.mxu0 0.0
    %2437 = vmatprep.subr.mxu0 0.0
    %2438 = vmatpush2.xpose.msra.mxu0 0.0
    %2439 = vmatprep.subr.mxu0 0.0
    %2440 = vmatpush2.xpose.msra.mxu0 0.0
    %2441 = vmatprep.subr.mxu0 0.0
    %2442 = vmatpush2.xpose.msra.mxu0 0.0
    %2443 = vmatprep.subr.mxu0 0.0
    %2444 = vmatpush2.xpose.msra.mxu0 0.0
    %2445 = vmatprep.subr.mxu0 0.0
    %2446 = vmatpush2.xpose.msra.mxu0 0.0
    %2447 = vmatprep.subr.mxu0 0.0
    %2448 = vmatpush2.xpose.msra.mxu0 0.0
    %2449 = vmatprep.subr.mxu0 0.0
    %2450 = vmatpush2.xpose.msra.mxu0 0.0
    %2451 = vmatprep.subr.mxu0 0.0
    %2452 = vmatpush2.xpose.msra.mxu0 0.0
    %2453 = vmatprep.subr.mxu0 0.0
    %2454 = vmatpush2.xpose.msra.mxu0 0.0
    %2455 = vmatprep.subr.mxu0 0.0
    %2456 = vmatpush2.xpose.msra.mxu0 0.0
    %2457 = vmatprep.subr.mxu0 0.0
    %2458 = vmatpush2.xpose.msra.mxu0 0.0
    %2459 = vmatprep.subr.mxu0 0.0
    %2460 = vmatpush2.xpose.msra.mxu0 0.0
    %2461 = vmatprep.subr.mxu0 0.0
    %2462 = vmatpush2.xpose.msra.mxu0 0.0
    %2463 = vmatprep.subr.mxu0 0.0
    %2464 = vmatpush2.xpose.msra.mxu0 0.0
    %2465 = vmatprep.mubr.f32.mxu0 0.0
    %2466 = vmatmul.mubr.f32.gmra.mxu0 %v2397
    %v2467 = vpop.f32.mrf.mxu0
    %v2468 = vadd.f32 0.0, %v2467
    %v2469 = vpop.f32.mrf.mxu0
    %2470 = vdwg.mxu0
    %v2471 = vmul.f32 %v2468, 0.35355338
    %v2472 = vsel %vm140, %v2471, -inf
    %2473 = vmax.xlane.f32.xlu0 %v2472
    %v2474 = vpop.xlane.xlu0 %2473
    %v2475 = vsub.f32 %v2471, %v2474
    %v2476 = vmul.f32 %v2475, 1.442695
    %v2477 = vpow.pop %v2476
    %v2478 = vsel %vm140, %v2477, 0.0
    %2479 = vadd.xlane.f32.xlu0 %v2478
    %v2480 = vpop.xlane.xlu0 %2479
    %v2481 = vrcp.pop %v2480
    %v2482 = vmul.f32 %v2477, %v2481
    %2483 = vrot.lane.b32.xlu0 %v1713, 64
    %v2484 = vpop.permute.xlu0 %2483
    %v2487 = vsel %vm140, %v2482, 0
    %2489 = vmatprep.subr.mxu0 0.0
    %2490 = vmatpush1.msra.mxu0 0.0
    %2491 = vmatprep.subr.mxu0 0.0
    %2492 = vmatpush1.msra.mxu0 0.0
    %2493 = vmatprep.subr.mxu0 0.0
    %2494 = vmatpush1.msra.mxu0 0.0
    %2495 = vmatprep.subr.mxu0 0.0
    %2496 = vmatpush1.msra.mxu0 0.0
    %2497 = vmatprep.subr.mxu0 0.0
    %2498 = vmatpush1.msra.mxu0 0.0
    %2499 = vmatprep.subr.mxu0 0.0
    %2500 = vmatpush1.msra.mxu0 0.0
    %2501 = vmatprep.subr.mxu0 0.0
    %2502 = vmatpush1.msra.mxu0 0.0
    %2503 = vmatprep.subr.mxu0 0.0
    %2504 = vmatpush1.msra.mxu0 0.0
    %2505 = vmatprep.subr.mxu0 0.0
    %2506 = vmatpush1.msra.mxu0 0.0
    %2507 = vmatprep.subr.mxu0 0.0
    %2508 = vmatpush1.msra.mxu0 0.0
    %2509 = vmatprep.subr.mxu0 0.0
    %2510 = vmatpush1.msra.mxu0 0.0
    %2511 = vmatprep.subr.mxu0 0.0
    %2512 = vmatpush1.msra.mxu0 0.0
    %2513 = vmatprep.subr.mxu0 0.0
    %2514 = vmatpush1.msra.mxu0 0.0
    %2515 = vmatprep.subr.mxu0 0.0
    %2516 = vmatpush1.msra.mxu0 0.0
    %2517 = vmatprep.subr.mxu0 0.0
    %2518 = vmatpush1.msra.mxu0 0.0
    %2519 = vmatprep.subr.mxu0 0.0
    %2520 = vmatpush1.msra.mxu0 %v2484
    %2521 = vmatprep.subr.mxu0 0.0
    %2522 = vmatpush2.msra.mxu0 0.0
    %2523 = vmatprep.subr.mxu0 0.0
    %2524 = vmatpush2.msra.mxu0 0.0
    %2525 = vmatprep.subr.mxu0 0.0
    %2526 = vmatpush2.msra.mxu0 0.0
    %2527 = vmatprep.subr.mxu0 0.0
    %2528 = vmatpush2.msra.mxu0 0.0
    %2529 = vmatprep.subr.mxu0 0.0
    %2530 = vmatpush2.msra.mxu0 0.0
    %2531 = vmatprep.subr.mxu0 0.0
    %2532 = vmatpush2.msra.mxu0 0.0
    %2533 = vmatprep.subr.mxu0 0.0
    %2534 = vmatpush2.msra.mxu0 0.0
    %2535 = vmatprep.subr.mxu0 0.0
    %2536 = vmatpush2.msra.mxu0 0.0
    %2537 = vmatprep.subr.mxu0 0.0
    %2538 = vmatpush2.msra.mxu0 0.0
    %2539 = vmatprep.subr.mxu0 0.0
    %2540 = vmatpush2.msra.mxu0 0.0
    %2541 = vmatprep.subr.mxu0 0.0
    %2542 = vmatpush2.msra.mxu0 0.0
    %2543 = vmatprep.subr.mxu0 0.0
    %2544 = vmatpush2.msra.mxu0 0.0
    %2545 = vmatprep.subr.mxu0 0.0
    %2546 = vmatpush2.msra.mxu0 0.0
    %2547 = vmatprep.subr.mxu0 0.0
    %2548 = vmatpush2.msra.mxu0 0.0
    %2549 = vmatprep.subr.mxu0 0.0
    %2550 = vmatpush2.msra.mxu0 0.0
    %2551 = vmatprep.subr.mxu0 0.0
    %2552 = vmatpush2.msra.mxu0 0.0
    %2553 = vmatprep.mubr.f32.mxu0 0.0
    %2554 = vmatmul.mubr.f32.gmra.mxu0 %v2487
    %v2555 = vpop.f32.mrf.mxu0
    %v2556 = vadd.f32 0.0, %v2555
    %v2557 = vpop.f32.mrf.mxu0
    %2558 = vdwg.mxu0
    %2559 = vrot.lane.b32.xlu0 %v1713, 120
    %v2560 = vpop.permute.xlu0 %2559
    %2561 = vrot.lane.b32.xlu0 %v1713, 88
    %v2562 = vpop.permute.xlu0 %2561
    %v2563 = vsel %vm140, %v2560, 0
    %v2565 = vsel %vm140, %v2562, 0
    %2567 = vmatprep.subr.mxu0 0.0
    %2568 = vmatpush1.xpose.msra.mxu0 0.0
    %2569 = vmatprep.subr.mxu0 0.0
    %2570 = vmatpush1.xpose.msra.mxu0 0.0
    %2571 = vmatprep.subr.mxu0 0.0
    %2572 = vmatpush1.xpose.msra.mxu0 0.0
    %2573 = vmatprep.subr.mxu0 0.0
    %2574 = vmatpush1.xpose.msra.mxu0 0.0
    %2575 = vmatprep.subr.mxu0 0.0
    %2576 = vmatpush1.xpose.msra.mxu0 0.0
    %2577 = vmatprep.subr.mxu0 0.0
    %2578 = vmatpush1.xpose.msra.mxu0 0.0
    %2579 = vmatprep.subr.mxu0 0.0
    %2580 = vmatpush1.xpose.msra.mxu0 0.0
    %2581 = vmatprep.subr.mxu0 0.0
    %2582 = vmatpush1.xpose.msra.mxu0 0.0
    %2583 = vmatprep.subr.mxu0 0.0
    %2584 = vmatpush1.xpose.msra.mxu0 0.0
    %2585 = vmatprep.subr.mxu0 0.0
    %2586 = vmatpush1.xpose.msra.mxu0 0.0
    %2587 = vmatprep.subr.mxu0 0.0
    %2588 = vmatpush1.xpose.msra.mxu0 0.0
    %2589 = vmatprep.subr.mxu0 0.0
    %2590 = vmatpush1.xpose.msra.mxu0 0.0
    %2591 = vmatprep.subr.mxu0 0.0
    %2592 = vmatpush1.xpose.msra.mxu0 0.0
    %2593 = vmatprep.subr.mxu0 0.0
    %2594 = vmatpush1.xpose.msra.mxu0 0.0
    %2595 = vmatprep.subr.mxu0 0.0
    %2596 = vmatpush1.xpose.msra.mxu0 0.0
    %2597 = vmatprep.subr.mxu0 0.0
    %2598 = vmatpush1.xpose.msra.mxu0 %v2565
    %2599 = vmatprep.subr.mxu0 0.0
    %2600 = vmatpush2.xpose.msra.mxu0 0.0
    %2601 = vmatprep.subr.mxu0 0.0
    %2602 = vmatpush2.xpose.msra.mxu0 0.0
    %2603 = vmatprep.subr.mxu0 0.0
    %2604 = vmatpush2.xpose.msra.mxu0 0.0
    %2605 = vmatprep.subr.mxu0 0.0
    %2606 = vmatpush2.xpose.msra.mxu0 0.0
    %2607 = vmatprep.subr.mxu0 0.0
    %2608 = vmatpush2.xpose.msra.mxu0 0.0
    %2609 = vmatprep.subr.mxu0 0.0
    %2610 = vmatpush2.xpose.msra.mxu0 0.0
    %2611 = vmatprep.subr.mxu0 0.0
    %2612 = vmatpush2.xpose.msra.mxu0 0.0
    %2613 = vmatprep.subr.mxu0 0.0
    %2614 = vmatpush2.xpose.msra.mxu0 0.0
    %2615 = vmatprep.subr.mxu0 0.0
    %2616 = vmatpush2.xpose.msra.mxu0 0.0
    %2617 = vmatprep.subr.mxu0 0.0
    %2618 = vmatpush2.xpose.msra.mxu0 0.0
    %2619 = vmatprep.subr.mxu0 0.0
    %2620 = vmatpush2.xpose.msra.mxu0 0.0
    %2621 = vmatprep.subr.mxu0 0.0
    %2622 = vmatpush2.xpose.msra.mxu0 0.0
    %2623 = vmatprep.subr.mxu0 0.0
    %2624 = vmatpush2.xpose.msra.mxu0 0.0
    %2625 = vmatprep.subr.mxu0 0.0
    %2626 = vmatpush2.xpose.msra.mxu0 0.0
    %2627 = vmatprep.subr.mxu0 0.0
    %2628 = vmatpush2.xpose.msra.mxu0 0.0
    %2629 = vmatprep.subr.mxu0 0.0
    %2630 = vmatpush2.xpose.msra.mxu0 0.0
    %2631 = vmatprep.mubr.f32.mxu0 0.0
    %2632 = vmatmul.mubr.f32.gmra.mxu0 %v2563
    %v2633 = vpop.f32.mrf.mxu0
    %v2634 = vadd.f32 0.0, %v2633
    %v2635 = vpop.f32.mrf.mxu0
    %2636 = vdwg.mxu0
    %v2637 = vmul.f32 %v2634, 0.35355338
    %v2638 = vsel %vm140, %v2637, -inf
    %2639 = vmax.xlane.f32.xlu0 %v2638
    %v2640 = vpop.xlane.xlu0 %2639
    %v2641 = vsub.f32 %v2637, %v2640
    %v2642 = vmul.f32 %v2641, 1.442695
    %v2643 = vpow.pop %v2642
    %v2644 = vsel %vm140, %v2643, 0.0
    %2645 = vadd.xlane.f32.xlu0 %v2644
    %v2646 = vpop.xlane.xlu0 %2645
    %v2647 = vrcp.pop %v2646
    %v2648 = vmul.f32 %v2643, %v2647
    %2649 = vrot.lane.b32.xlu0 %v1713, 56
    %v2650 = vpop.permute.xlu0 %2649
    %v2653 = vsel %vm140, %v2648, 0
    %2655 = vmatprep.subr.mxu0 0.0
    %2656 = vmatpush1.msra.mxu0 0.0
    %2657 = vmatprep.subr.mxu0 0.0
    %2658 = vmatpush1.msra.mxu0 0.0
    %2659 = vmatprep.subr.mxu0 0.0
    %2660 = vmatpush1.msra.mxu0 0.0
    %2661 = vmatprep.subr.mxu0 0.0
    %2662 = vmatpush1.msra.mxu0 0.0
    %2663 = vmatprep.subr.mxu0 0.0
    %2664 = vmatpush1.msra.mxu0 0.0
    %2665 = vmatprep.subr.mxu0 0.0
    %2666 = vmatpush1.msra.mxu0 0.0
    %2667 = vmatprep.subr.mxu0 0.0
    %2668 = vmatpush1.msra.mxu0 0.0
    %2669 = vmatprep.subr.mxu0 0.0
    %2670 = vmatpush1.msra.mxu0 0.0
    %2671 = vmatprep.subr.mxu0 0.0
    %2672 = vmatpush1.msra.mxu0 0.0
    %2673 = vmatprep.subr.mxu0 0.0
    %2674 = vmatpush1.msra.mxu0 0.0
    %2675 = vmatprep.subr.mxu0 0.0
    %2676 = vmatpush1.msra.mxu0 0.0
    %2677 = vmatprep.subr.mxu0 0.0
    %2678 = vmatpush1.msra.mxu0 0.0
    %2679 = vmatprep.subr.mxu0 0.0
    %2680 = vmatpush1.msra.mxu0 0.0
    %2681 = vmatprep.subr.mxu0 0.0
    %2682 = vmatpush1.msra.mxu0 0.0
    %2683 = vmatprep.subr.mxu0 0.0
    %2684 = vmatpush1.msra.mxu0 0.0
    %2685 = vmatprep.subr.mxu0 0.0
    %2686 = vmatpush1.msra.mxu0 %v2650
    %2687 = vmatprep.subr.mxu0 0.0
    %2688 = vmatpush2.msra.mxu0 0.0
    %2689 = vmatprep.subr.mxu0 0.0
    %2690 = vmatpush2.msra.mxu0 0.0
    %2691 = vmatprep.subr.mxu0 0.0
    %2692 = vmatpush2.msra.mxu0 0.0
    %2693 = vmatprep.subr.mxu0 0.0
    %2694 = vmatpush2.msra.mxu0 0.0
    %2695 = vmatprep.subr.mxu0 0.0
    %2696 = vmatpush2.msra.mxu0 0.0
    %2697 = vmatprep.subr.mxu0 0.0
    %2698 = vmatpush2.msra.mxu0 0.0
    %2699 = vmatprep.subr.mxu0 0.0
    %2700 = vmatpush2.msra.mxu0 0.0
    %2701 = vmatprep.subr.mxu0 0.0
    %2702 = vmatpush2.msra.mxu0 0.0
    %2703 = vmatprep.subr.mxu0 0.0
    %2704 = vmatpush2.msra.mxu0 0.0
    %2705 = vmatprep.subr.mxu0 0.0
    %2706 = vmatpush2.msra.mxu0 0.0
    %2707 = vmatprep.subr.mxu0 0.0
    %2708 = vmatpush2.msra.mxu0 0.0
    %2709 = vmatprep.subr.mxu0 0.0
    %2710 = vmatpush2.msra.mxu0 0.0
    %2711 = vmatprep.subr.mxu0 0.0
    %2712 = vmatpush2.msra.mxu0 0.0
    %2713 = vmatprep.subr.mxu0 0.0
    %2714 = vmatpush2.msra.mxu0 0.0
    %2715 = vmatprep.subr.mxu0 0.0
    %2716 = vmatpush2.msra.mxu0 0.0
    %2717 = vmatprep.subr.mxu0 0.0
    %2718 = vmatpush2.msra.mxu0 0.0
    %2719 = vmatprep.mubr.f32.mxu0 0.0
    %2720 = vmatmul.mubr.f32.gmra.mxu0 %v2653
    %v2721 = vpop.f32.mrf.mxu0
    %v2722 = vadd.f32 0.0, %v2721
    %v2723 = vpop.f32.mrf.mxu0
    %2724 = vdwg.mxu0
    %2725 = vrot.lane.b32.xlu0 %v1713, 112
    %v2726 = vpop.permute.xlu0 %2725
    %2727 = vrot.lane.b32.xlu0 %v1713, 80
    %v2728 = vpop.permute.xlu0 %2727
    %v2729 = vsel %vm140, %v2726, 0
    %v2731 = vsel %vm140, %v2728, 0
    %2733 = vmatprep.subr.mxu0 0.0
    %2734 = vmatpush1.xpose.msra.mxu0 0.0
    %2735 = vmatprep.subr.mxu0 0.0
    %2736 = vmatpush1.xpose.msra.mxu0 0.0
    %2737 = vmatprep.subr.mxu0 0.0
    %2738 = vmatpush1.xpose.msra.mxu0 0.0
    %2739 = vmatprep.subr.mxu0 0.0
    %2740 = vmatpush1.xpose.msra.mxu0 0.0
    %2741 = vmatprep.subr.mxu0 0.0
    %2742 = vmatpush1.xpose.msra.mxu0 0.0
    %2743 = vmatprep.subr.mxu0 0.0
    %2744 = vmatpush1.xpose.msra.mxu0 0.0
    %2745 = vmatprep.subr.mxu0 0.0
    %2746 = vmatpush1.xpose.msra.mxu0 0.0
    %2747 = vmatprep.subr.mxu0 0.0
    %2748 = vmatpush1.xpose.msra.mxu0 0.0
    %2749 = vmatprep.subr.mxu0 0.0
    %2750 = vmatpush1.xpose.msra.mxu0 0.0
    %2751 = vmatprep.subr.mxu0 0.0
    %2752 = vmatpush1.xpose.msra.mxu0 0.0
    %2753 = vmatprep.subr.mxu0 0.0
    %2754 = vmatpush1.xpose.msra.mxu0 0.0
    %2755 = vmatprep.subr.mxu0 0.0
    %2756 = vmatpush1.xpose.msra.mxu0 0.0
    %2757 = vmatprep.subr.mxu0 0.0
    %2758 = vmatpush1.xpose.msra.mxu0 0.0
    %2759 = vmatprep.subr.mxu0 0.0
    %2760 = vmatpush1.xpose.msra.mxu0 0.0
    %2761 = vmatprep.subr.mxu0 0.0
    %2762 = vmatpush1.xpose.msra.mxu0 0.0
    %2763 = vmatprep.subr.mxu0 0.0
    %2764 = vmatpush1.xpose.msra.mxu0 %v2731
    %2765 = vmatprep.subr.mxu0 0.0
    %2766 = vmatpush2.xpose.msra.mxu0 0.0
    %2767 = vmatprep.subr.mxu0 0.0
    %2768 = vmatpush2.xpose.msra.mxu0 0.0
    %2769 = vmatprep.subr.mxu0 0.0
    %2770 = vmatpush2.xpose.msra.mxu0 0.0
    %2771 = vmatprep.subr.mxu0 0.0
    %2772 = vmatpush2.xpose.msra.mxu0 0.0
    %2773 = vmatprep.subr.mxu0 0.0
    %2774 = vmatpush2.xpose.msra.mxu0 0.0
    %2775 = vmatprep.subr.mxu0 0.0
    %2776 = vmatpush2.xpose.msra.mxu0 0.0
    %2777 = vmatprep.subr.mxu0 0.0
    %2778 = vmatpush2.xpose.msra.mxu0 0.0
    %2779 = vmatprep.subr.mxu0 0.0
    %2780 = vmatpush2.xpose.msra.mxu0 0.0
    %2781 = vmatprep.subr.mxu0 0.0
    %2782 = vmatpush2.xpose.msra.mxu0 0.0
    %2783 = vmatprep.subr.mxu0 0.0
    %2784 = vmatpush2.xpose.msra.mxu0 0.0
    %2785 = vmatprep.subr.mxu0 0.0
    %2786 = vmatpush2.xpose.msra.mxu0 0.0
    %2787 = vmatprep.subr.mxu0 0.0
    %2788 = vmatpush2.xpose.msra.mxu0 0.0
    %2789 = vmatprep.subr.mxu0 0.0
    %2790 = vmatpush2.xpose.msra.mxu0 0.0
    %2791 = vmatprep.subr.mxu0 0.0
    %2792 = vmatpush2.xpose.msra.mxu0 0.0
    %2793 = vmatprep.subr.mxu0 0.0
    %2794 = vmatpush2.xpose.msra.mxu0 0.0
    %2795 = vmatprep.subr.mxu0 0.0
    %2796 = vmatpush2.xpose.msra.mxu0 0.0
    %2797 = vmatprep.mubr.f32.mxu0 0.0
    %2798 = vmatmul.mubr.f32.gmra.mxu0 %v2729
    %v2799 = vpop.f32.mrf.mxu0
    %v2800 = vadd.f32 0.0, %v2799
    %v2801 = vpop.f32.mrf.mxu0
    %2802 = vdwg.mxu0
    %v2803 = vmul.f32 %v2800, 0.35355338
    %v2804 = vsel %vm140, %v2803, -inf
    %2805 = vmax.xlane.f32.xlu0 %v2804
    %v2806 = vpop.xlane.xlu0 %2805
    %v2807 = vsub.f32 %v2803, %v2806
    %v2808 = vmul.f32 %v2807, 1.442695
    %v2809 = vpow.pop %v2808
    %v2810 = vsel %vm140, %v2809, 0.0
    %2811 = vadd.xlane.f32.xlu0 %v2810
    %v2812 = vpop.xlane.xlu0 %2811
    %v2813 = vrcp.pop %v2812
    %v2814 = vmul.f32 %v2809, %v2813
    %2815 = vrot.lane.b32.xlu0 %v1713, 48
    %v2816 = vpop.permute.xlu0 %2815
    %v2819 = vsel %vm140, %v2814, 0
    %2821 = vmatprep.subr.mxu0 0.0
    %2822 = vmatpush1.msra.mxu0 0.0
    %2823 = vmatprep.subr.mxu0 0.0
    %2824 = vmatpush1.msra.mxu0 0.0
    %2825 = vmatprep.subr.mxu0 0.0
    %2826 = vmatpush1.msra.mxu0 0.0
    %2827 = vmatprep.subr.mxu0 0.0
    %2828 = vmatpush1.msra.mxu0 0.0
    %2829 = vmatprep.subr.mxu0 0.0
    %2830 = vmatpush1.msra.mxu0 0.0
    %2831 = vmatprep.subr.mxu0 0.0
    %2832 = vmatpush1.msra.mxu0 0.0
    %2833 = vmatprep.subr.mxu0 0.0
    %2834 = vmatpush1.msra.mxu0 0.0
    %2835 = vmatprep.subr.mxu0 0.0
    %2836 = vmatpush1.msra.mxu0 0.0
    %2837 = vmatprep.subr.mxu0 0.0
    %2838 = vmatpush1.msra.mxu0 0.0
    %2839 = vmatprep.subr.mxu0 0.0
    %2840 = vmatpush1.msra.mxu0 0.0
    %2841 = vmatprep.subr.mxu0 0.0
    %2842 = vmatpush1.msra.mxu0 0.0
    %2843 = vmatprep.subr.mxu0 0.0
    %2844 = vmatpush1.msra.mxu0 0.0
    %2845 = vmatprep.subr.mxu0 0.0
    %2846 = vmatpush1.msra.mxu0 0.0
    %2847 = vmatprep.subr.mxu0 0.0
    %2848 = vmatpush1.msra.mxu0 0.0
    %2849 = vmatprep.subr.mxu0 0.0
    %2850 = vmatpush1.msra.mxu0 0.0
    %2851 = vmatprep.subr.mxu0 0.0
    %2852 = vmatpush1.msra.mxu0 %v2816
    %2853 = vmatprep.subr.mxu0 0.0
    %2854 = vmatpush2.msra.mxu0 0.0
    %2855 = vmatprep.subr.mxu0 0.0
    %2856 = vmatpush2.msra.mxu0 0.0
    %2857 = vmatprep.subr.mxu0 0.0
    %2858 = vmatpush2.msra.mxu0 0.0
    %2859 = vmatprep.subr.mxu0 0.0
    %2860 = vmatpush2.msra.mxu0 0.0
    %2861 = vmatprep.subr.mxu0 0.0
    %2862 = vmatpush2.msra.mxu0 0.0
    %2863 = vmatprep.subr.mxu0 0.0
    %2864 = vmatpush2.msra.mxu0 0.0
    %2865 = vmatprep.subr.mxu0 0.0
    %2866 = vmatpush2.msra.mxu0 0.0
    %2867 = vmatprep.subr.mxu0 0.0
    %2868 = vmatpush2.msra.mxu0 0.0
    %2869 = vmatprep.subr.mxu0 0.0
    %2870 = vmatpush2.msra.mxu0 0.0
    %2871 = vmatprep.subr.mxu0 0.0
    %2872 = vmatpush2.msra.mxu0 0.0
    %2873 = vmatprep.subr.mxu0 0.0
    %2874 = vmatpush2.msra.mxu0 0.0
    %2875 = vmatprep.subr.mxu0 0.0
    %2876 = vmatpush2.msra.mxu0 0.0
    %2877 = vmatprep.subr.mxu0 0.0
    %2878 = vmatpush2.msra.mxu0 0.0
    %2879 = vmatprep.subr.mxu0 0.0
    %2880 = vmatpush2.msra.mxu0 0.0
    %2881 = vmatprep.subr.mxu0 0.0
    %2882 = vmatpush2.msra.mxu0 0.0
    %2883 = vmatprep.subr.mxu0 0.0
    %2884 = vmatpush2.msra.mxu0 0.0
    %2885 = vmatprep.mubr.f32.mxu0 0.0
    %2886 = vmatmul.mubr.f32.gmra.mxu0 %v2819
    %v2887 = vpop.f32.mrf.mxu0
    %v2888 = vadd.f32 0.0, %v2887
    %v2889 = vpop.f32.mrf.mxu0
    %2890 = vdwg.mxu0
    %2891 = vrot.lane.b32.xlu0 %v1713, 104
    %v2892 = vpop.permute.xlu0 %2891
    %2893 = vrot.lane.b32.xlu0 %v1713, 72
    %v2894 = vpop.permute.xlu0 %2893
    %v2895 = vsel %vm140, %v2892, 0
    %v2897 = vsel %vm140, %v2894, 0
    %2899 = vmatprep.subr.mxu0 0.0
    %2900 = vmatpush1.xpose.msra.mxu0 0.0
    %2901 = vmatprep.subr.mxu0 0.0
    %2902 = vmatpush1.xpose.msra.mxu0 0.0
    %2903 = vmatprep.subr.mxu0 0.0
    %2904 = vmatpush1.xpose.msra.mxu0 0.0
    %2905 = vmatprep.subr.mxu0 0.0
    %2906 = vmatpush1.xpose.msra.mxu0 0.0
    %2907 = vmatprep.subr.mxu0 0.0
    %2908 = vmatpush1.xpose.msra.mxu0 0.0
    %2909 = vmatprep.subr.mxu0 0.0
    %2910 = vmatpush1.xpose.msra.mxu0 0.0
    %2911 = vmatprep.subr.mxu0 0.0
    %2912 = vmatpush1.xpose.msra.mxu0 0.0
    %2913 = vmatprep.subr.mxu0 0.0
    %2914 = vmatpush1.xpose.msra.mxu0 0.0
    %2915 = vmatprep.subr.mxu0 0.0
    %2916 = vmatpush1.xpose.msra.mxu0 0.0
    %2917 = vmatprep.subr.mxu0 0.0
    %2918 = vmatpush1.xpose.msra.mxu0 0.0
    %2919 = vmatprep.subr.mxu0 0.0
    %2920 = vmatpush1.xpose.msra.mxu0 0.0
    %2921 = vmatprep.subr.mxu0 0.0
    %2922 = vmatpush1.xpose.msra.mxu0 0.0
    %2923 = vmatprep.subr.mxu0 0.0
    %2924 = vmatpush1.xpose.msra.mxu0 0.0
    %2925 = vmatprep.subr.mxu0 0.0
    %2926 = vmatpush1.xpose.msra.mxu0 0.0
    %2927 = vmatprep.subr.mxu0 0.0
    %2928 = vmatpush1.xpose.msra.mxu0 0.0
    %2929 = vmatprep.subr.mxu0 0.0
    %2930 = vmatpush1.xpose.msra.mxu0 %v2897
    %2931 = vmatprep.subr.mxu0 0.0
    %2932 = vmatpush2.xpose.msra.mxu0 0.0
    %2933 = vmatprep.subr.mxu0 0.0
    %2934 = vmatpush2.xpose.msra.mxu0 0.0
    %2935 = vmatprep.subr.mxu0 0.0
    %2936 = vmatpush2.xpose.msra.mxu0 0.0
    %2937 = vmatprep.subr.mxu0 0.0
    %2938 = vmatpush2.xpose.msra.mxu0 0.0
    %2939 = vmatprep.subr.mxu0 0.0
    %2940 = vmatpush2.xpose.msra.mxu0 0.0
    %2941 = vmatprep.subr.mxu0 0.0
    %2942 = vmatpush2.xpose.msra.mxu0 0.0
    %2943 = vmatprep.subr.mxu0 0.0
    %2944 = vmatpush2.xpose.msra.mxu0 0.0
    %2945 = vmatprep.subr.mxu0 0.0
    %2946 = vmatpush2.xpose.msra.mxu0 0.0
    %2947 = vmatprep.subr.mxu0 0.0
    %2948 = vmatpush2.xpose.msra.mxu0 0.0
    %2949 = vmatprep.subr.mxu0 0.0
    %2950 = vmatpush2.xpose.msra.mxu0 0.0
    %2951 = vmatprep.subr.mxu0 0.0
    %2952 = vmatpush2.xpose.msra.mxu0 0.0
    %2953 = vmatprep.subr.mxu0 0.0
    %2954 = vmatpush2.xpose.msra.mxu0 0.0
    %2955 = vmatprep.subr.mxu0 0.0
    %2956 = vmatpush2.xpose.msra.mxu0 0.0
    %2957 = vmatprep.subr.mxu0 0.0
    %2958 = vmatpush2.xpose.msra.mxu0 0.0
    %2959 = vmatprep.subr.mxu0 0.0
    %2960 = vmatpush2.xpose.msra.mxu0 0.0
    %2961 = vmatprep.subr.mxu0 0.0
    %2962 = vmatpush2.xpose.msra.mxu0 0.0
    %2963 = vmatprep.mubr.f32.mxu0 0.0
    %2964 = vmatmul.mubr.f32.gmra.mxu0 %v2895
    %v2965 = vpop.f32.mrf.mxu0
    %v2966 = vadd.f32 0.0, %v2965
    %v2967 = vpop.f32.mrf.mxu0
    %2968 = vdwg.mxu0
    %v2969 = vmul.f32 %v2966, 0.35355338
    %v2970 = vsel %vm140, %v2969, -inf
    %2971 = vmax.xlane.f32.xlu0 %v2970
    %v2972 = vpop.xlane.xlu0 %2971
    %v2973 = vsub.f32 %v2969, %v2972
    %v2974 = vmul.f32 %v2973, 1.442695
    %v2975 = vpow.pop %v2974
    %v2976 = vsel %vm140, %v2975, 0.0
    %2977 = vadd.xlane.f32.xlu0 %v2976
    %v2978 = vpop.xlane.xlu0 %2977
    %v2979 = vrcp.pop %v2978
    %v2980 = vmul.f32 %v2975, %v2979
    %2981 = vrot.lane.b32.xlu0 %v1713, 40
    %v2982 = vpop.permute.xlu0 %2981
    %v2985 = vsel %vm140, %v2980, 0
    %2987 = vmatprep.subr.mxu0 0.0
    %2988 = vmatpush1.msra.mxu0 0.0
    %2989 = vmatprep.subr.mxu0 0.0
    %2990 = vmatpush1.msra.mxu0 0.0
    %2991 = vmatprep.subr.mxu0 0.0
    %2992 = vmatpush1.msra.mxu0 0.0
    %2993 = vmatprep.subr.mxu0 0.0
    %2994 = vmatpush1.msra.mxu0 0.0
    %2995 = vmatprep.subr.mxu0 0.0
    %2996 = vmatpush1.msra.mxu0 0.0
    %2997 = vmatprep.subr.mxu0 0.0
    %2998 = vmatpush1.msra.mxu0 0.0
    %2999 = vmatprep.subr.mxu0 0.0
    %3000 = vmatpush1.msra.mxu0 0.0
    %3001 = vmatprep.subr.mxu0 0.0
    %3002 = vmatpush1.msra.mxu0 0.0
    %3003 = vmatprep.subr.mxu0 0.0
    %3004 = vmatpush1.msra.mxu0 0.0
    %3005 = vmatprep.subr.mxu0 0.0
    %3006 = vmatpush1.msra.mxu0 0.0
    %3007 = vmatprep.subr.mxu0 0.0
    %3008 = vmatpush1.msra.mxu0 0.0
    %3009 = vmatprep.subr.mxu0 0.0
    %3010 = vmatpush1.msra.mxu0 0.0
    %3011 = vmatprep.subr.mxu0 0.0
    %3012 = vmatpush1.msra.mxu0 0.0
    %3013 = vmatprep.subr.mxu0 0.0
    %3014 = vmatpush1.msra.mxu0 0.0
    %3015 = vmatprep.subr.mxu0 0.0
    %3016 = vmatpush1.msra.mxu0 0.0
    %3017 = vmatprep.subr.mxu0 0.0
    %3018 = vmatpush1.msra.mxu0 %v2982
    %3019 = vmatprep.subr.mxu0 0.0
    %3020 = vmatpush2.msra.mxu0 0.0
    %3021 = vmatprep.subr.mxu0 0.0
    %3022 = vmatpush2.msra.mxu0 0.0
    %3023 = vmatprep.subr.mxu0 0.0
    %3024 = vmatpush2.msra.mxu0 0.0
    %3025 = vmatprep.subr.mxu0 0.0
    %3026 = vmatpush2.msra.mxu0 0.0
    %3027 = vmatprep.subr.mxu0 0.0
    %3028 = vmatpush2.msra.mxu0 0.0
    %3029 = vmatprep.subr.mxu0 0.0
    %3030 = vmatpush2.msra.mxu0 0.0
    %3031 = vmatprep.subr.mxu0 0.0
    %3032 = vmatpush2.msra.mxu0 0.0
    %3033 = vmatprep.subr.mxu0 0.0
    %3034 = vmatpush2.msra.mxu0 0.0
    %3035 = vmatprep.subr.mxu0 0.0
    %3036 = vmatpush2.msra.mxu0 0.0
    %3037 = vmatprep.subr.mxu0 0.0
    %3038 = vmatpush2.msra.mxu0 0.0
    %3039 = vmatprep.subr.mxu0 0.0
    %3040 = vmatpush2.msra.mxu0 0.0
    %3041 = vmatprep.subr.mxu0 0.0
    %3042 = vmatpush2.msra.mxu0 0.0
    %3043 = vmatprep.subr.mxu0 0.0
    %3044 = vmatpush2.msra.mxu0 0.0
    %3045 = vmatprep.subr.mxu0 0.0
    %3046 = vmatpush2.msra.mxu0 0.0
    %3047 = vmatprep.subr.mxu0 0.0
    %3048 = vmatpush2.msra.mxu0 0.0
    %3049 = vmatprep.subr.mxu0 0.0
    %3050 = vmatpush2.msra.mxu0 0.0
    %3051 = vmatprep.mubr.f32.mxu0 0.0
    %3052 = vmatmul.mubr.f32.gmra.mxu0 %v2985
    %v3053 = vpop.f32.mrf.mxu0
    %v3054 = vadd.f32 0.0, %v3053
    %v3055 = vpop.f32.mrf.mxu0
    %3056 = vdwg.mxu0
    %3058 = vrot.lane.b32.xlu0 %v2722, 8
    %v3059 = vpop.permute.xlu0 %3058
    %3062 = vrot.lane.b32.xlu0 %v2888, 16
    %v3063 = vpop.permute.xlu0 %3062
    %3066 = vrot.lane.b32.xlu0 %v3054, 24
    %v3067 = vpop.permute.xlu0 %3066
    %v3069 = vsel %vm140, %v2556, %v3059
    %v3070 = vsel %vm814, %v3069, %v3063
    %v3071 = vsel %vm816, %v3070, %v3067
    %v3072 = vlaneseq
    %v3073 = vshrl.u32 %v3072, 7
    %v3074 = vsub.s32 1, %v3073
    %v3075 = vrot.slane %v1630, %v3074
    %v3077 = vsel %vm55, %v2393, 0
    %v3080 = vsel %vm55, %v3071, 0
    %3082 = vmatprep.subr.mxu0 0.0
    %3083 = vmatpush1.msra.mxu0 0.0
    %3084 = vmatprep.subr.mxu0 0.0
    %3085 = vmatpush1.msra.mxu0 0.0
    %3086 = vmatprep.subr.mxu0 0.0
    %3087 = vmatpush1.msra.mxu0 0.0
    %3088 = vmatprep.subr.mxu0 0.0
    %3089 = vmatpush1.msra.mxu0 0.0
    %3090 = vmatprep.subr.mxu0 0.0
    %3091 = vmatpush1.msra.mxu0 0.0
    %3092 = vmatprep.subr.mxu0 0.0
    %3093 = vmatpush1.msra.mxu0 0.0
    %3094 = vmatprep.subr.mxu0 0.0
    %3095 = vmatpush1.msra.mxu0 0.0
    %3096 = vmatprep.subr.mxu0 0.0
    %3097 = vmatpush1.msra.mxu0 0.0
    %3098 = vmatprep.subr.mxu0 0.0
    %3099 = vmatpush1.msra.mxu0 0.0
    %3100 = vmatprep.subr.mxu0 0.0
    %3101 = vmatpush1.msra.mxu0 0.0
    %3102 = vmatprep.subr.mxu0 0.0
    %3103 = vmatpush1.msra.mxu0 0.0
    %3104 = vmatprep.subr.mxu0 0.0
    %3105 = vmatpush1.msra.mxu0 0.0
    %3106 = vmatprep.subr.mxu0 0.0
    %3107 = vmatpush1.msra.mxu0 %v1629
    %3108 = vmatprep.subr.mxu0 0.0
    %3109 = vmatpush1.msra.mxu0 %v1628
    %3110 = vmatprep.subr.mxu0 0.0
    %3111 = vmatpush1.msra.mxu0 %v1627
    %3112 = vmatprep.subr.mxu0 0.0
    %3113 = vmatpush1.msra.mxu0 %v1626
    %3114 = vmatprep.subr.mxu0 0.0
    %3115 = vmatpush2.msra.mxu0 0.0
    %3116 = vmatprep.subr.mxu0 0.0
    %3117 = vmatpush2.msra.mxu0 0.0
    %3118 = vmatprep.subr.mxu0 0.0
    %3119 = vmatpush2.msra.mxu0 0.0
    %3120 = vmatprep.subr.mxu0 0.0
    %3121 = vmatpush2.msra.mxu0 0.0
    %3122 = vmatprep.subr.mxu0 0.0
    %3123 = vmatpush2.msra.mxu0 0.0
    %3124 = vmatprep.subr.mxu0 0.0
    %3125 = vmatpush2.msra.mxu0 0.0
    %3126 = vmatprep.subr.mxu0 0.0
    %3127 = vmatpush2.msra.mxu0 0.0
    %3128 = vmatprep.subr.mxu0 0.0
    %3129 = vmatpush2.msra.mxu0 0.0
    %3130 = vmatprep.subr.mxu0 0.0
    %3131 = vmatpush2.msra.mxu0 0.0
    %3132 = vmatprep.subr.mxu0 0.0
    %3133 = vmatpush2.msra.mxu0 0.0
    %3134 = vmatprep.subr.mxu0 0.0
    %3135 = vmatpush2.msra.mxu0 0.0
    %3136 = vmatprep.subr.mxu0 0.0
    %3137 = vmatpush2.msra.mxu0 0.0
    %3138 = vmatprep.subr.mxu0 0.0
    %3139 = vmatpush2.msra.mxu0 0.0
    %3140 = vmatprep.subr.mxu0 0.0
    %3141 = vmatpush2.msra.mxu0 0.0
    %3142 = vmatprep.subr.mxu0 0.0
    %3143 = vmatpush2.msra.mxu0 0.0
    %3144 = vmatprep.subr.mxu0 0.0
    %3145 = vmatpush2.msra.mxu0 0.0
    %3146 = vmatprep.mubr.f32.mxu0 0.0
    %3147 = vmatmul.mubr.f32.gmra.mxu0 %v3077
    %v3148 = vpop.f32.mrf.mxu0
    %v3149 = vadd.f32 %v3075, %v3148
    %v3150 = vpop.f32.mrf.mxu0
    %3151 = vmatprep.mubr.f32.mxu0 0.0
    %3152 = vmatmul.mubr.f32.gmra.mxu0 %v3080
    %v3153 = vpop.f32.mrf.mxu0
    %v3154 = vadd.f32 %v3075, %v3153
    %v3155 = vpop.f32.mrf.mxu0
    %3156 = vdwg.mxu0
    %v3157 = vadd.f32 %v3149, %v1620
    %v3158 = vadd.f32 %v3154, %v1621
    %v3159 = vsel %vm55, %v3157, 0.0
    %3160 = vadd.xlane.f32.xlu0 %v3159
    %v3161 = vpop.xlane.xlu0 %3160
    %v3162 = vsel %vm55, %v3158, 0.0
    %3163 = vadd.xlane.f32.xlu0 %v3162
    %v3164 = vpop.xlane.xlu0 %3163
    %v3165 = vmul.f32 %v3161, %v1589
    %v3166 = vmul.f32 %v3164, %v1589
    %v3167 = vsub.f32 %v3157, %v3165
    %v3168 = vsub.f32 %v3158, %v3166
    %v3169 = vmul.f32 %v3167, %v3167
    %v3170 = vmul.f32 %v3168, %v3168
    %v3171 = vsel %vm55, %v3169, 0.0
    %3172 = vadd.xlane.f32.xlu0 %v3171
    %v3173 = vpop.xlane.xlu0 %3172
    %v3174 = vsel %vm55, %v3170, 0.0
    %3175 = vadd.xlane.f32.xlu0 %v3174
    %v3176 = vpop.xlane.xlu0 %3175
    %v3177 = vmul.f32 %v3173, %v1589
    %v3178 = vmul.f32 %v3176, %v1589
    %v3179 = vadd.f32 %v3177, 1e-05
    %v3180 = vadd.f32 %v3178, 1e-05
    %v3181 = vrsqrt.pop %v3179
    %v3182 = vrsqrt.pop %v3180
    %v3183 = vmul.f32 %v3167, %v3181
    %v3184 = vmul.f32 %v3168, %v3182
    %v3185 = vlaneseq
    %v3186 = vshrl.u32 %v3185, 7
    %v3187 = vsub.s32 2, %v3186
    %v3188 = vrot.slane %v1630, %v3187
    %v3189 = vmul.f32 %v3183, %v3188
    %v3190 = vmul.f32 %v3184, %v3188
    %v3191 = vlaneseq
    %v3192 = vshrl.u32 %v3191, 7
    %v3193 = vsub.s32 3, %v3192
    %v3194 = vrot.slane %v1630, %v3193
    %v3195 = vadd.f32 %v3189, %v3194
    %v3196 = vadd.f32 %v3190, %v3194
    %3197 = vst.msk [vmem:[#allocation7] sm:$0xff] %vm55, %v3195
    %3198 = vst.msk [vmem:[#allocation7 + $0x8] sm:$0xff] %vm55, %v3196
    // Predicated region
    $region18: #{tpu_custom_call.1} parent=1 // pred_check
      _
    $region19: #{tpu_custom_call.1} parent=1 // pred_check_branch
      %3200 = sbr.rel (0) target = $region21
    $region20: #{tpu_custom_call.1} parent=1 // pred_region
      %s3202 = ssub.s32 256, 256
      %3203 = vsyncadd [#allocation4], %s3202
      %s3204 = sshll.u32 [#allocation7], 4
      %s3205 = int_to_ptr.vmem [resolvable:$true] %s3204
      %3210 = dma.vmem_to_hbm [thread:$0]  %s3205, 256, %s2, [#allocation4], 128, 128, 8
    $region21: #{tpu_custom_call.1} parent=1 // pred_fallthru
      _
    // Predicated region
    $region22: #{tpu_custom_call.1} parent=1 // pred_check
      _
    $region23: #{tpu_custom_call.1} parent=1 // pred_check_branch
      %3212 = sbr.rel (0) target = $region25
    $region24: #{tpu_custom_call.1} parent=1 // pred_region
      %3213 = dma.done [#allocation4], 256
    $region25: #{tpu_custom_call.1} parent=1 // pred_fallthru
      _
    %3214 = vsyncpa [#allocation3], 1
    %3215 = vsyncpa [#allocation6], 1
    %3216 = vsyncpa [#allocation4], 1

</llo_original>
